<compile_context>
chip_gen: v7x
topology: tpu7x:2x2x1
jax: 0.10.0
libtpu: 0.0.40
codegen_flags: <defaults>
</compile_context>

<pallas_src>
import functools

import numpy as np
import jax
import jax.numpy as jnp
from jax import lax
from jax.experimental import pallas as pl
from jax.experimental.pallas import tpu as pltpu

NEG_INF = -1e30
LN_EPS = 1e-5   # torch nn.LayerNorm default


# --------------------------- hardware-derived knobs ------------------------- #
def _tpu_vmem_capacity_bytes():
    try:
        return int(pltpu.get_tpu_info().vmem_capacity_bytes)
    except Exception:
        return 64 << 20            # conservative (v7x-sized) fallback


def _device_kind():
    try:
        return jax.devices()[0].device_kind.lower()
    except Exception:
        return ""


_VMEM_CAP = _tpu_vmem_capacity_bytes()
# ~80% of physical VMEM: ~102 MiB on 128 MiB chips (v5e/v6e), ~51 MiB on v7x.
_VMEM_LIMIT = int(_VMEM_CAP * 0.8)
_IS_V6E = "v6" in _device_kind()
# v6e (128 MiB VMEM) takes 512-row dense tiles; keep v5e (vst slots) / v7x
# (64 MiB VMEM) at 256.
_DENSE_ROW_TILE = 512 if _IS_V6E else 256
# The output head only holds x(tm,D), one emb panel and out(tm,tv): push tm up.
_LOGSM_ROW_TILE = 1024 if _VMEM_CAP >= (100 << 20) else 512
_VOCAB_TILE = 1024
_FF_PANEL = 1024


def _cparams(sem):
    return pltpu.CompilerParams(dimension_semantics=sem,
                                vmem_limit_bytes=_VMEM_LIMIT)


def _probe_buffered1():
    """Check once whether single-buffered resident blocks lower and run."""
    try:
        def k(x_ref, w_ref, o_ref):
            o_ref[...] = x_ref[...] + w_ref[...]

        out = pl.pallas_call(
            k,
            grid=(2,),
            in_specs=[pl.BlockSpec((8, 128), lambda i: (i, 0)),
                      pl.BlockSpec((8, 128), lambda i: (0, 0),
                                   pipeline_mode=pl.Buffered(1))],
            out_specs=pl.BlockSpec((8, 128), lambda i: (i, 0)),
            out_shape=jax.ShapeDtypeStruct((16, 128), jnp.float32),
        )(jnp.ones((16, 128), jnp.float32), jnp.ones((8, 128), jnp.float32))
        jax.block_until_ready(out)
        return bool(float(out[0, 0]) == 2.0)
    except Exception:
        return False


_BUF1_OK = _probe_buffered1()


def _const_spec(shape):
    """Resident block (same index every grid step): fetch once, 1 buffer."""
    index_map = lambda *_: (0,) * len(shape)
    if _BUF1_OK:
        return pl.BlockSpec(shape, index_map, pipeline_mode=pl.Buffered(1))
    return pl.BlockSpec(shape, index_map)


# ------------------------------ tiling helpers ------------------------------ #
def _row_tile(m, target):
    """Largest tile <= target that divides m (multiple of 8), else m."""
    if m <= target:
        return m
    for t in range(target, 0, -8):
        if m % t == 0:
            return t
    return m


def _vocab_tile(v, target):
    """Largest lane-dense (mult. of 128) tile <= target dividing v, else best."""
    if v <= target:
        return v
    for t in range(target, 0, -128):
        if v % t == 0:
            return t
    # fallback: not lane-dense (review: prefer padding V to a multiple of 128)
    for t in range(target, 0, -8):
        if v % t == 0:
            return t
    return v


def _ff_panel(dff, target=_FF_PANEL):
    if dff <= target:
        return dff
    for t in range(target, 0, -128):
        if dff % t == 0:
            return t
    return dff


# ------------------------ fused attention (per batch, head) ----------------- #
def _self_attn_kernel(x_ref, wq_ref, wk_ref, wv_ref, bq_ref, bk_ref, bv_ref,
                      padk_ref, o_ref):
    # One (batch, head) pair per grid step; Q/K/V projections fused in-kernel.
    # wq already carries the 1/sqrt(d_k) scale (folded in at init).
    x = x_ref[...].astype(jnp.bfloat16)                       # (S, D)
    q = jnp.dot(x, wq_ref[...], preferred_element_type=jnp.float32) + bq_ref[...]
    k = jnp.dot(x, wk_ref[...], preferred_element_type=jnp.float32) + bk_ref[...]
    v = jnp.dot(x, wv_ref[...], preferred_element_type=jnp.float32) + bv_ref[...]
    S = x.shape[0]
    # causal mask rebuilt in-kernel (no (B,S,S) HBM stream)
    row = lax.broadcasted_iota(jnp.int32, (S, S), 0)
    col = lax.broadcasted_iota(jnp.int32, (S, S), 1)
    bias = jnp.where(col > row, jnp.float32(NEG_INF), jnp.float32(0.0)) \
        + padk_ref[...]                                        # (S,S) + (1,S)
    s = lax.dot_general(q.astype(jnp.bfloat16), k.astype(jnp.bfloat16),
                        (((1,), (1,)), ((), ())),
                        preferred_element_type=jnp.float32) + bias
    m = jnp.max(s, axis=-1, keepdims=True)
    p = jnp.exp(s - m)
    att = p * pl.reciprocal(jnp.sum(p, axis=-1, keepdims=True), approx=True)
    o_ref[...] = jnp.dot(att.astype(jnp.bfloat16), v.astype(jnp.bfloat16),
                         preferred_element_type=jnp.float32)


def _cross_attn_kernel(xq_ref, enc_ref, wq_ref, wk_ref, wv_ref,
                       bq_ref, bk_ref, bv_ref, encb_ref, o_ref):
    xq = xq_ref[...].astype(jnp.bfloat16)                      # (S, D)
    xe = enc_ref[...].astype(jnp.bfloat16)                     # (Lenc, D)
    q = jnp.dot(xq, wq_ref[...], preferred_element_type=jnp.float32) + bq_ref[...]
    k = jnp.dot(xe, wk_ref[...], preferred_element_type=jnp.float32) + bk_ref[...]
    v = jnp.dot(xe, wv_ref[...], preferred_element_type=jnp.float32) + bv_ref[...]
    s = lax.dot_general(q.astype(jnp.bfloat16), k.astype(jnp.bfloat16),
                        (((1,), (1,)), ((), ())),
                        preferred_element_type=jnp.float32) + encb_ref[...]
    m = jnp.max(s, axis=-1, keepdims=True)
    p = jnp.exp(s - m)
    att = p * pl.reciprocal(jnp.sum(p, axis=-1, keepdims=True), approx=True)
    o_ref[...] = jnp.dot(att.astype(jnp.bfloat16), v.astype(jnp.bfloat16),
                         preferred_element_type=jnp.float32)


def self_attention(x, p, padk_bias, h, d_k, d_v):
    B, S, D = x.shape
    return pl.pallas_call(
        _self_attn_kernel,
        grid=(B, h),
        in_specs=[
            pl.BlockSpec((None, S, D), lambda b, hd: (b, 0, 0)),
            pl.BlockSpec((None, D, d_k), lambda b, hd: (hd, 0, 0)),
            pl.BlockSpec((None, D, d_k), lambda b, hd: (hd, 0, 0)),
            pl.BlockSpec((None, D, d_v), lambda b, hd: (hd, 0, 0)),
            pl.BlockSpec((None, 1, d_k), lambda b, hd: (hd, 0, 0)),
            pl.BlockSpec((None, 1, d_k), lambda b, hd: (hd, 0, 0)),
            pl.BlockSpec((None, 1, d_v), lambda b, hd: (hd, 0, 0)),
            pl.BlockSpec((None, 1, S), lambda b, hd: (b, 0, 0)),
        ],
        out_specs=pl.BlockSpec((None, S, d_v), lambda b, hd: (hd, b, 0)),
        out_shape=jax.ShapeDtypeStruct((h, B * S, d_v), jnp.float32),
        compiler_params=_cparams(("parallel", "parallel")),
    )(x, p["wq"], p["wk"], p["wv"], p["bq"], p["bk"], p["bv"], padk_bias)


def cross_attention(x, enc, p, enc_bias, h, d_k, d_v):
    B, S, D = x.shape
    Lenc = enc.shape[1]
    return pl.pallas_call(
        _cross_attn_kernel,
        grid=(B, h),
        in_specs=[
            pl.BlockSpec((None, S, D), lambda b, hd: (b, 0, 0)),
            pl.BlockSpec((None, Lenc, D), lambda b, hd: (b, 0, 0)),
            pl.BlockSpec((None, D, d_k), lambda b, hd: (hd, 0, 0)),
            pl.BlockSpec((None, D, d_k), lambda b, hd: (hd, 0, 0)),
            pl.BlockSpec((None, D, d_v), lambda b, hd: (hd, 0, 0)),
            pl.BlockSpec((None, 1, d_k), lambda b, hd: (hd, 0, 0)),
            pl.BlockSpec((None, 1, d_k), lambda b, hd: (hd, 0, 0)),
            pl.BlockSpec((None, 1, d_v), lambda b, hd: (hd, 0, 0)),
            pl.BlockSpec((None, 1, Lenc), lambda b, hd: (b, 0, 0)),
        ],
        out_specs=pl.BlockSpec((None, S, d_v), lambda b, hd: (hd, b, 0)),
        out_shape=jax.ShapeDtypeStruct((h, B * S, d_v), jnp.float32),
        compiler_params=_cparams(("parallel", "parallel")),
    )(x, enc, p["wq"], p["wk"], p["wv"], p["bq"], p["bk"], p["bv"], enc_bias)


# ---------------- fused O-projection + residual + LayerNorm + mask ---------- #
def _oproj_ln_kernel(a_ref, wo_ref, bo_ref, r_ref, g_ref, b_ref, m_ref, o_ref):
    # out = LayerNorm(residual + sum_h attn_h @ Wo_h + bo) * mask
    h = a_ref.shape[0]
    acc = jnp.dot(a_ref[0].astype(jnp.bfloat16), wo_ref[0],
                  preferred_element_type=jnp.float32)
    for hd in range(1, h):
        acc = acc + jnp.dot(a_ref[hd].astype(jnp.bfloat16), wo_ref[hd],
                            preferred_element_type=jnp.float32)
    z = r_ref[...] + acc + bo_ref[...]
    mean = jnp.mean(z, axis=-1, keepdims=True)
    var = jnp.mean((z - mean) ** 2, axis=-1, keepdims=True)
    out = (z - mean) * lax.rsqrt(var + LN_EPS) * g_ref[...] + b_ref[...]
    o_ref[...] = out * m_ref[...]


def oproj_ln(attn, wo, bo, res2d, gamma, beta, mask2d, *, row_tile=None):
    h, M, d_v = attn.shape
    D = wo.shape[2]
    tm = _row_tile(M, row_tile or _DENSE_ROW_TILE)
    return pl.pallas_call(
        _oproj_ln_kernel,
        grid=(M // tm,),
        in_specs=[
            pl.BlockSpec((h, tm, d_v), lambda i: (0, i, 0)),
            _const_spec((h, d_v, D)),
            _const_spec((1, D)),
            pl.BlockSpec((tm, D), lambda i: (i, 0)),
            _const_spec((1, D)),
            _const_spec((1, D)),
            pl.BlockSpec((tm, 1), lambda i: (i, 0)),
        ],
        out_specs=pl.BlockSpec((tm, D), lambda i: (i, 0)),
        out_shape=jax.ShapeDtypeStruct((M, D), jnp.float32),
        compiler_params=_cparams(("parallel",)),
    )(attn, wo, bo.reshape(1, D), res2d,
      gamma.reshape(1, D), beta.reshape(1, D), mask2d)


# ------------------- position-wise FFN (+ residual + LN + mask) ------------- #
def _pwff_kernel(x_ref, w1_ref, b1_ref, w2_ref, b2_ref, g_ref, be_ref, m_ref,
                 o_ref, *, dff_panel):
    # out = LayerNorm(x + W2 relu(W1 x + b1) + b2) * mask ; d_ff panelled so
    # the ReLU intermediate stays small (v7x VMEM) and W2 starts per panel.
    x = x_ref[...]
    xb = x.astype(jnp.bfloat16)
    dff = w1_ref.shape[1]
    acc = jnp.zeros_like(x)
    for off in range(0, dff, dff_panel):
        w1p = w1_ref[:, off:off + dff_panel]
        b1p = b1_ref[:, off:off + dff_panel]
        w2p = w2_ref[off:off + dff_panel, :]
        hdn = jnp.maximum(
            jnp.dot(xb, w1p, preferred_element_type=jnp.float32) + b1p, 0.0)
        acc = acc + jnp.dot(hdn.astype(jnp.bfloat16), w2p,
                            preferred_element_type=jnp.float32)
    z = x + acc + b2_ref[...]
    mean = jnp.mean(z, axis=-1, keepdims=True)
    var = jnp.mean((z - mean) ** 2, axis=-1, keepdims=True)
    out = (z - mean) * lax.rsqrt(var + LN_EPS) * g_ref[...] + be_ref[...]
    o_ref[...] = out * m_ref[...]


def pwff(x2d, p, mask2d, *, row_tile=None):
    M, D = x2d.shape
    dff = p["w1"].shape[1]
    tm = _row_tile(M, row_tile or _DENSE_ROW_TILE)
    kernel = functools.partial(_pwff_kernel, dff_panel=_ff_panel(dff))
    return pl.pallas_call(
        kernel,
        grid=(M // tm,),
        in_specs=[
            pl.BlockSpec((tm, D), lambda i: (i, 0)),
            _const_spec((D, dff)),
            _const_spec((1, dff)),
            _const_spec((dff, D)),
            _const_spec((1, D)),
            _const_spec((1, D)),
            _const_spec((1, D)),
            pl.BlockSpec((tm, 1), lambda i: (i, 0)),
        ],
        out_specs=pl.BlockSpec((tm, D), lambda i: (i, 0)),
        out_shape=jax.ShapeDtypeStruct((M, D), jnp.float32),
        compiler_params=_cparams(("parallel",)),
    )(x2d, p["w1"], p["b1"].reshape(1, dff), p["w2"], p["b2"].reshape(1, D),
      p["ln_g"].reshape(1, D), p["ln_b"].reshape(1, D), mask2d)


# ---- fused tied-projection + log_softmax (never materializes logits) ------ #
def _lse_kernel(x_ref, w_ref, lse_ref, m_sc, l_sc):
    # pass 1: online max / sum-exp over streamed vocab panels
    v = pl.program_id(1)

    @pl.when(v == 0)
    def _():
        m_sc[...] = jnp.full_like(m_sc, NEG_INF)
        l_sc[...] = jnp.zeros_like(l_sc)

    s = lax.dot_general(x_ref[...].astype(jnp.bfloat16), w_ref[...],
                        (((1,), (1,)), ((), ())),
                        preferred_element_type=jnp.float32)
    m_new = jnp.maximum(m_sc[...], jnp.max(s, axis=-1, keepdims=True))
    l_sc[...] = l_sc[...] * jnp.exp(m_sc[...] - m_new) + jnp.sum(
        jnp.exp(s - m_new), axis=-1, keepdims=True)
    m_sc[...] = m_new

    @pl.when(v == pl.num_programs(1) - 1)
    def _():
        lse_ref[...] = m_sc[...] + jnp.log(l_sc[...])


def _logp_kernel(x_ref, w_ref, lse_ref, o_ref):
    # pass 2: recompute the logits panel, subtract LSE, write log-probs
    s = lax.dot_general(x_ref[...].astype(jnp.bfloat16), w_ref[...],
                        (((1,), (1,)), ((), ())),
                        preferred_element_type=jnp.float32)
    o_ref[...] = s - lse_ref[...]


def tied_log_softmax(x2d, emb_bf16, *, row_tile=None, vocab_tile=None):
    M, D = x2d.shape
    V = emb_bf16.shape[0]
    tm = _row_tile(M, row_tile or _LOGSM_ROW_TILE)
    tv = _vocab_tile(V, vocab_tile or _VOCAB_TILE)
    grid = (M // tm, V // tv)

    lse = pl.pallas_call(
        _lse_kernel,
        grid=grid,
        in_specs=[
            pl.BlockSpec((tm, D), lambda i, v: (i, 0)),
            pl.BlockSpec((tv, D), lambda i, v: (v, 0)),
        ],
        out_specs=pl.BlockSpec((tm, 1), lambda i, v: (i, 0)),
        out_shape=jax.ShapeDtypeStruct((M, 1), jnp.float32),
        scratch_shapes=[pltpu.VMEM((tm, 1), jnp.float32),
                        pltpu.VMEM((tm, 1), jnp.float32)],
        compiler_params=_cparams(("parallel", "arbitrary")),
    )(x2d, emb_bf16)

    logp = pl.pallas_call(
        _logp_kernel,
        grid=grid,
        in_specs=[
            pl.BlockSpec((tm, D), lambda i, v: (i, 0)),
            pl.BlockSpec((tv, D), lambda i, v: (v, 0)),
            pl.BlockSpec((tm, 1), lambda i, v: (i, 0)),
        ],
        out_specs=pl.BlockSpec((tm, tv), lambda i, v: (i, v)),
        out_shape=jax.ShapeDtypeStruct((M, V), jnp.float32),
        compiler_params=_cparams(("parallel", "parallel")),
    )(x2d, emb_bf16, lse)
    return logp


# ------------------------------- model glue -------------------------------- #
def decoder_layer(x, enc, enc_bias, mask2d, padk_bias, p, h, d_k, d_v):
    B, S, D = x.shape
    M = B * S
    x2d = x.reshape(M, D)

    # masked self-attention (fused per-head QKV) + fused O-proj/residual/LN/mask
    sp = p["self_att"]
    sa = self_attention(x, sp, padk_bias, h, d_k, d_v)             # (h, M, d_v)
    x1_2d = oproj_ln(sa, sp["wo"], sp["bo"], x2d, p["ln1_g"], p["ln1_b"], mask2d)

    # cross-attention (fused per-head Q and encoder K/V projections)
    cp = p["enc_att"]
    ea = cross_attention(x1_2d.reshape(B, S, D), enc, cp, enc_bias, h, d_k, d_v)
    x2_2d = oproj_ln(ea, cp["wo"], cp["bo"], x1_2d, p["ln2_g"], p["ln2_b"], mask2d)

    # position-wise FFN (panelled d_ff + residual + LN + mask)
    ff2d = pwff(x2_2d, p["ff"], mask2d)
    return ff2d.reshape(B, S, D)


def ptsm_decoder_forward(params, input_ids, encoder_output, mask_encoder,
                         *, padding_idx, h, d_k, d_v):
    B, S = input_ids.shape
    D = params["word_emb"].shape[1]
    Lenc = encoder_output.shape[1]
    M = B * S

    # masks (same semantics as the torch forward); the causal part of the
    # self-attention mask is rebuilt inside the kernel (no (B,S,S) stream).
    mask2d = (input_ids != padding_idx).astype(jnp.float32).reshape(M, 1)
    padk_bias = jnp.where(input_ids == padding_idx, NEG_INF,
                          0.0).astype(jnp.float32)[:, None, :]        # (B,1,S)
    enc_bias = jnp.where(mask_encoder.reshape(B, 1, Lenc),
                         NEG_INF, 0.0).astype(jnp.float32)             # (B,1,Lenc)

    # embeddings (gathers stay in XLA)
    seq = jnp.broadcast_to(jnp.arange(1, S + 1, dtype=jnp.int32)[None, :], (B, S))
    seq = jnp.where(input_ids == padding_idx, 0, seq)
    out = params["word_emb"][input_ids] + params["pos_emb"][seq]

    for lp in params["layers"]:
        out = decoder_layer(out, encoder_output, enc_bias, mask2d, padk_bias,
                            lp, h, d_k, d_v)

    # tied output projection (fc.weight = word embedding, no bias) + log_softmax
    emb_bf = params["word_emb"].astype(jnp.bfloat16)
    logp = tied_log_softmax(out.reshape(M, D), emb_bf)
    return logp.reshape(B, S, -1)


# --------------------------- parameter construction ------------------------ #
def sinusoid_encoding_table(n_position, d_hid, padding_idx=None):
    pos = np.arange(n_position, dtype=np.float64)[:, None]
    i = np.arange(d_hid, dtype=np.float64)[None, :]
    angle = pos / np.power(10000.0, 2.0 * (i // 2) / d_hid)
    table = np.zeros((n_position, d_hid), dtype=np.float64)
    table[:, 0::2] = np.sin(angle[:, 0::2])
    table[:, 1::2] = np.cos(angle[:, 1::2])
    if padding_idx is not None:
        table[padding_idx] = 0.0
    return jnp.asarray(table, dtype=jnp.float32)


def init_params(key, vocab_size, max_len, N_dec, d_model, d_k, d_v, h, d_ff):
    def dense(k, shape):
        return 0.02 * jax.random.normal(k, shape, jnp.float32)

    scale = 1.0 / float(np.sqrt(d_k))   # folded into wq/bq once, at init
    keys = jax.random.split(key, 1 + N_dec)
    # TODO(synk): PTSM loads CLIP word embeddings from ./word_embeds.pth;
    # initialized deterministically here instead (tied with the output fc).
    word_emb = dense(keys[0], (vocab_size, d_model))
    pos_emb = sinusoid_encoding_table(max_len + 1, d_model, 0)

    def mha_params(k4):
        kk = jax.random.split(k4, 4)
        return dict(
            # head-major (h, D, d) weight slabs, stored bf16 for the MXU
            wq=(dense(kk[0], (h, d_model, d_k)) * scale).astype(jnp.bfloat16),
            wk=dense(kk[1], (h, d_model, d_k)).astype(jnp.bfloat16),
            wv=dense(kk[2], (h, d_model, d_v)).astype(jnp.bfloat16),
            bq=jnp.zeros((h, 1, d_k), jnp.float32) * scale,
            bk=jnp.zeros((h, 1, d_k), jnp.float32),
            bv=jnp.zeros((h, 1, d_v), jnp.float32),
            wo=dense(kk[3], (h, d_v, d_model)).astype(jnp.bfloat16),
            bo=jnp.zeros((d_model,), jnp.float32),
        )

    layers = []
    for li in range(N_dec):
        lk = jax.random.split(keys[1 + li], 4)
        layers.append(dict(
            self_att=mha_params(lk[0]),
            enc_att=mha_params(lk[1]),
            ln1_g=jnp.ones((d_model,), jnp.float32),
            ln1_b=jnp.zeros((d_model,), jnp.float32),
            ln2_g=jnp.ones((d_model,), jnp.float32),
            ln2_b=jnp.zeros((d_model,), jnp.float32),
            ff=dict(
                w1=dense(lk[2], (d_model, d_ff)).astype(jnp.bfloat16),
                b1=jnp.zeros((d_ff,), jnp.float32),
                w2=dense(lk[3], (d_ff, d_model)).astype(jnp.bfloat16),
                b2=jnp.zeros((d_model,), jnp.float32),
                ln_g=jnp.ones((d_model,), jnp.float32),
                ln_b=jnp.zeros((d_model,), jnp.float32),
            ),
        ))
    return dict(word_emb=word_emb, pos_emb=pos_emb, layers=layers)


# ----------------------------------- main ----------------------------------- #
if __name__ == "__main__":
    vocab_size, max_len, N_dec, padding_idx = 32, 20, 2, 0
    d_model, d_k, d_v, h, d_ff = 32, 16, 16, 2, 64
    B, S, Lenc = 2, 8, 10

    key = jax.random.PRNGKey(0)
    kp, ki, ke = jax.random.split(key, 3)
    params = init_params(kp, vocab_size, max_len, N_dec, d_model, d_k, d_v, h, d_ff)

    input_ids = jax.random.randint(ki, (B, S), 1, vocab_size, dtype=jnp.int32)
    input_ids = input_ids.at[0, S - 1].set(padding_idx)  # exercise pad masking
    encoder_output = 0.1 * jax.random.normal(ke, (B, Lenc, d_model), jnp.float32)
    mask_encoder = jnp.zeros((B, 1, 1, Lenc), jnp.bool_).at[1, 0, 0, Lenc - 2:].set(True)

    fwd = jax.jit(functools.partial(
        ptsm_decoder_forward, padding_idx=padding_idx, h=h, d_k=d_k, d_v=d_v))
    out = fwd(params, input_ids, encoder_output, mask_encoder)
    jax.block_until_ready(out)

    assert out.shape == (B, S, vocab_size)
    assert bool(jnp.all(jnp.isfinite(out)))
    # log-softmax rows must (approximately) normalize
    assert bool(jnp.all(jnp.abs(jnp.sum(jnp.exp(out), axis=-1) - 1.0) < 1e-3))
    print("KERNEL_OK")
</pallas_src>

<mosaic_0001>
module attributes {stable_mosaic.version = 11 : i64} {
  func.func @k(%arg0: i32, %arg1: memref<8x128xf32, #tpu.memory_space<vmem>>, %arg2: memref<8x128xf32, #tpu.memory_space<vmem>>, %arg3: memref<8x128xf32, #tpu.memory_space<vmem>>) attributes {dimension_semantics = [#tpu.dimension_semantics<arbitrary>], iteration_bounds = array<i64: 2>, scalar_prefetch = 0 : i64, scratch_operands = 0 : i64, tpu.core_type = #tpu.core_type<tc>, window_params = [{transform_indices = @transform_0, window_bounds = array<i64: 8, 128>}, {pipeline_mode = #tpu.pipeline_mode<synchronous>, transform_indices = @transform_1, window_bounds = array<i64: 8, 128>}, {transform_indices = @transform_2, window_bounds = array<i64: 8, 128>}]} {
    %c0 = arith.constant 0 : index
    %c0_0 = arith.constant 0 : index
    %0 = vector.load %arg1[%c0, %c0_0] : memref<8x128xf32, #tpu.memory_space<vmem>>, vector<8x128xf32>
    %c0_1 = arith.constant 0 : index
    %c0_2 = arith.constant 0 : index
    %1 = vector.load %arg2[%c0_1, %c0_2] : memref<8x128xf32, #tpu.memory_space<vmem>>, vector<8x128xf32>
    %2 = arith.addf %0, %1 : vector<8x128xf32>
    %c0_3 = arith.constant 0 : index
    %c0_4 = arith.constant 0 : index
    %3 = vector.load %arg3[%c0_3, %c0_4] : memref<8x128xf32, #tpu.memory_space<vmem>>, vector<8x128xf32>
    tpu.vector_store %arg3[%c0_3, %c0_4], %2 {strides = array<i32>} : memref<8x128xf32, #tpu.memory_space<vmem>>, vector<8x128xf32>,
    return
  }
  func.func @transform_0(%arg0: i32) -> (i32, i32) {
    %c0_i32 = arith.constant 0 : i32
    %c0_i32_0 = arith.constant 0 : i32
    return %arg0, %c0_i32 : i32, i32
  }
  func.func @transform_1(%arg0: i32) -> (i32, i32) {
    %c0_i32 = arith.constant 0 : i32
    %c0_i32_0 = arith.constant 0 : i32
    %c0_i32_1 = arith.constant 0 : i32
    return %c0_i32, %c0_i32_0 : i32, i32
  }
  func.func @transform_2(%arg0: i32) -> (i32, i32) {
    %c0_i32 = arith.constant 0 : i32
    %c0_i32_0 = arith.constant 0 : i32
    return %arg0, %c0_i32 : i32, i32
  }
}

module attributes {stable_mosaic.version = 11 : i64} {
  func.func @_self_attn_kernel(%arg0: i32, %arg1: i32, %arg2: memref<1x8x32xf32, #tpu.memory_space<vmem>>, %arg3: memref<1x32x16xbf16, #tpu.memory_space<vmem>>, %arg4: memref<1x32x16xbf16, #tpu.memory_space<vmem>>, %arg5: memref<1x32x16xbf16, #tpu.memory_space<vmem>>, %arg6: memref<1x1x16xf32, #tpu.memory_space<vmem>>, %arg7: memref<1x1x16xf32, #tpu.memory_space<vmem>>, %arg8: memref<1x1x16xf32, #tpu.memory_space<vmem>>, %arg9: memref<1x1x8xf32, #tpu.memory_space<vmem>>, %arg10: memref<1x8x16xf32, #tpu.memory_space<vmem>>) attributes {dimension_semantics = [#tpu.dimension_semantics<parallel>, #tpu.dimension_semantics<parallel>], iteration_bounds = array<i64: 2, 2>, scalar_prefetch = 0 : i64, scratch_operands = 0 : i64, tpu.core_type = #tpu.core_type<tc>, window_params = [{transform_indices = @transform_0, window_bounds = array<i64: 1, 8, 32>}, {transform_indices = @transform_1, window_bounds = array<i64: 1, 32, 16>}, {transform_indices = @transform_2, window_bounds = array<i64: 1, 32, 16>}, {transform_indices = @transform_3, window_bounds = array<i64: 1, 32, 16>}, {transform_indices = @transform_4, window_bounds = array<i64: 1, 1, 16>}, {transform_indices = @transform_5, window_bounds = array<i64: 1, 1, 16>}, {transform_indices = @transform_6, window_bounds = array<i64: 1, 1, 16>}, {transform_indices = @transform_7, window_bounds = array<i64: 1, 1, 8>}, {transform_indices = @transform_8, window_bounds = array<i64: 1, 8, 16>}]} {
    %c0 = arith.constant 0 : index
    %c0_0 = arith.constant 0 : index
    %c0_1 = arith.constant 0 : index
    %0 = vector.load %arg2[%c0, %c0_0, %c0_1] : memref<1x8x32xf32, #tpu.memory_space<vmem>>, vector<1x8x32xf32>
    %1 = vector.shape_cast %0 : vector<1x8x32xf32> to vector<8x32xf32>
    %2 = arith.truncf %1 : vector<8x32xf32> to vector<8x32xbf16>
    %c0_2 = arith.constant 0 : index
    %c0_3 = arith.constant 0 : index
    %c0_4 = arith.constant 0 : index
    %3 = vector.load %arg3[%c0_2, %c0_3, %c0_4] : memref<1x32x16xbf16, #tpu.memory_space<vmem>>, vector<1x32x16xbf16>
    %4 = vector.shape_cast %3 : vector<1x32x16xbf16> to vector<32x16xbf16>
    %cst = arith.constant dense<0.000000e+00> : vector<8x16xf32>
    %5 = tpu.matmul %2, %4, %cst {dimension_numbers = #tpu.dot_dimension_numbers<[1], [0], [0], [1], [0, 0, 1, 1], [], []>} : vector<8x32xbf16>, vector<32x16xbf16>, vector<8x16xf32> -> vector<8x16xf32>
    %c0_5 = arith.constant 0 : index
    %c0_6 = arith.constant 0 : index
    %c0_7 = arith.constant 0 : index
    %6 = vector.load %arg6[%c0_5, %c0_6, %c0_7] : memref<1x1x16xf32, #tpu.memory_space<vmem>>, vector<1x1x16xf32>
    %7 = vector.shape_cast %6 : vector<1x1x16xf32> to vector<1x16xf32>
    %8 = vector.broadcast %7 : vector<1x16xf32> to vector<8x16xf32>
    %9 = arith.addf %5, %8 : vector<8x16xf32>
    %c0_8 = arith.constant 0 : index
    %c0_9 = arith.constant 0 : index
    %c0_10 = arith.constant 0 : index
    %10 = vector.load %arg4[%c0_8, %c0_9, %c0_10] : memref<1x32x16xbf16, #tpu.memory_space<vmem>>, vector<1x32x16xbf16>
    %11 = vector.shape_cast %10 : vector<1x32x16xbf16> to vector<32x16xbf16>
    %cst_11 = arith.constant dense<0.000000e+00> : vector<8x16xf32>
    %12 = tpu.matmul %2, %11, %cst_11 {dimension_numbers = #tpu.dot_dimension_numbers<[1], [0], [0], [1], [0, 0, 1, 1], [], []>} : vector<8x32xbf16>, vector<32x16xbf16>, vector<8x16xf32> -> vector<8x16xf32>
    %c0_12 = arith.constant 0 : index
    %c0_13 = arith.constant 0 : index
    %c0_14 = arith.constant 0 : index
    %13 = vector.load %arg7[%c0_12, %c0_13, %c0_14] : memref<1x1x16xf32, #tpu.memory_space<vmem>>, vector<1x1x16xf32>
    %14 = vector.shape_cast %13 : vector<1x1x16xf32> to vector<1x16xf32>
    %15 = vector.broadcast %14 : vector<1x16xf32> to vector<8x16xf32>
    %16 = arith.addf %12, %15 : vector<8x16xf32>
    %c0_15 = arith.constant 0 : index
    %c0_16 = arith.constant 0 : index
    %c0_17 = arith.constant 0 : index
    %17 = vector.load %arg5[%c0_15, %c0_16, %c0_17] : memref<1x32x16xbf16, #tpu.memory_space<vmem>>, vector<1x32x16xbf16>
    %18 = vector.shape_cast %17 : vector<1x32x16xbf16> to vector<32x16xbf16>
    %cst_18 = arith.constant dense<0.000000e+00> : vector<8x16xf32>
    %19 = tpu.matmul %2, %18, %cst_18 {dimension_numbers = #tpu.dot_dimension_numbers<[1], [0], [0], [1], [0, 0, 1, 1], [], []>} : vector<8x32xbf16>, vector<32x16xbf16>, vector<8x16xf32> -> vector<8x16xf32>
    %c0_19 = arith.constant 0 : index
    %c0_20 = arith.constant 0 : index
    %c0_21 = arith.constant 0 : index
    %20 = vector.load %arg8[%c0_19, %c0_20, %c0_21] : memref<1x1x16xf32, #tpu.memory_space<vmem>>, vector<1x1x16xf32>
    %21 = vector.shape_cast %20 : vector<1x1x16xf32> to vector<1x16xf32>
    %22 = vector.broadcast %21 : vector<1x16xf32> to vector<8x16xf32>
    %23 = arith.addf %19, %22 : vector<8x16xf32>
    %24 = tpu.iota {dimensions = array<i32: 0>} : vector<8x8xi32>
    %25 = tpu.iota {dimensions = array<i32: 1>} : vector<8x8xi32>
    %26 = arith.cmpi sgt, %25, %24 : vector<8x8xi32>
    %cst_22 = arith.constant -1.000000e+30 : f32
    %cst_23 = arith.constant 0.000000e+00 : f32
    %27 = vector.broadcast %cst_22 : f32 to vector<8x8xf32>
    %28 = vector.broadcast %cst_23 : f32 to vector<8x8xf32>
    %29 = arith.select %26, %27, %28 : vector<8x8xi1>, vector<8x8xf32>
    %c0_24 = arith.constant 0 : index
    %c0_25 = arith.constant 0 : index
    %c0_26 = arith.constant 0 : index
    %30 = vector.load %arg9[%c0_24, %c0_25, %c0_26] : memref<1x1x8xf32, #tpu.memory_space<vmem>>, vector<1x1x8xf32>
    %31 = vector.shape_cast %30 : vector<1x1x8xf32> to vector<1x8xf32>
    %32 = vector.broadcast %31 : vector<1x8xf32> to vector<8x8xf32>
    %33 = arith.addf %29, %32 : vector<8x8xf32>
    %34 = arith.truncf %9 : vector<8x16xf32> to vector<8x16xbf16>
    %35 = arith.truncf %16 : vector<8x16xf32> to vector<8x16xbf16>
    %cst_27 = arith.constant dense<0.000000e+00> : vector<8x8xf32>
    %36 = tpu.matmul %34, %35, %cst_27 {dimension_numbers = #tpu.dot_dimension_numbers<[1], [1], [0], [0], [0, 0, 1, 0], [], []>} : vector<8x16xbf16>, vector<8x16xbf16>, vector<8x8xf32> -> vector<8x8xf32>
    %37 = arith.addf %36, %33 : vector<8x8xf32>
    %cst_28 = arith.constant dense<0xFF800000> : vector<8xf32>
    %38 = vector.multi_reduction <maximumf>, %37, %cst_28 [1] : vector<8x8xf32> to vector<8xf32>
    %39 = vector.shape_cast %38 : vector<8xf32> to vector<8x1xf32>
    %40 = vector.broadcast %39 : vector<8x1xf32> to vector<8x8xf32>
    %41 = arith.subf %37, %40 : vector<8x8xf32>
    %42 = math.exp %41 : vector<8x8xf32>
    %cst_29 = arith.constant dense<0.000000e+00> : vector<8xf32>
    %43 = vector.multi_reduction <add>, %42, %cst_29 [1] : vector<8x8xf32> to vector<8xf32>
    %44 = vector.shape_cast %43 : vector<8xf32> to vector<8x1xf32>
    %45 = tpu.reciprocal %44 {approx = true} : vector<8x1xf32> -> vector<8x1xf32>
    %46 = vector.broadcast %45 : vector<8x1xf32> to vector<8x8xf32>
    %47 = arith.mulf %42, %46 : vector<8x8xf32>
    %48 = arith.truncf %47 : vector<8x8xf32> to vector<8x8xbf16>
    %49 = arith.truncf %23 : vector<8x16xf32> to vector<8x16xbf16>
    %cst_30 = arith.constant dense<0.000000e+00> : vector<8x16xf32>
    %50 = tpu.matmul %48, %49, %cst_30 {dimension_numbers = #tpu.dot_dimension_numbers<[1], [0], [0], [1], [0, 0, 1, 1], [], []>} : vector<8x8xbf16>, vector<8x16xbf16>, vector<8x16xf32> -> vector<8x16xf32>
    %c0_31 = arith.constant 0 : index
    %c0_32 = arith.constant 0 : index
    %c0_33 = arith.constant 0 : index
    %51 = vector.load %arg10[%c0_31, %c0_32, %c0_33] : memref<1x8x16xf32, #tpu.memory_space<vmem>>, vector<1x8x16xf32>
    %52 = vector.shape_cast %51 : vector<1x8x16xf32> to vector<8x16xf32>
    %53 = vector.shape_cast %50 : vector<8x16xf32> to vector<1x8x16xf32>
    tpu.vector_store %arg10[%c0_31, %c0_32, %c0_33], %53 {strides = array<i32>} : memref<1x8x16xf32, #tpu.memory_space<vmem>>, vector<1x8x16xf32>,
    return
  }
  func.func @transform_0(%arg0: i32, %arg1: i32) -> (i32, i32, i32) {
    %c0_i32 = arith.constant 0 : i32
    %c0_i32_0 = arith.constant 0 : i32
    %c0_i32_1 = arith.constant 0 : i32
    return %arg0, %c0_i32, %c0_i32_0 : i32, i32, i32
  }
  func.func @transform_1(%arg0: i32, %arg1: i32) -> (i32, i32, i32) {
    %c0_i32 = arith.constant 0 : i32
    %c0_i32_0 = arith.constant 0 : i32
    %c0_i32_1 = arith.constant 0 : i32
    return %arg1, %c0_i32, %c0_i32_0 : i32, i32, i32
  }
  func.func @transform_2(%arg0: i32, %arg1: i32) -> (i32, i32, i32) {
    %c0_i32 = arith.constant 0 : i32
    %c0_i32_0 = arith.constant 0 : i32
    %c0_i32_1 = arith.constant 0 : i32
    return %arg1, %c0_i32, %c0_i32_0 : i32, i32, i32
  }
  func.func @transform_3(%arg0: i32, %arg1: i32) -> (i32, i32, i32) {
    %c0_i32 = arith.constant 0 : i32
    %c0_i32_0 = arith.constant 0 : i32
    %c0_i32_1 = arith.constant 0 : i32
    return %arg1, %c0_i32, %c0_i32_0 : i32, i32, i32
  }
  func.func @transform_4(%arg0: i32, %arg1: i32) -> (i32, i32, i32) {
    %c0_i32 = arith.constant 0 : i32
    %c0_i32_0 = arith.constant 0 : i32
    %c0_i32_1 = arith.constant 0 : i32
    return %arg1, %c0_i32, %c0_i32_0 : i32, i32, i32
  }
  func.func @transform_5(%arg0: i32, %arg1: i32) -> (i32, i32, i32) {
    %c0_i32 = arith.constant 0 : i32
    %c0_i32_0 = arith.constant 0 : i32
    %c0_i32_1 = arith.constant 0 : i32
    return %arg1, %c0_i32, %c0_i32_0 : i32, i32, i32
  }
  func.func @transform_6(%arg0: i32, %arg1: i32) -> (i32, i32, i32) {
    %c0_i32 = arith.constant 0 : i32
    %c0_i32_0 = arith.constant 0 : i32
    %c0_i32_1 = arith.constant 0 : i32
    return %arg1, %c0_i32, %c0_i32_0 : i32, i32, i32
  }
  func.func @transform_7(%arg0: i32, %arg1: i32) -> (i32, i32, i32) {
    %c0_i32 = arith.constant 0 : i32
    %c0_i32_0 = arith.constant 0 : i32
    %c0_i32_1 = arith.constant 0 : i32
    return %arg0, %c0_i32, %c0_i32_0 : i32, i32, i32
  }
  func.func @transform_8(%arg0: i32, %arg1: i32) -> (i32, i32, i32) {
    %c0_i32 = arith.constant 0 : i32
    %c0_i32_0 = arith.constant 0 : i32
    return %arg1, %arg0, %c0_i32 : i32, i32, i32
  }
}

module attributes {stable_mosaic.version = 11 : i64} {
  func.func @_pwff_kernel(%arg0: i32, %arg1: memref<16x32xf32, #tpu.memory_space<vmem>>, %arg2: memref<32x64xbf16, #tpu.memory_space<vmem>>, %arg3: memref<1x64xf32, #tpu.memory_space<vmem>>, %arg4: memref<64x32xbf16, #tpu.memory_space<vmem>>, %arg5: memref<1x32xf32, #tpu.memory_space<vmem>>, %arg6: memref<1x32xf32, #tpu.memory_space<vmem>>, %arg7: memref<1x32xf32, #tpu.memory_space<vmem>>, %arg8: memref<16x1xf32, #tpu.memory_space<vmem>>, %arg9: memref<16x32xf32, #tpu.memory_space<vmem>>) attributes {dimension_semantics = [#tpu.dimension_semantics<parallel>], iteration_bounds = array<i64: 1>, scalar_prefetch = 0 : i64, scratch_operands = 0 : i64, tpu.core_type = #tpu.core_type<tc>, window_params = [{transform_indices = @transform_0, window_bounds = array<i64: 16, 32>}, {pipeline_mode = #tpu.pipeline_mode<synchronous>, transform_indices = @transform_1, window_bounds = array<i64: 32, 64>}, {pipeline_mode = #tpu.pipeline_mode<synchronous>, transform_indices = @transform_2, window_bounds = array<i64: 1, 64>}, {pipeline_mode = #tpu.pipeline_mode<synchronous>, transform_indices = @transform_3, window_bounds = array<i64: 64, 32>}, {pipeline_mode = #tpu.pipeline_mode<synchronous>, transform_indices = @transform_4, window_bounds = array<i64: 1, 32>}, {pipeline_mode = #tpu.pipeline_mode<synchronous>, transform_indices = @transform_5, window_bounds = array<i64: 1, 32>}, {pipeline_mode = #tpu.pipeline_mode<synchronous>, transform_indices = @transform_6, window_bounds = array<i64: 1, 32>}, {transform_indices = @transform_7, window_bounds = array<i64: 16, 1>}, {transform_indices = @transform_8, window_bounds = array<i64: 16, 32>}]} {
    %c0 = arith.constant 0 : index
    %c0_0 = arith.constant 0 : index
    %0 = vector.load %arg1[%c0, %c0_0] : memref<16x32xf32, #tpu.memory_space<vmem>>, vector<16x32xf32>
    %1 = arith.truncf %0 : vector<16x32xf32> to vector<16x32xbf16>
    %cst = arith.constant 0.000000e+00 : f32
    %2 = vector.broadcast %cst : f32 to vector<16x32xf32>
    %c0_1 = arith.constant 0 : index
    %c0_2 = arith.constant 0 : index
    %3 = vector.load %arg2[%c0_1, %c0_2] : memref<32x64xbf16, #tpu.memory_space<vmem>>, vector<32x64xbf16>
    %c0_3 = arith.constant 0 : index
    %c0_4 = arith.constant 0 : index
    %4 = vector.load %arg3[%c0_3, %c0_4] : memref<1x64xf32, #tpu.memory_space<vmem>>, vector<1x64xf32>
    %c0_5 = arith.constant 0 : index
    %c0_6 = arith.constant 0 : index
    %5 = vector.load %arg4[%c0_5, %c0_6] : memref<64x32xbf16, #tpu.memory_space<vmem>>, vector<64x32xbf16>
    %cst_7 = arith.constant dense<0.000000e+00> : vector<16x64xf32>
    %6 = tpu.matmul %1, %3, %cst_7 {dimension_numbers = #tpu.dot_dimension_numbers<[1], [0], [0], [1], [0, 0, 1, 1], [], []>} : vector<16x32xbf16>, vector<32x64xbf16>, vector<16x64xf32> -> vector<16x64xf32>
    %7 = vector.broadcast %4 : vector<1x64xf32> to vector<16x64xf32>
    %8 = arith.addf %6, %7 : vector<16x64xf32>
    %cst_8 = arith.constant 0.000000e+00 : f32
    %9 = vector.broadcast %cst_8 : f32 to vector<16x64xf32>
    %10 = arith.maximumf %8, %9 : vector<16x64xf32>
    %11 = arith.truncf %10 : vector<16x64xf32> to vector<16x64xbf16>
    %cst_9 = arith.constant dense<0.000000e+00> : vector<16x32xf32>
    %12 = tpu.matmul %11, %5, %cst_9 {dimension_numbers = #tpu.dot_dimension_numbers<[1], [0], [0], [1], [0, 0, 1, 1], [], []>} : vector<16x64xbf16>, vector<64x32xbf16>, vector<16x32xf32> -> vector<16x32xf32>
    %13 = arith.addf %2, %12 : vector<16x32xf32>
    %14 = arith.addf %0, %13 : vector<16x32xf32>
    %c0_10 = arith.constant 0 : index
    %c0_11 = arith.constant 0 : index
    %15 = vector.load %arg5[%c0_10, %c0_11] : memref<1x32xf32, #tpu.memory_space<vmem>>, vector<1x32xf32>
    %16 = vector.broadcast %15 : vector<1x32xf32> to vector<16x32xf32>
    %17 = arith.addf %14, %16 : vector<16x32xf32>
    %cst_12 = arith.constant dense<0.000000e+00> : vector<16xf32>
    %18 = vector.multi_reduction <add>, %17, %cst_12 [1] : vector<16x32xf32> to vector<16xf32>
    %19 = vector.shape_cast %18 : vector<16xf32> to vector<16x1xf32>
    %cst_13 = arith.constant 3.200000e+01 : f32
    %20 = vector.broadcast %cst_13 : f32 to vector<16x1xf32>
    %21 = arith.divf %19, %20 : vector<16x1xf32>
    %22 = vector.broadcast %21 : vector<16x1xf32> to vector<16x32xf32>
    %23 = arith.subf %17, %22 : vector<16x32xf32>
    %24 = arith.mulf %23, %23 : vector<16x32xf32>
    %cst_14 = arith.constant dense<0.000000e+00> : vector<16xf32>
    %25 = vector.multi_reduction <add>, %24, %cst_14 [1] : vector<16x32xf32> to vector<16xf32>
    %26 = vector.shape_cast %25 : vector<16xf32> to vector<16x1xf32>
    %cst_15 = arith.constant 3.200000e+01 : f32
    %27 = vector.broadcast %cst_15 : f32 to vector<16x1xf32>
    %28 = arith.divf %26, %27 : vector<16x1xf32>
    %29 = vector.broadcast %21 : vector<16x1xf32> to vector<16x32xf32>
    %30 = arith.subf %17, %29 : vector<16x32xf32>
    %cst_16 = arith.constant 9.99999974E-6 : f32
    %31 = vector.broadcast %cst_16 : f32 to vector<16x1xf32>
    %32 = arith.addf %28, %31 : vector<16x1xf32>
    %33 = math.rsqrt %32 : vector<16x1xf32>
    %34 = vector.broadcast %33 : vector<16x1xf32> to vector<16x32xf32>
    %35 = arith.mulf %30, %34 : vector<16x32xf32>
    %c0_17 = arith.constant 0 : index
    %c0_18 = arith.constant 0 : index
    %36 = vector.load %arg6[%c0_17, %c0_18] : memref<1x32xf32, #tpu.memory_space<vmem>>, vector<1x32xf32>
    %37 = vector.broadcast %36 : vector<1x32xf32> to vector<16x32xf32>
    %38 = arith.mulf %35, %37 : vector<16x32xf32>
    %c0_19 = arith.constant 0 : index
    %c0_20 = arith.constant 0 : index
    %39 = vector.load %arg7[%c0_19, %c0_20] : memref<1x32xf32, #tpu.memory_space<vmem>>, vector<1x32xf32>
    %40 = vector.broadcast %39 : vector<1x32xf32> to vector<16x32xf32>
    %41 = arith.addf %38, %40 : vector<16x32xf32>
    %c0_21 = arith.constant 0 : index
    %c0_22 = arith.constant 0 : index
    %42 = vector.load %arg8[%c0_21, %c0_22] : memref<16x1xf32, #tpu.memory_space<vmem>>, vector<16x1xf32>
    %43 = vector.broadcast %42 : vector<16x1xf32> to vector<16x32xf32>
    %44 = arith.mulf %41, %43 : vector<16x32xf32>
    %c0_23 = arith.constant 0 : index
    %c0_24 = arith.constant 0 : index
    %45 = vector.load %arg9[%c0_23, %c0_24] : memref<16x32xf32, #tpu.memory_space<vmem>>, vector<16x32xf32>
    tpu.vector_store %arg9[%c0_23, %c0_24], %44 {strides = array<i32>} : memref<16x32xf32, #tpu.memory_space<vmem>>, vector<16x32xf32>,
    return
  }
  func.func @transform_0(%arg0: i32) -> (i32, i32) {
    %c0_i32 = arith.constant 0 : i32
    %c0_i32_0 = arith.constant 0 : i32
    return %arg0, %c0_i32 : i32, i32
  }
  func.func @transform_1(%arg0: i32) -> (i32, i32) {
    %c0_i32 = arith.constant 0 : i32
    %c0_i32_0 = arith.constant 0 : i32
    %c0_i32_1 = arith.constant 0 : i32
    return %c0_i32, %c0_i32_0 : i32, i32
  }
  func.func @transform_2(%arg0: i32) -> (i32, i32) {
    %c0_i32 = arith.constant 0 : i32
    %c0_i32_0 = arith.constant 0 : i32
    %c0_i32_1 = arith.constant 0 : i32
    return %c0_i32, %c0_i32_0 : i32, i32
  }
  func.func @transform_3(%arg0: i32) -> (i32, i32) {
    %c0_i32 = arith.constant 0 : i32
    %c0_i32_0 = arith.constant 0 : i32
    %c0_i32_1 = arith.constant 0 : i32
    return %c0_i32, %c0_i32_0 : i32, i32
  }
  func.func @transform_4(%arg0: i32) -> (i32, i32) {
    %c0_i32 = arith.constant 0 : i32
    %c0_i32_0 = arith.constant 0 : i32
    %c0_i32_1 = arith.constant 0 : i32
    return %c0_i32, %c0_i32_0 : i32, i32
  }
  func.func @transform_5(%arg0: i32) -> (i32, i32) {
    %c0_i32 = arith.constant 0 : i32
    %c0_i32_0 = arith.constant 0 : i32
    %c0_i32_1 = arith.constant 0 : i32
    return %c0_i32, %c0_i32_0 : i32, i32
  }
  func.func @transform_6(%arg0: i32) -> (i32, i32) {
    %c0_i32 = arith.constant 0 : i32
    %c0_i32_0 = arith.constant 0 : i32
    %c0_i32_1 = arith.constant 0 : i32
    return %c0_i32, %c0_i32_0 : i32, i32
  }
  func.func @transform_7(%arg0: i32) -> (i32, i32) {
    %c0_i32 = arith.constant 0 : i32
    %c0_i32_0 = arith.constant 0 : i32
    return %arg0, %c0_i32 : i32, i32
  }
  func.func @transform_8(%arg0: i32) -> (i32, i32) {
    %c0_i32 = arith.constant 0 : i32
    %c0_i32_0 = arith.constant 0 : i32
    return %arg0, %c0_i32 : i32, i32
  }
}

module attributes {stable_mosaic.version = 11 : i64} {
  func.func @_oproj_ln_kernel(%arg0: i32, %arg1: memref<2x16x16xf32, #tpu.memory_space<vmem>>, %arg2: memref<2x16x32xbf16, #tpu.memory_space<vmem>>, %arg3: memref<1x32xf32, #tpu.memory_space<vmem>>, %arg4: memref<16x32xf32, #tpu.memory_space<vmem>>, %arg5: memref<1x32xf32, #tpu.memory_space<vmem>>, %arg6: memref<1x32xf32, #tpu.memory_space<vmem>>, %arg7: memref<16x1xf32, #tpu.memory_space<vmem>>, %arg8: memref<16x32xf32, #tpu.memory_space<vmem>>) attributes {dimension_semantics = [#tpu.dimension_semantics<parallel>], iteration_bounds = array<i64: 1>, scalar_prefetch = 0 : i64, scratch_operands = 0 : i64, tpu.core_type = #tpu.core_type<tc>, window_params = [{transform_indices = @transform_0, window_bounds = array<i64: 2, 16, 16>}, {pipeline_mode = #tpu.pipeline_mode<synchronous>, transform_indices = @transform_1, window_bounds = array<i64: 2, 16, 32>}, {pipeline_mode = #tpu.pipeline_mode<synchronous>, transform_indices = @transform_2, window_bounds = array<i64: 1, 32>}, {transform_indices = @transform_3, window_bounds = array<i64: 16, 32>}, {pipeline_mode = #tpu.pipeline_mode<synchronous>, transform_indices = @transform_4, window_bounds = array<i64: 1, 32>}, {pipeline_mode = #tpu.pipeline_mode<synchronous>, transform_indices = @transform_5, window_bounds = array<i64: 1, 32>}, {transform_indices = @transform_6, window_bounds = array<i64: 16, 1>}, {transform_indices = @transform_7, window_bounds = array<i64: 16, 32>}]} {
    %c0 = arith.constant 0 : index
    %c0_0 = arith.constant 0 : index
    %c0_1 = arith.constant 0 : index
    %0 = vector.load %arg1[%c0, %c0_0, %c0_1] : memref<2x16x16xf32, #tpu.memory_space<vmem>>, vector<1x16x16xf32>
    %1 = vector.shape_cast %0 : vector<1x16x16xf32> to vector<16x16xf32>
    %2 = arith.truncf %1 : vector<16x16xf32> to vector<16x16xbf16>
    %c0_2 = arith.constant 0 : index
    %c0_3 = arith.constant 0 : index
    %c0_4 = arith.constant 0 : index
    %3 = vector.load %arg2[%c0_2, %c0_3, %c0_4] : memref<2x16x32xbf16, #tpu.memory_space<vmem>>, vector<1x16x32xbf16>
    %4 = vector.shape_cast %3 : vector<1x16x32xbf16> to vector<16x32xbf16>
    %cst = arith.constant dense<0.000000e+00> : vector<16x32xf32>
    %5 = tpu.matmul %2, %4, %cst {dimension_numbers = #tpu.dot_dimension_numbers<[1], [0], [0], [1], [0, 0, 1, 1], [], []>} : vector<16x16xbf16>, vector<16x32xbf16>, vector<16x32xf32> -> vector<16x32xf32>
    %c1 = arith.constant 1 : index
    %c0_5 = arith.constant 0 : index
    %c0_6 = arith.constant 0 : index
    %6 = vector.load %arg1[%c1, %c0_5, %c0_6] : memref<2x16x16xf32, #tpu.memory_space<vmem>>, vector<1x16x16xf32>
    %7 = vector.shape_cast %6 : vector<1x16x16xf32> to vector<16x16xf32>
    %8 = arith.truncf %7 : vector<16x16xf32> to vector<16x16xbf16>
    %c1_7 = arith.constant 1 : index
    %c0_8 = arith.constant 0 : index
    %c0_9 = arith.constant 0 : index
    %9 = vector.load %arg2[%c1_7, %c0_8, %c0_9] : memref<2x16x32xbf16, #tpu.memory_space<vmem>>, vector<1x16x32xbf16>
    %10 = vector.shape_cast %9 : vector<1x16x32xbf16> to vector<16x32xbf16>
    %cst_10 = arith.constant dense<0.000000e+00> : vector<16x32xf32>
    %11 = tpu.matmul %8, %10, %cst_10 {dimension_numbers = #tpu.dot_dimension_numbers<[1], [0], [0], [1], [0, 0, 1, 1], [], []>} : vector<16x16xbf16>, vector<16x32xbf16>, vector<16x32xf32> -> vector<16x32xf32>
    %12 = arith.addf %5, %11 : vector<16x32xf32>
    %c0_11 = arith.constant 0 : index
    %c0_12 = arith.constant 0 : index
    %13 = vector.load %arg4[%c0_11, %c0_12] : memref<16x32xf32, #tpu.memory_space<vmem>>, vector<16x32xf32>
    %14 = arith.addf %13, %12 : vector<16x32xf32>
    %c0_13 = arith.constant 0 : index
    %c0_14 = arith.constant 0 : index
    %15 = vector.load %arg3[%c0_13, %c0_14] : memref<1x32xf32, #tpu.memory_space<vmem>>, vector<1x32xf32>
    %16 = vector.broadcast %15 : vector<1x32xf32> to vector<16x32xf32>
    %17 = arith.addf %14, %16 : vector<16x32xf32>
    %cst_15 = arith.constant dense<0.000000e+00> : vector<16xf32>
    %18 = vector.multi_reduction <add>, %17, %cst_15 [1] : vector<16x32xf32> to vector<16xf32>
    %19 = vector.shape_cast %18 : vector<16xf32> to vector<16x1xf32>
    %cst_16 = arith.constant 3.200000e+01 : f32
    %20 = vector.broadcast %cst_16 : f32 to vector<16x1xf32>
    %21 = arith.divf %19, %20 : vector<16x1xf32>
    %22 = vector.broadcast %21 : vector<16x1xf32> to vector<16x32xf32>
    %23 = arith.subf %17, %22 : vector<16x32xf32>
    %24 = arith.mulf %23, %23 : vector<16x32xf32>
    %cst_17 = arith.constant dense<0.000000e+00> : vector<16xf32>
    %25 = vector.multi_reduction <add>, %24, %cst_17 [1] : vector<16x32xf32> to vector<16xf32>
    %26 = vector.shape_cast %25 : vector<16xf32> to vector<16x1xf32>
    %cst_18 = arith.constant 3.200000e+01 : f32
    %27 = vector.broadcast %cst_18 : f32 to vector<16x1xf32>
    %28 = arith.divf %26, %27 : vector<16x1xf32>
    %29 = vector.broadcast %21 : vector<16x1xf32> to vector<16x32xf32>
    %30 = arith.subf %17, %29 : vector<16x32xf32>
    %cst_19 = arith.constant 9.99999974E-6 : f32
    %31 = vector.broadcast %cst_19 : f32 to vector<16x1xf32>
    %32 = arith.addf %28, %31 : vector<16x1xf32>
    %33 = math.rsqrt %32 : vector<16x1xf32>
    %34 = vector.broadcast %33 : vector<16x1xf32> to vector<16x32xf32>
    %35 = arith.mulf %30, %34 : vector<16x32xf32>
    %c0_20 = arith.constant 0 : index
    %c0_21 = arith.constant 0 : index
    %36 = vector.load %arg5[%c0_20, %c0_21] : memref<1x32xf32, #tpu.memory_space<vmem>>, vector<1x32xf32>
    %37 = vector.broadcast %36 : vector<1x32xf32> to vector<16x32xf32>
    %38 = arith.mulf %35, %37 : vector<16x32xf32>
    %c0_22 = arith.constant 0 : index
    %c0_23 = arith.constant 0 : index
    %39 = vector.load %arg6[%c0_22, %c0_23] : memref<1x32xf32, #tpu.memory_space<vmem>>, vector<1x32xf32>
    %40 = vector.broadcast %39 : vector<1x32xf32> to vector<16x32xf32>
    %41 = arith.addf %38, %40 : vector<16x32xf32>
    %c0_24 = arith.constant 0 : index
    %c0_25 = arith.constant 0 : index
    %42 = vector.load %arg7[%c0_24, %c0_25] : memref<16x1xf32, #tpu.memory_space<vmem>>, vector<16x1xf32>
    %43 = vector.broadcast %42 : vector<16x1xf32> to vector<16x32xf32>
    %44 = arith.mulf %41, %43 : vector<16x32xf32>
    %c0_26 = arith.constant 0 : index
    %c0_27 = arith.constant 0 : index
    %45 = vector.load %arg8[%c0_26, %c0_27] : memref<16x32xf32, #tpu.memory_space<vmem>>, vector<16x32xf32>
    tpu.vector_store %arg8[%c0_26, %c0_27], %44 {strides = array<i32>} : memref<16x32xf32, #tpu.memory_space<vmem>>, vector<16x32xf32>,
    return
  }
  func.func @transform_0(%arg0: i32) -> (i32, i32, i32) {
    %c0_i32 = arith.constant 0 : i32
    %c0_i32_0 = arith.constant 0 : i32
    %c0_i32_1 = arith.constant 0 : i32
    return %c0_i32, %arg0, %c0_i32_0 : i32, i32, i32
  }
  func.func @transform_1(%arg0: i32) -> (i32, i32, i32) {
    %c0_i32 = arith.constant 0 : i32
    %c0_i32_0 = arith.constant 0 : i32
    %c0_i32_1 = arith.constant 0 : i32
    %c0_i32_2 = arith.constant 0 : i32
    return %c0_i32, %c0_i32_0, %c0_i32_1 : i32, i32, i32
  }
  func.func @transform_2(%arg0: i32) -> (i32, i32) {
    %c0_i32 = arith.constant 0 : i32
    %c0_i32_0 = arith.constant 0 : i32
    %c0_i32_1 = arith.constant 0 : i32
    return %c0_i32, %c0_i32_0 : i32, i32
  }
  func.func @transform_3(%arg0: i32) -> (i32, i32) {
    %c0_i32 = arith.constant 0 : i32
    %c0_i32_0 = arith.constant 0 : i32
    return %arg0, %c0_i32 : i32, i32
  }
  func.func @transform_4(%arg0: i32) -> (i32, i32) {
    %c0_i32 = arith.constant 0 : i32
    %c0_i32_0 = arith.constant 0 : i32
    %c0_i32_1 = arith.constant 0 : i32
    return %c0_i32, %c0_i32_0 : i32, i32
  }
  func.func @transform_5(%arg0: i32) -> (i32, i32) {
    %c0_i32 = arith.constant 0 : i32
    %c0_i32_0 = arith.constant 0 : i32
    %c0_i32_1 = arith.constant 0 : i32
    return %c0_i32, %c0_i32_0 : i32, i32
  }
  func.func @transform_6(%arg0: i32) -> (i32, i32) {
    %c0_i32 = arith.constant 0 : i32
    %c0_i32_0 = arith.constant 0 : i32
    return %arg0, %c0_i32 : i32, i32
  }
  func.func @transform_7(%arg0: i32) -> (i32, i32) {
    %c0_i32 = arith.constant 0 : i32
    %c0_i32_0 = arith.constant 0 : i32
    return %arg0, %c0_i32 : i32, i32
  }
}

module attributes {stable_mosaic.version = 11 : i64} {
  func.func @_cross_attn_kernel(%arg0: i32, %arg1: i32, %arg2: memref<1x8x32xf32, #tpu.memory_space<vmem>>, %arg3: memref<1x10x32xf32, #tpu.memory_space<vmem>>, %arg4: memref<1x32x16xbf16, #tpu.memory_space<vmem>>, %arg5: memref<1x32x16xbf16, #tpu.memory_space<vmem>>, %arg6: memref<1x32x16xbf16, #tpu.memory_space<vmem>>, %arg7: memref<1x1x16xf32, #tpu.memory_space<vmem>>, %arg8: memref<1x1x16xf32, #tpu.memory_space<vmem>>, %arg9: memref<1x1x16xf32, #tpu.memory_space<vmem>>, %arg10: memref<1x1x10xf32, #tpu.memory_space<vmem>>, %arg11: memref<1x8x16xf32, #tpu.memory_space<vmem>>) attributes {dimension_semantics = [#tpu.dimension_semantics<parallel>, #tpu.dimension_semantics<parallel>], iteration_bounds = array<i64: 2, 2>, scalar_prefetch = 0 : i64, scratch_operands = 0 : i64, tpu.core_type = #tpu.core_type<tc>, window_params = [{transform_indices = @transform_0, window_bounds = array<i64: 1, 8, 32>}, {transform_indices = @transform_1, window_bounds = array<i64: 1, 10, 32>}, {transform_indices = @transform_2, window_bounds = array<i64: 1, 32, 16>}, {transform_indices = @transform_3, window_bounds = array<i64: 1, 32, 16>}, {transform_indices = @transform_4, window_bounds = array<i64: 1, 32, 16>}, {transform_indices = @transform_5, window_bounds = array<i64: 1, 1, 16>}, {transform_indices = @transform_6, window_bounds = array<i64: 1, 1, 16>}, {transform_indices = @transform_7, window_bounds = array<i64: 1, 1, 16>}, {transform_indices = @transform_8, window_bounds = array<i64: 1, 1, 10>}, {transform_indices = @transform_9, window_bounds = array<i64: 1, 8, 16>}]} {
    %c0 = arith.constant 0 : index
    %c0_0 = arith.constant 0 : index
    %c0_1 = arith.constant 0 : index
    %0 = vector.load %arg2[%c0, %c0_0, %c0_1] : memref<1x8x32xf32, #tpu.memory_space<vmem>>, vector<1x8x32xf32>
    %1 = vector.shape_cast %0 : vector<1x8x32xf32> to vector<8x32xf32>
    %2 = arith.truncf %1 : vector<8x32xf32> to vector<8x32xbf16>
    %c0_2 = arith.constant 0 : index
    %c0_3 = arith.constant 0 : index
    %c0_4 = arith.constant 0 : index
    %3 = vector.load %arg3[%c0_2, %c0_3, %c0_4] : memref<1x10x32xf32, #tpu.memory_space<vmem>>, vector<1x10x32xf32>
    %4 = vector.shape_cast %3 : vector<1x10x32xf32> to vector<10x32xf32>
    %5 = arith.truncf %4 : vector<10x32xf32> to vector<10x32xbf16>
    %c0_5 = arith.constant 0 : index
    %c0_6 = arith.constant 0 : index
    %c0_7 = arith.constant 0 : index
    %6 = vector.load %arg4[%c0_5, %c0_6, %c0_7] : memref<1x32x16xbf16, #tpu.memory_space<vmem>>, vector<1x32x16xbf16>
    %7 = vector.shape_cast %6 : vector<1x32x16xbf16> to vector<32x16xbf16>
    %cst = arith.constant dense<0.000000e+00> : vector<8x16xf32>
    %8 = tpu.matmul %2, %7, %cst {dimension_numbers = #tpu.dot_dimension_numbers<[1], [0], [0], [1], [0, 0, 1, 1], [], []>} : vector<8x32xbf16>, vector<32x16xbf16>, vector<8x16xf32> -> vector<8x16xf32>
    %c0_8 = arith.constant 0 : index
    %c0_9 = arith.constant 0 : index
    %c0_10 = arith.constant 0 : index
    %9 = vector.load %arg7[%c0_8, %c0_9, %c0_10] : memref<1x1x16xf32, #tpu.memory_space<vmem>>, vector<1x1x16xf32>
    %10 = vector.shape_cast %9 : vector<1x1x16xf32> to vector<1x16xf32>
    %11 = vector.broadcast %10 : vector<1x16xf32> to vector<8x16xf32>
    %12 = arith.addf %8, %11 : vector<8x16xf32>
    %c0_11 = arith.constant 0 : index
    %c0_12 = arith.constant 0 : index
    %c0_13 = arith.constant 0 : index
    %13 = vector.load %arg5[%c0_11, %c0_12, %c0_13] : memref<1x32x16xbf16, #tpu.memory_space<vmem>>, vector<1x32x16xbf16>
    %14 = vector.shape_cast %13 : vector<1x32x16xbf16> to vector<32x16xbf16>
    %cst_14 = arith.constant dense<0.000000e+00> : vector<10x16xf32>
    %15 = tpu.matmul %5, %14, %cst_14 {dimension_numbers = #tpu.dot_dimension_numbers<[1], [0], [0], [1], [0, 0, 1, 1], [], []>} : vector<10x32xbf16>, vector<32x16xbf16>, vector<10x16xf32> -> vector<10x16xf32>
    %c0_15 = arith.constant 0 : index
    %c0_16 = arith.constant 0 : index
    %c0_17 = arith.constant 0 : index
    %16 = vector.load %arg8[%c0_15, %c0_16, %c0_17] : memref<1x1x16xf32, #tpu.memory_space<vmem>>, vector<1x1x16xf32>
    %17 = vector.shape_cast %16 : vector<1x1x16xf32> to vector<1x16xf32>
    %18 = vector.broadcast %17 : vector<1x16xf32> to vector<10x16xf32>
    %19 = arith.addf %15, %18 : vector<10x16xf32>
    %c0_18 = arith.constant 0 : index
    %c0_19 = arith.constant 0 : index
    %c0_20 = arith.constant 0 : index
    %20 = vector.load %arg6[%c0_18, %c0_19, %c0_20] : memref<1x32x16xbf16, #tpu.memory_space<vmem>>, vector<1x32x16xbf16>
    %21 = vector.shape_cast %20 : vector<1x32x16xbf16> to vector<32x16xbf16>
    %cst_21 = arith.constant dense<0.000000e+00> : vector<10x16xf32>
    %22 = tpu.matmul %5, %21, %cst_21 {dimension_numbers = #tpu.dot_dimension_numbers<[1], [0], [0], [1], [0, 0, 1, 1], [], []>} : vector<10x32xbf16>, vector<32x16xbf16>, vector<10x16xf32> -> vector<10x16xf32>
    %c0_22 = arith.constant 0 : index
    %c0_23 = arith.constant 0 : index
    %c0_24 = arith.constant 0 : index
    %23 = vector.load %arg9[%c0_22, %c0_23, %c0_24] : memref<1x1x16xf32, #tpu.memory_space<vmem>>, vector<1x1x16xf32>
    %24 = vector.shape_cast %23 : vector<1x1x16xf32> to vector<1x16xf32>
    %25 = vector.broadcast %24 : vector<1x16xf32> to vector<10x16xf32>
    %26 = arith.addf %22, %25 : vector<10x16xf32>
    %27 = arith.truncf %12 : vector<8x16xf32> to vector<8x16xbf16>
    %28 = arith.truncf %19 : vector<10x16xf32> to vector<10x16xbf16>
    %cst_25 = arith.constant dense<0.000000e+00> : vector<8x10xf32>
    %29 = tpu.matmul %27, %28, %cst_25 {dimension_numbers = #tpu.dot_dimension_numbers<[1], [1], [0], [0], [0, 0, 1, 0], [], []>} : vector<8x16xbf16>, vector<10x16xbf16>, vector<8x10xf32> -> vector<8x10xf32>
    %c0_26 = arith.constant 0 : index
    %c0_27 = arith.constant 0 : index
    %c0_28 = arith.constant 0 : index
    %30 = vector.load %arg10[%c0_26, %c0_27, %c0_28] : memref<1x1x10xf32, #tpu.memory_space<vmem>>, vector<1x1x10xf32>
    %31 = vector.shape_cast %30 : vector<1x1x10xf32> to vector<1x10xf32>
    %32 = vector.broadcast %31 : vector<1x10xf32> to vector<8x10xf32>
    %33 = arith.addf %29, %32 : vector<8x10xf32>
    %cst_29 = arith.constant dense<0xFF800000> : vector<8xf32>
    %34 = vector.multi_reduction <maximumf>, %33, %cst_29 [1] : vector<8x10xf32> to vector<8xf32>
    %35 = vector.shape_cast %34 : vector<8xf32> to vector<8x1xf32>
    %36 = vector.broadcast %35 : vector<8x1xf32> to vector<8x10xf32>
    %37 = arith.subf %33, %36 : vector<8x10xf32>
    %38 = math.exp %37 : vector<8x10xf32>
    %cst_30 = arith.constant dense<0.000000e+00> : vector<8xf32>
    %39 = vector.multi_reduction <add>, %38, %cst_30 [1] : vector<8x10xf32> to vector<8xf32>
    %40 = vector.shape_cast %39 : vector<8xf32> to vector<8x1xf32>
    %41 = tpu.reciprocal %40 {approx = true} : vector<8x1xf32> -> vector<8x1xf32>
    %42 = vector.broadcast %41 : vector<8x1xf32> to vector<8x10xf32>
    %43 = arith.mulf %38, %42 : vector<8x10xf32>
    %44 = arith.truncf %43 : vector<8x10xf32> to vector<8x10xbf16>
    %45 = arith.truncf %26 : vector<10x16xf32> to vector<10x16xbf16>
    %cst_31 = arith.constant dense<0.000000e+00> : vector<8x16xf32>
    %46 = tpu.matmul %44, %45, %cst_31 {dimension_numbers = #tpu.dot_dimension_numbers<[1], [0], [0], [1], [0, 0, 1, 1], [], []>} : vector<8x10xbf16>, vector<10x16xbf16>, vector<8x16xf32> -> vector<8x16xf32>
    %c0_32 = arith.constant 0 : index
    %c0_33 = arith.constant 0 : index
    %c0_34 = arith.constant 0 : index
    %47 = vector.load %arg11[%c0_32, %c0_33, %c0_34] : memref<1x8x16xf32, #tpu.memory_space<vmem>>, vector<1x8x16xf32>
    %48 = vector.shape_cast %47 : vector<1x8x16xf32> to vector<8x16xf32>
    %49 = vector.shape_cast %46 : vector<8x16xf32> to vector<1x8x16xf32>
    tpu.vector_store %arg11[%c0_32, %c0_33, %c0_34], %49 {strides = array<i32>} : memref<1x8x16xf32, #tpu.memory_space<vmem>>, vector<1x8x16xf32>,
    return
  }
  func.func @transform_0(%arg0: i32, %arg1: i32) -> (i32, i32, i32) {
    %c0_i32 = arith.constant 0 : i32
    %c0_i32_0 = arith.constant 0 : i32
    %c0_i32_1 = arith.constant 0 : i32
    return %arg0, %c0_i32, %c0_i32_0 : i32, i32, i32
  }
  func.func @transform_1(%arg0: i32, %arg1: i32) -> (i32, i32, i32) {
    %c0_i32 = arith.constant 0 : i32
    %c0_i32_0 = arith.constant 0 : i32
    %c0_i32_1 = arith.constant 0 : i32
    return %arg0, %c0_i32, %c0_i32_0 : i32, i32, i32
  }
  func.func @transform_2(%arg0: i32, %arg1: i32) -> (i32, i32, i32) {
    %c0_i32 = arith.constant 0 : i32
    %c0_i32_0 = arith.constant 0 : i32
    %c0_i32_1 = arith.constant 0 : i32
    return %arg1, %c0_i32, %c0_i32_0 : i32, i32, i32
  }
  func.func @transform_3(%arg0: i32, %arg1: i32) -> (i32, i32, i32) {
    %c0_i32 = arith.constant 0 : i32
    %c0_i32_0 = arith.constant 0 : i32
    %c0_i32_1 = arith.constant 0 : i32
    return %arg1, %c0_i32, %c0_i32_0 : i32, i32, i32
  }
  func.func @transform_4(%arg0: i32, %arg1: i32) -> (i32, i32, i32) {
    %c0_i32 = arith.constant 0 : i32
    %c0_i32_0 = arith.constant 0 : i32
    %c0_i32_1 = arith.constant 0 : i32
    return %arg1, %c0_i32, %c0_i32_0 : i32, i32, i32
  }
  func.func @transform_5(%arg0: i32, %arg1: i32) -> (i32, i32, i32) {
    %c0_i32 = arith.constant 0 : i32
    %c0_i32_0 = arith.constant 0 : i32
    %c0_i32_1 = arith.constant 0 : i32
    return %arg1, %c0_i32, %c0_i32_0 : i32, i32, i32
  }
  func.func @transform_6(%arg0: i32, %arg1: i32) -> (i32, i32, i32) {
    %c0_i32 = arith.constant 0 : i32
    %c0_i32_0 = arith.constant 0 : i32
    %c0_i32_1 = arith.constant 0 : i32
    return %arg1, %c0_i32, %c0_i32_0 : i32, i32, i32
  }
  func.func @transform_7(%arg0: i32, %arg1: i32) -> (i32, i32, i32) {
    %c0_i32 = arith.constant 0 : i32
    %c0_i32_0 = arith.constant 0 : i32
    %c0_i32_1 = arith.constant 0 : i32
    return %arg1, %c0_i32, %c0_i32_0 : i32, i32, i32
  }
  func.func @transform_8(%arg0: i32, %arg1: i32) -> (i32, i32, i32) {
    %c0_i32 = arith.constant 0 : i32
    %c0_i32_0 = arith.constant 0 : i32
    %c0_i32_1 = arith.constant 0 : i32
    return %arg0, %c0_i32, %c0_i32_0 : i32, i32, i32
  }
  func.func @transform_9(%arg0: i32, %arg1: i32) -> (i32, i32, i32) {
    %c0_i32 = arith.constant 0 : i32
    %c0_i32_0 = arith.constant 0 : i32
    return %arg1, %arg0, %c0_i32 : i32, i32, i32
  }
}

module attributes {stable_mosaic.version = 11 : i64} {
  func.func @_logp_kernel(%arg0: i32, %arg1: i32, %arg2: memref<16x32xf32, #tpu.memory_space<vmem>>, %arg3: memref<32x32xbf16, #tpu.memory_space<vmem>>, %arg4: memref<16x1xf32, #tpu.memory_space<vmem>>, %arg5: memref<16x32xf32, #tpu.memory_space<vmem>>) attributes {dimension_semantics = [#tpu.dimension_semantics<parallel>, #tpu.dimension_semantics<parallel>], iteration_bounds = array<i64: 1, 1>, scalar_prefetch = 0 : i64, scratch_operands = 0 : i64, tpu.core_type = #tpu.core_type<tc>, window_params = [{transform_indices = @transform_0, window_bounds = array<i64: 16, 32>}, {transform_indices = @transform_1, window_bounds = array<i64: 32, 32>}, {transform_indices = @transform_2, window_bounds = array<i64: 16, 1>}, {transform_indices = @transform_3, window_bounds = array<i64: 16, 32>}]} {
    %c0 = arith.constant 0 : index
    %c0_0 = arith.constant 0 : index
    %0 = vector.load %arg2[%c0, %c0_0] : memref<16x32xf32, #tpu.memory_space<vmem>>, vector<16x32xf32>
    %1 = arith.truncf %0 : vector<16x32xf32> to vector<16x32xbf16>
    %c0_1 = arith.constant 0 : index
    %c0_2 = arith.constant 0 : index
    %2 = vector.load %arg3[%c0_1, %c0_2] : memref<32x32xbf16, #tpu.memory_space<vmem>>, vector<32x32xbf16>
    %cst = arith.constant dense<0.000000e+00> : vector<16x32xf32>
    %3 = tpu.matmul %1, %2, %cst {dimension_numbers = #tpu.dot_dimension_numbers<[1], [1], [0], [0], [0, 0, 1, 0], [], []>} : vector<16x32xbf16>, vector<32x32xbf16>, vector<16x32xf32> -> vector<16x32xf32>
    %c0_3 = arith.constant 0 : index
    %c0_4 = arith.constant 0 : index
    %4 = vector.load %arg4[%c0_3, %c0_4] : memref<16x1xf32, #tpu.memory_space<vmem>>, vector<16x1xf32>
    %5 = vector.broadcast %4 : vector<16x1xf32> to vector<16x32xf32>
    %6 = arith.subf %3, %5 : vector<16x32xf32>
    %c0_5 = arith.constant 0 : index
    %c0_6 = arith.constant 0 : index
    %7 = vector.load %arg5[%c0_5, %c0_6] : memref<16x32xf32, #tpu.memory_space<vmem>>, vector<16x32xf32>
    tpu.vector_store %arg5[%c0_5, %c0_6], %6 {strides = array<i32>} : memref<16x32xf32, #tpu.memory_space<vmem>>, vector<16x32xf32>,
    return
  }
  func.func @transform_0(%arg0: i32, %arg1: i32) -> (i32, i32) {
    %c0_i32 = arith.constant 0 : i32
    %c0_i32_0 = arith.constant 0 : i32
    return %arg0, %c0_i32 : i32, i32
  }
  func.func @transform_1(%arg0: i32, %arg1: i32) -> (i32, i32) {
    %c0_i32 = arith.constant 0 : i32
    %c0_i32_0 = arith.constant 0 : i32
    return %arg1, %c0_i32 : i32, i32
  }
  func.func @transform_2(%arg0: i32, %arg1: i32) -> (i32, i32) {
    %c0_i32 = arith.constant 0 : i32
    %c0_i32_0 = arith.constant 0 : i32
    return %arg0, %c0_i32 : i32, i32
  }
  func.func @transform_3(%arg0: i32, %arg1: i32) -> (i32, i32) {
    %c0_i32 = arith.constant 0 : i32
    return %arg0, %arg1 : i32, i32
  }
}

module attributes {stable_mosaic.version = 11 : i64} {
  func.func @_lse_kernel(%arg0: i32, %arg1: i32, %arg2: memref<16x32xf32, #tpu.memory_space<vmem>>, %arg3: memref<32x32xbf16, #tpu.memory_space<vmem>>, %arg4: memref<16x1xf32, #tpu.memory_space<vmem>>, %arg5: memref<16x1xf32, #tpu.memory_space<vmem>>, %arg6: memref<16x1xf32, #tpu.memory_space<vmem>>) attributes {dimension_semantics = [#tpu.dimension_semantics<parallel>, #tpu.dimension_semantics<arbitrary>], iteration_bounds = array<i64: 1, 1>, scalar_prefetch = 0 : i64, scratch_operands = 2 : i64, tpu.core_type = #tpu.core_type<tc>, window_params = [{transform_indices = @transform_0, window_bounds = array<i64: 16, 32>}, {transform_indices = @transform_1, window_bounds = array<i64: 32, 32>}, {transform_indices = @transform_2, window_bounds = array<i64: 16, 1>}]} {
    %c0_i32 = arith.constant 0 : i32
    %0 = arith.cmpi eq, %arg1, %c0_i32 : i32
    %1 = arith.extui %0 : i1 to i32
    %c0_i32_0 = arith.constant 0 : i32
    %2 = arith.cmpi ne, %1, %c0_i32_0 : i32
    scf.if %2 {
      %cst_18 = arith.constant -1.000000e+30 : f32
      %27 = vector.broadcast %cst_18 : f32 to vector<16x1xf32>
      %c0_19 = arith.constant 0 : index
      %c0_20 = arith.constant 0 : index
      %28 = vector.load %arg5[%c0_19, %c0_20] : memref<16x1xf32, #tpu.memory_space<vmem>>, vector<16x1xf32>
      tpu.vector_store %arg5[%c0_19, %c0_20], %27 {strides = array<i32>} : memref<16x1xf32, #tpu.memory_space<vmem>>, vector<16x1xf32>,
      %cst_21 = arith.constant 0.000000e+00 : f32
      %29 = vector.broadcast %cst_21 : f32 to vector<16x1xf32>
      %c0_22 = arith.constant 0 : index
      %c0_23 = arith.constant 0 : index
      %30 = vector.load %arg6[%c0_22, %c0_23] : memref<16x1xf32, #tpu.memory_space<vmem>>, vector<16x1xf32>
      tpu.vector_store %arg6[%c0_22, %c0_23], %29 {strides = array<i32>} : memref<16x1xf32, #tpu.memory_space<vmem>>, vector<16x1xf32>,
    } else {
    }
    %c0 = arith.constant 0 : index
    %c0_1 = arith.constant 0 : index
    %3 = vector.load %arg2[%c0, %c0_1] : memref<16x32xf32, #tpu.memory_space<vmem>>, vector<16x32xf32>
    %4 = arith.truncf %3 : vector<16x32xf32> to vector<16x32xbf16>
    %c0_2 = arith.constant 0 : index
    %c0_3 = arith.constant 0 : index
    %5 = vector.load %arg3[%c0_2, %c0_3] : memref<32x32xbf16, #tpu.memory_space<vmem>>, vector<32x32xbf16>
    %cst = arith.constant dense<0.000000e+00> : vector<16x32xf32>
    %6 = tpu.matmul %4, %5, %cst {dimension_numbers = #tpu.dot_dimension_numbers<[1], [1], [0], [0], [0, 0, 1, 0], [], []>} : vector<16x32xbf16>, vector<32x32xbf16>, vector<16x32xf32> -> vector<16x32xf32>
    %c0_4 = arith.constant 0 : index
    %c0_5 = arith.constant 0 : index
    %7 = vector.load %arg5[%c0_4, %c0_5] : memref<16x1xf32, #tpu.memory_space<vmem>>, vector<16x1xf32>
    %cst_6 = arith.constant dense<0xFF800000> : vector<16xf32>
    %8 = vector.multi_reduction <maximumf>, %6, %cst_6 [1] : vector<16x32xf32> to vector<16xf32>
    %9 = vector.shape_cast %8 : vector<16xf32> to vector<16x1xf32>
    %10 = arith.maximumf %7, %9 : vector<16x1xf32>
    %c0_7 = arith.constant 0 : index
    %c0_8 = arith.constant 0 : index
    %11 = vector.load %arg6[%c0_7, %c0_8] : memref<16x1xf32, #tpu.memory_space<vmem>>, vector<16x1xf32>
    %c0_9 = arith.constant 0 : index
    %c0_10 = arith.constant 0 : index
    %12 = vector.load %arg5[%c0_9, %c0_10] : memref<16x1xf32, #tpu.memory_space<vmem>>, vector<16x1xf32>
    %13 = arith.subf %12, %10 : vector<16x1xf32>
    %14 = math.exp %13 : vector<16x1xf32>
    %15 = arith.mulf %11, %14 : vector<16x1xf32>
    %16 = vector.broadcast %10 : vector<16x1xf32> to vector<16x32xf32>
    %17 = arith.subf %6, %16 : vector<16x32xf32>
    %18 = math.exp %17 : vector<16x32xf32>
    %cst_11 = arith.constant dense<0.000000e+00> : vector<16xf32>
    %19 = vector.multi_reduction <add>, %18, %cst_11 [1] : vector<16x32xf32> to vector<16xf32>
    %20 = vector.shape_cast %19 : vector<16xf32> to vector<16x1xf32>
    %21 = arith.addf %15, %20 : vector<16x1xf32>
    %c0_12 = arith.constant 0 : index
    %c0_13 = arith.constant 0 : index
    %22 = vector.load %arg6[%c0_12, %c0_13] : memref<16x1xf32, #tpu.memory_space<vmem>>, vector<16x1xf32>
    tpu.vector_store %arg6[%c0_12, %c0_13], %21 {strides = array<i32>} : memref<16x1xf32, #tpu.memory_space<vmem>>, vector<16x1xf32>,
    %c0_14 = arith.constant 0 : index
    %c0_15 = arith.constant 0 : index
    %23 = vector.load %arg5[%c0_14, %c0_15] : memref<16x1xf32, #tpu.memory_space<vmem>>, vector<16x1xf32>
    tpu.vector_store %arg5[%c0_14, %c0_15], %10 {strides = array<i32>} : memref<16x1xf32, #tpu.memory_space<vmem>>, vector<16x1xf32>,
    %c0_i32_16 = arith.constant 0 : i32
    %24 = arith.cmpi eq, %arg1, %c0_i32_16 : i32
    %25 = arith.extui %24 : i1 to i32
    %c0_i32_17 = arith.constant 0 : i32
    %26 = arith.cmpi ne, %25, %c0_i32_17 : i32
    scf.if %26 {
      %c0_18 = arith.constant 0 : index
      %c0_19 = arith.constant 0 : index
      %27 = vector.load %arg5[%c0_18, %c0_19] : memref<16x1xf32, #tpu.memory_space<vmem>>, vector<16x1xf32>
      %c0_20 = arith.constant 0 : index
      %c0_21 = arith.constant 0 : index
      %28 = vector.load %arg6[%c0_20, %c0_21] : memref<16x1xf32, #tpu.memory_space<vmem>>, vector<16x1xf32>
      %29 = math.log %28 : vector<16x1xf32>
      %30 = arith.addf %27, %29 : vector<16x1xf32>
      %c0_22 = arith.constant 0 : index
      %c0_23 = arith.constant 0 : index
      %31 = vector.load %arg4[%c0_22, %c0_23] : memref<16x1xf32, #tpu.memory_space<vmem>>, vector<16x1xf32>
      tpu.vector_store %arg4[%c0_22, %c0_23], %30 {strides = array<i32>} : memref<16x1xf32, #tpu.memory_space<vmem>>, vector<16x1xf32>,
    } else {
    }
    return
  }
  func.func @transform_0(%arg0: i32, %arg1: i32) -> (i32, i32) {
    %c0_i32 = arith.constant 0 : i32
    %c0_i32_0 = arith.constant 0 : i32
    return %arg0, %c0_i32 : i32, i32
  }
  func.func @transform_1(%arg0: i32, %arg1: i32) -> (i32, i32) {
    %c0_i32 = arith.constant 0 : i32
    %c0_i32_0 = arith.constant 0 : i32
    return %arg1, %c0_i32 : i32, i32
  }
  func.func @transform_2(%arg0: i32, %arg1: i32) -> (i32, i32) {
    %c0_i32 = arith.constant 0 : i32
    %c0_i32_0 = arith.constant 0 : i32
    return %arg0, %c0_i32 : i32, i32
  }
}

</mosaic_0001>

<llo_original>
// kernel: tpu_custom_call.1
$region0: #{tpu_custom_call.1}
  #allocation0 [shape = 'u32[]', space=smem, size = 0x4, offset = 0x4, fixed_abs, tag = 'smem constant byte address 0x4 - core index']
  #allocation1 [shape = 'u32[144,128]{1,0:T(1,128)}', space=vmem, size = 0x12000, scoped, tag = 'internal scratch']
  %s0 = inlined_call_operand.hbm [shape: f32[16,128], index: 0, kind: input, shape index: {}]
  %s1 = inlined_call_operand.hbm [shape: f32[8,128], index: 1, kind: input, shape index: {}]
  %s2 = inlined_call_operand.hbm [shape: f32[16,128], index: 2, kind: output, shape index: {}]
  %s3 = sld [smem:[#allocation0]]
  $region49: #{tpu_custom_call.1} parent=0
    _
  %s5 = ssub.s32 1, %s3
  %s6 = scalar_select 0, %s5, %s3
  $region1: #{tpu_custom_call.1} parent=0
    #allocation2 [shape = 'u8[8192]{0}', space=vmem, size = 0x2000, scoped, tag = 'input window, operand 0']
    #allocation3 [shape = 's32[2]{0}', space=sflag, size = 0x8, scoped, tag = 'scoped memory for tpu_custom_call.1']
    #allocation4 [shape = 's32[2]{0}', space=sflag, size = 0x8, scoped, tag = 'scoped memory for tpu_custom_call.1']
    #allocation5 [shape = 'u8[4096]{0}', space=vmem, size = 0x1000, scoped, tag = 'input window, operand 1, single buffered']
    #allocation6 [shape = 's32[1]{0}', space=sflag, size = 0x4, scoped, tag = 'scoped memory for tpu_custom_call.1']
    #allocation7 [shape = 'u8[8192]{0}', space=vmem, size = 0x2000, scoped, tag = 'output window, operand 0']
    %7 = vsyncpa [#allocation3], 0
    %s8 = scalar_lea.sflag [#allocation3], 1
    %9 = vsyncpa %s8, 0
    %10 = vsyncpa [#allocation6], 0
    %11 = vsyncpa [#allocation4], 0
    %s12 = scalar_lea.sflag [#allocation4], 1
    %13 = vsyncpa %s12, 0
    loop: start=0, step=1, limit=4
    $region2: #{tpu_custom_call.1} parent=1 // loop_pre_header
      _
    $region3: #{tpu_custom_call.1} parent=1 // loop_header
      %s15 = sphi 0, %s19
      %p16 = scmp.ge.s32.totalorder %s15, 4
      %s25 = sphi 0, %s27
      %s28 = sphi 0, %s25
      %s29 = sphi 0, %s28
      %s45 = sphi 0, %s29
      %s49 = sphi 0, %s49
      %s51 = sphi 0, %s49
      %s52 = sphi 0, %s51
      %s66 = sphi 0, %s52
      %s72 = sphi 0, %s74
      %s75 = sphi 0, %s72
      %s76 = sphi 0, %s75
      %s92 = sphi 0, %s76
    $region4: #{tpu_custom_call.1} parent=1 // loop_header_branch
      %18 = sbr.rel (%p16) target = $region8
    $region5: #{tpu_custom_call.1} parent=1 // loop_body
      %s20 = ssub.s32 %s15, 1
      %s21 = ssub.s32 %s15, 2
      %s22 = sadd.s32 %s15, 1
      %s23 = ssub.s32 %s15, %s22
      %p24 = scmp.eq.s32.totalorder %s23, 0
      %s26 = sadd.s32 %s25, 1
      %s27 = scalar_select %p24, %s25, %s26
      %p30 = pneg %p24
      %p31 = scmp.eq.s32.totalorder %s15, 1
      %p32 = por %p30, %p31
      %p33 = scmp.ne.s32.totalorder %s25, %s28
      %p34 = scmp.eq.s32.totalorder %s15, 0
      %p35 = por %p33, %p34
      %p36 = scmp.ne.s32.totalorder %s25, %s28
      %p37 = scmp.eq.s32.totalorder %s20, 1
      %p38 = por %p36, %p37
      %p39 = scmp.ne.s32.totalorder %s28, %s29
      %p40 = scmp.eq.s32.totalorder %s20, 0
      %p41 = por %p39, %p40
      %p42 = scmp.ne.s32.totalorder %s28, %s29
      %p43 = scmp.eq.s32.totalorder %s21, 1
      %p44 = por %p42, %p43
      %p46 = scmp.ne.s32.totalorder %s29, %s45
      %p47 = scmp.eq.s32.totalorder %s21, 0
      %p48 = por %p46, %p47
      %s50 = sadd.s32 %s49, 1
      %p53 = scmp.eq.s32.totalorder %s15, 1
      %p54 = scmp.ne.s32.totalorder %s49, %s51
      %p55 = scmp.eq.s32.totalorder %s15, 0
      %p56 = por %p54, %p55
      %p57 = scmp.ne.s32.totalorder %s49, %s51
      %p58 = scmp.eq.s32.totalorder %s20, 1
      %p59 = por %p57, %p58
      %p60 = scmp.ne.s32.totalorder %s51, %s52
      %p61 = scmp.eq.s32.totalorder %s20, 0
      %p62 = por %p60, %p61
      %p63 = scmp.ne.s32.totalorder %s51, %s52
      %p64 = scmp.eq.s32.totalorder %s21, 1
      %p65 = por %p63, %p64
      %p67 = scmp.ne.s32.totalorder %s52, %s66
      %p68 = scmp.eq.s32.totalorder %s21, 0
      %p69 = por %p67, %p68
      %s70 = ssub.s32 %s15, %s22
      %p71 = scmp.eq.s32.totalorder %s70, 0
      %s73 = sadd.s32 %s72, 1
      %s74 = scalar_select %p71, %s72, %s73
      %p77 = pneg %p71
      %p78 = scmp.eq.s32.totalorder %s15, 1
      %p79 = por %p77, %p78
      %p80 = scmp.ne.s32.totalorder %s72, %s75
      %p81 = scmp.eq.s32.totalorder %s15, 0
      %p82 = por %p80, %p81
      %p83 = scmp.ne.s32.totalorder %s72, %s75
      %p84 = scmp.eq.s32.totalorder %s20, 1
      %p85 = por %p83, %p84
      %p86 = scmp.ne.s32.totalorder %s75, %s76
      %p87 = scmp.eq.s32.totalorder %s20, 0
      %p88 = por %p86, %p87
      %p89 = scmp.ne.s32.totalorder %s75, %s76
      %p90 = scmp.eq.s32.totalorder %s21, 1
      %p91 = por %p89, %p90
      %p93 = scmp.ne.s32.totalorder %s76, %s92
      %p94 = scmp.eq.s32.totalorder %s21, 0
      %p95 = por %p93, %p94
      %p96 = scmp.le.s32.totalorder 1, %s15
      %p97 = scmp.lt.s32.totalorder %s15, 3
      %p98 = pnand %p96, %p97
      %p99 = pneg %p98
      // Predicated region
      $region9: #{tpu_custom_call.1} parent=5 // pred_check
        _
      $region10: #{tpu_custom_call.1} parent=5 // pred_check_branch
        %101 = sbr.rel (%p98) target = $region12
      $region11: #{tpu_custom_call.1} parent=5 // pred_region
        %s102 = ssub.s32 %s15, 1
        // Predicated region
        $region13: #{tpu_custom_call.1} parent=11 // pred_check
          %p103 = pneg %p62
        $region14: #{tpu_custom_call.1} parent=11 // pred_check_branch
          %105 = sbr.rel (%p103) target = $region16
        $region15: #{tpu_custom_call.1} parent=11 // pred_region
          %s107 = ssub.s32 128, 128
          %108 = vsyncadd [#allocation6], %s107
          %s110 = sshll.u32 [#allocation5], 4
          %s111 = int_to_ptr.vmem [resolvable:$true] %s110
          %113 = dma.hbm_to_vmem [thread:$0]  %s1, 128, %s111, [#allocation6]
        $region16: #{tpu_custom_call.1} parent=11 // pred_fallthru
          _
      $region12: #{tpu_custom_call.1} parent=5 // pred_fallthru
        _
      %p114 = scmp.lt.s32.totalorder %s15, 2
      // Predicated region
      $region17: #{tpu_custom_call.1} parent=5 // pred_check
        %p115 = pneg %p114
      $region18: #{tpu_custom_call.1} parent=5 // pred_check_branch
        %117 = sbr.rel (%p115) target = $region20
      $region19: #{tpu_custom_call.1} parent=5 // pred_region
        // Predicated region
        $region21: #{tpu_custom_call.1} parent=19 // pred_check
          %p118 = pneg %p35
        $region22: #{tpu_custom_call.1} parent=19 // pred_check_branch
          %120 = sbr.rel (%p118) target = $region24
        $region23: #{tpu_custom_call.1} parent=19 // pred_region
          %s121 = sand.u32 %s25, 1
          %s122 = scalar_lea.sflag [#allocation3], %s121
          %s123 = sand.u32 %s25, 1
          %s124 = smul.addr %s123, 8
          %s125 = scalar_lea.vmem [#allocation2], %s124
          %s127 = ssub.s32 128, 128
          %128 = vsyncadd %s122, %s127
          %s129 = smul.addr %s15, 128
          %s130 = scalar_lea.hbm %s0, %s129
          %s132 = sshll.u32 %s125, 4
          %s133 = int_to_ptr.vmem [resolvable:$true] %s132
          %135 = dma.hbm_to_vmem [thread:$0]  %s130, 128, %s133, %s122
        $region24: #{tpu_custom_call.1} parent=19 // pred_fallthru
          _
      $region20: #{tpu_custom_call.1} parent=5 // pred_fallthru
        _
      %p136 = scmp.le.s32.totalorder 1, %s15
      %p137 = scmp.lt.s32.totalorder %s15, 3
      %p138 = pnand %p136, %p137
      %p139 = pneg %p138
      // Predicated region
      $region25: #{tpu_custom_call.1} parent=5 // pred_check
        _
      $region26: #{tpu_custom_call.1} parent=5 // pred_check_branch
        %141 = sbr.rel (%p138) target = $region28
      $region27: #{tpu_custom_call.1} parent=5 // pred_region
        %s142 = ssub.s32 %s15, 1
        %s143 = sand.u32 %s28, 1
        %s144 = scalar_lea.sflag [#allocation3], %s143
        %s145 = sand.u32 %s28, 1
        %s146 = smul.addr %s145, 8
        %s147 = scalar_lea.vmem [#allocation2], %s146
        // Predicated region
        $region29: #{tpu_custom_call.1} parent=27 // pred_check
          %p148 = pneg %p41
        $region30: #{tpu_custom_call.1} parent=27 // pred_check_branch
          %150 = sbr.rel (%p148) target = $region32
        $region31: #{tpu_custom_call.1} parent=27 // pred_region
          %151 = dma.done %s144, 128
        $region32: #{tpu_custom_call.1} parent=27 // pred_fallthru
          _
        // Predicated region
        $region33: #{tpu_custom_call.1} parent=27 // pred_check
          %p152 = pneg %p62
        $region34: #{tpu_custom_call.1} parent=27 // pred_check_branch
          %154 = sbr.rel (%p152) target = $region36
        $region35: #{tpu_custom_call.1} parent=27 // pred_region
          %155 = dma.done [#allocation6], 128
        $region36: #{tpu_custom_call.1} parent=27 // pred_fallthru
          _
        %s156 = sand.u32 %s28, 1
        %s157 = scalar_lea.sflag [#allocation3], %s156
        %s158 = sand.u32 %s28, 1
        %s159 = smul.addr %s158, 8
        %s160 = scalar_lea.vmem [#allocation2], %s159
        %p161 = pneg %p41
        %p162 = pneg %p38
        %p163 = pneg %p62
        %p164 = pneg %p59
        %p165 = pneg %p88
        %p166 = pneg %p85
        %s167 = sand.u32 %s75, 1
        %s168 = scalar_lea.sflag [#allocation4], %s167
        %s169 = sand.u32 %s75, 1
        %s170 = smul.addr %s169, 8
        %s171 = scalar_lea.vmem [#allocation7], %s170
        %v172 = vld [vmem:[%s147] sm:$0xff]
        %v173 = vld [vmem:[#allocation5] sm:$0xff]
        %v174 = vadd.f32 %v172, %v173
        %175 = vst [vmem:[%s171] sm:$0xff] %v174
        %s176 = sand.u32 %s75, 1
        %s177 = scalar_lea.sflag [#allocation4], %s176
        %s178 = sand.u32 %s75, 1
        %s179 = smul.addr %s178, 8
        %s180 = scalar_lea.vmem [#allocation7], %s179
        // Predicated region
        $region37: #{tpu_custom_call.1} parent=27 // pred_check
          %p181 = pneg %p85
        $region38: #{tpu_custom_call.1} parent=27 // pred_check_branch
          %183 = sbr.rel (%p181) target = $region40
        $region39: #{tpu_custom_call.1} parent=27 // pred_region
          %s185 = ssub.s32 128, 128
          %186 = vsyncadd %s177, %s185
          %s187 = smul.addr %s20, 128
          %s188 = scalar_lea.hbm %s2, %s187
          %s190 = sshll.u32 %s180, 4
          %s191 = int_to_ptr.vmem [resolvable:$true] %s190
          %193 = dma.vmem_to_hbm [thread:$0]  %s191, 128, %s188, %s177
        $region40: #{tpu_custom_call.1} parent=27 // pred_fallthru
          _
      $region28: #{tpu_custom_call.1} parent=5 // pred_fallthru
        _
      %p194 = scmp.le.s32.totalorder 2, %s15
      // Predicated region
      $region41: #{tpu_custom_call.1} parent=5 // pred_check
        %p195 = pneg %p194
      $region42: #{tpu_custom_call.1} parent=5 // pred_check_branch
        %197 = sbr.rel (%p195) target = $region44
      $region43: #{tpu_custom_call.1} parent=5 // pred_region
        %s198 = ssub.s32 %s15, 2
        // Predicated region
        $region45: #{tpu_custom_call.1} parent=43 // pred_check
          %p199 = pneg %p91
        $region46: #{tpu_custom_call.1} parent=43 // pred_check_branch
          %201 = sbr.rel (%p199) target = $region48
        $region47: #{tpu_custom_call.1} parent=43 // pred_region
          %s202 = sand.u32 %s76, 1
          %s203 = scalar_lea.sflag [#allocation4], %s202
          %s204 = sand.u32 %s76, 1
          %s205 = smul.addr %s204, 8
          %s206 = scalar_lea.vmem [#allocation7], %s205
          %207 = dma.done %s203, 128
        $region48: #{tpu_custom_call.1} parent=43 // pred_fallthru
          _
      $region44: #{tpu_custom_call.1} parent=5 // pred_fallthru
        _
    $region6: #{tpu_custom_call.1} parent=1 // loop_footer
      %s19 = sadd.s32 1, %s15
    $region7: #{tpu_custom_call.1} parent=1 // loop_footer_branch
      %14 = sbr.rel target = $region3
    $region8: #{tpu_custom_call.1} parent=1 // loop_exit
      _
    %208 = vsyncpa [#allocation3], 1
    %s209 = scalar_lea.sflag [#allocation3], 1
    %210 = vsyncpa %s209, 1
    %211 = vsyncpa [#allocation6], 1
    %212 = vsyncpa [#allocation4], 1
    %s213 = scalar_lea.sflag [#allocation4], 1
    %214 = vsyncpa %s213, 1

// kernel: ptsm_decoder_forward.16
$region0: #{ptsm_decoder_forward.16}
  #allocation0 [shape = 'u32[]', space=smem, size = 0x4, offset = 0x4, fixed_abs, tag = 'smem constant byte address 0x4 - core index']
  #allocation1 [shape = 'u32[144,128]{1,0:T(1,128)}', space=vmem, size = 0x12000, scoped, tag = 'internal scratch']
  %s0 = inlined_call_operand.vmem [shape: f32[16,32], index: 0, kind: input, shape index: {}]
  %s1 = inlined_call_operand.vmem [shape: bf16[32,64], index: 1, kind: input, shape index: {}]
  %s2 = inlined_call_operand.vmem [shape: f32[1,64], index: 2, kind: input, shape index: {}]
  %s3 = inlined_call_operand.vmem [shape: bf16[64,32], index: 3, kind: input, shape index: {}]
  %s4 = inlined_call_operand.vmem [shape: f32[1,32], index: 4, kind: input, shape index: {}]
  %s5 = inlined_call_operand.vmem [shape: f32[1,32], index: 5, kind: input, shape index: {}]
  %s6 = inlined_call_operand.vmem [shape: f32[1,32], index: 6, kind: input, shape index: {}]
  %s7 = inlined_call_operand.vmem [shape: f32[16,1], index: 7, kind: input, shape index: {}]
  %s8 = inlined_call_operand.vmem [shape: f32[16,32], index: 8, kind: output, shape index: {}]
  %s9 = sld [smem:[#allocation0]]
  $region42: #{ptsm_decoder_forward.16} parent=0
    _
  %s11 = ssub.s32 1, %s9
  %s12 = scalar_select 0, %s11, %s9
  // Predicated region
  $region2: #{ptsm_decoder_forward.16} parent=0 // pred_check
    _
  $region3: #{ptsm_decoder_forward.16} parent=0 // pred_check_branch
    %14 = sbr.rel (0) target = $region5
  $region4: #{ptsm_decoder_forward.16} parent=0 // pred_region
    _
  $region5: #{ptsm_decoder_forward.16} parent=0 // pred_fallthru
    _
  // Predicated region
  $region6: #{ptsm_decoder_forward.16} parent=0 // pred_check
    _
  $region7: #{ptsm_decoder_forward.16} parent=0 // pred_check_branch
    %16 = sbr.rel (0) target = $region9
  $region8: #{ptsm_decoder_forward.16} parent=0 // pred_region
    _
  $region9: #{ptsm_decoder_forward.16} parent=0 // pred_fallthru
    _
  // Predicated region
  $region10: #{ptsm_decoder_forward.16} parent=0 // pred_check
    _
  $region11: #{ptsm_decoder_forward.16} parent=0 // pred_check_branch
    %18 = sbr.rel (0) target = $region13
  $region12: #{ptsm_decoder_forward.16} parent=0 // pred_region
    _
  $region13: #{ptsm_decoder_forward.16} parent=0 // pred_fallthru
    _
  // Predicated region
  $region14: #{ptsm_decoder_forward.16} parent=0 // pred_check
    _
  $region15: #{ptsm_decoder_forward.16} parent=0 // pred_check_branch
    %20 = sbr.rel (0) target = $region17
  $region16: #{ptsm_decoder_forward.16} parent=0 // pred_region
    _
  $region17: #{ptsm_decoder_forward.16} parent=0 // pred_fallthru
    _
  // Predicated region
  $region18: #{ptsm_decoder_forward.16} parent=0 // pred_check
    _
  $region19: #{ptsm_decoder_forward.16} parent=0 // pred_check_branch
    %22 = sbr.rel (0) target = $region21
  $region20: #{ptsm_decoder_forward.16} parent=0 // pred_region
    _
  $region21: #{ptsm_decoder_forward.16} parent=0 // pred_fallthru
    _
  // Predicated region
  $region22: #{ptsm_decoder_forward.16} parent=0 // pred_check
    _
  $region23: #{ptsm_decoder_forward.16} parent=0 // pred_check_branch
    %24 = sbr.rel (0) target = $region25
  $region24: #{ptsm_decoder_forward.16} parent=0 // pred_region
    _
  $region25: #{ptsm_decoder_forward.16} parent=0 // pred_fallthru
    _
  // Predicated region
  $region26: #{ptsm_decoder_forward.16} parent=0 // pred_check
    _
  $region27: #{ptsm_decoder_forward.16} parent=0 // pred_check_branch
    %26 = sbr.rel (0) target = $region29
  $region28: #{ptsm_decoder_forward.16} parent=0 // pred_region
    _
  $region29: #{ptsm_decoder_forward.16} parent=0 // pred_fallthru
    _
  // Predicated region
  $region30: #{ptsm_decoder_forward.16} parent=0 // pred_check
    _
  $region31: #{ptsm_decoder_forward.16} parent=0 // pred_check_branch
    %28 = sbr.rel (0) target = $region33
  $region32: #{ptsm_decoder_forward.16} parent=0 // pred_region
    _
  $region33: #{ptsm_decoder_forward.16} parent=0 // pred_fallthru
    _
  %v30 = vld [vmem:[%s0] sm:$0xff]
  %v31 = vld [vmem:[%s0 + $0x8] sm:$0xff]
  %v32 = vpack.c.bf16 %v31, %v30
  %v33 = vld [vmem:[%s1] sm:$0xf]
  %v34 = vld [vmem:[%s1 + $0x4] sm:$0xf]
  %v35 = vld [vmem:[%s1 + $0x8] sm:$0xf]
  %v36 = vld [vmem:[%s1 + $0xc] sm:$0xf]
  %v37 = vld [vmem:[%s2] sm:$0x1]
  %v38 = vld [vmem:[%s3] sm:$0xf]
  %v39 = vld [vmem:[%s3 + $0x4] sm:$0xf]
  %v40 = vld [vmem:[%s3 + $0x8] sm:$0xf]
  %v41 = vld [vmem:[%s3 + $0xc] sm:$0xf]
  %v42 = vld [vmem:[%s3 + $0x10] sm:$0xf]
  %v43 = vld [vmem:[%s3 + $0x14] sm:$0xf]
  %v44 = vld [vmem:[%s3 + $0x18] sm:$0xf]
  %v45 = vld [vmem:[%s3 + $0x1c] sm:$0xf]
  %v47 = vlaneseq
  %v48 = vshrl.u32 %v47, 7
  %v49 = vsub.s32 0, %v48
  %v50 = vrot.slane %v37, %v49
  %v56 = vunpack.c.l.b16 %v33
  %v57 = vunpack.c.l.b16 %v34
  %v58 = vunpack.c.l.b16 %v35
  %v59 = vunpack.c.l.b16 %v36
  %v60 = vpack.c.b16 %v57, %v56
  %v61 = vpack.c.b16 %v59, %v58
  %vm64 = vcmask 261120
  %v66 = vsel %vm64, %v32, 0
  %68 = vmatprep.subr.bf16.mxu0 0
  %69 = vmatpush1.bf16.msra.mxu0 %v60
  %70 = vmatprep.subr.bf16.mxu0 0
  %71 = vmatpush1.bf16.msra.mxu0 %v61
  %72 = vmatprep.subr.bf16.mxu0 0
  %73 = vmatpush1.bf16.msra.mxu0 0
  %74 = vmatprep.subr.bf16.mxu0 0
  %75 = vmatpush1.bf16.msra.mxu0 0
  %76 = vmatprep.subr.bf16.mxu0 0
  %77 = vmatpush1.bf16.msra.mxu0 0
  %78 = vmatprep.subr.bf16.mxu0 0
  %79 = vmatpush1.bf16.msra.mxu0 0
  %80 = vmatprep.subr.bf16.mxu0 0
  %81 = vmatpush1.bf16.msra.mxu0 0
  %82 = vmatprep.subr.bf16.mxu0 0
  %83 = vmatpush1.bf16.msra.mxu0 0
  %84 = vmatprep.subr.bf16.mxu0 0
  %85 = vmatpush1.bf16.msra.mxu0 0
  %86 = vmatprep.subr.bf16.mxu0 0
  %87 = vmatpush1.bf16.msra.mxu0 0
  %88 = vmatprep.subr.bf16.mxu0 0
  %89 = vmatpush1.bf16.msra.mxu0 0
  %90 = vmatprep.subr.bf16.mxu0 0
  %91 = vmatpush1.bf16.msra.mxu0 0
  %92 = vmatprep.subr.bf16.mxu0 0
  %93 = vmatpush1.bf16.msra.mxu0 0
  %94 = vmatprep.subr.bf16.mxu0 0
  %95 = vmatpush1.bf16.msra.mxu0 0
  %96 = vmatprep.subr.bf16.mxu0 0
  %97 = vmatpush1.bf16.msra.mxu0 0
  %98 = vmatprep.subr.bf16.mxu0 0
  %99 = vmatpush1.bf16.msra.mxu0 0
  %100 = vmatprep.mubr.bf16.mxu0 0
  %101 = vmatmul.mubr.bf16.gmra.mrb[0].mxu0 %v66
  %v102 = vpop.f32.mrb[0].mxu0
  %v103 = vadd.f32 %v50, %v102
  %v104 = vpop.f32.mrb[0].mxu0
  %v105 = vpop.f32.mrb[0].mxu0
  %v106 = vadd.f32 %v50, %v105
  %v107 = vpop.f32.mrb[0].mxu0
  %108 = vdwg.mxu0
  %v109 = vmax.f32 %v103, 0.0
  %v110 = vmax.f32 %v106, 0.0
  %v111 = vpack.c.bf16 %v110, %v109
  %v120 = vunpack.c.l.b16 %v38
  %v121 = vunpack.c.l.b16 %v39
  %v122 = vunpack.c.l.b16 %v40
  %v123 = vunpack.c.l.b16 %v41
  %v124 = vunpack.c.l.b16 %v42
  %v125 = vunpack.c.l.b16 %v43
  %v126 = vunpack.c.l.b16 %v44
  %v127 = vunpack.c.l.b16 %v45
  %v128 = vpack.c.b16 %v121, %v120
  %v129 = vpack.c.b16 %v123, %v122
  %v130 = vpack.c.b16 %v125, %v124
  %v131 = vpack.c.b16 %v127, %v126
  %vm136 = vcmask 523264
  %v138 = vsel %vm136, %v111, 0
  %140 = vmatprep.subr.bf16.mxu0 0
  %141 = vmatpush1.bf16.msra.mxu0 %v128
  %142 = vmatprep.subr.bf16.mxu0 0
  %143 = vmatpush1.bf16.msra.mxu0 %v129
  %144 = vmatprep.subr.bf16.mxu0 0
  %145 = vmatpush1.bf16.msra.mxu0 %v130
  %146 = vmatprep.subr.bf16.mxu0 0
  %147 = vmatpush1.bf16.msra.mxu0 %v131
  %148 = vmatprep.subr.bf16.mxu0 0
  %149 = vmatpush1.bf16.msra.mxu0 0
  %150 = vmatprep.subr.bf16.mxu0 0
  %151 = vmatpush1.bf16.msra.mxu0 0
  %152 = vmatprep.subr.bf16.mxu0 0
  %153 = vmatpush1.bf16.msra.mxu0 0
  %154 = vmatprep.subr.bf16.mxu0 0
  %155 = vmatpush1.bf16.msra.mxu0 0
  %156 = vmatprep.subr.bf16.mxu0 0
  %157 = vmatpush1.bf16.msra.mxu0 0
  %158 = vmatprep.subr.bf16.mxu0 0
  %159 = vmatpush1.bf16.msra.mxu0 0
  %160 = vmatprep.subr.bf16.mxu0 0
  %161 = vmatpush1.bf16.msra.mxu0 0
  %162 = vmatprep.subr.bf16.mxu0 0
  %163 = vmatpush1.bf16.msra.mxu0 0
  %164 = vmatprep.subr.bf16.mxu0 0
  %165 = vmatpush1.bf16.msra.mxu0 0
  %166 = vmatprep.subr.bf16.mxu0 0
  %167 = vmatpush1.bf16.msra.mxu0 0
  %168 = vmatprep.subr.bf16.mxu0 0
  %169 = vmatpush1.bf16.msra.mxu0 0
  %170 = vmatprep.subr.bf16.mxu0 0
  %171 = vmatpush1.bf16.msra.mxu0 0
  %172 = vmatprep.mubr.bf16.mxu0 0
  %173 = vmatmul.mubr.bf16.gmra.mrb[0].mxu0 %v138
  %v174 = vpop.f32.mrb[0].mxu0
  %v175 = vadd.f32 0.0, %v174
  %v176 = vpop.f32.mrb[0].mxu0
  %v177 = vpop.f32.mrb[0].mxu0
  %v178 = vadd.f32 0.0, %v177
  %v179 = vpop.f32.mrb[0].mxu0
  %180 = vdwg.mxu0
  %v181 = vadd.f32 %v30, %v175
  %v182 = vadd.f32 %v31, %v178
  %v183 = vld [vmem:[%s4] sm:$0x1]
  %v185 = vlaneseq
  %v186 = vshrl.u32 %v185, 7
  %v187 = vsub.s32 0, %v186
  %v188 = vrot.slane %v183, %v187
  %v190 = vadd.f32 %v181, %v188
  %v191 = vadd.f32 %v182, %v188
  %v192 = vsel %vm64, %v190, 0.0
  %193 = vadd.xlane.f32.xlu0 %v192
  %v194 = vpop.xlane.xlu0 %193
  %v195 = vsel %vm64, %v191, 0.0
  %196 = vadd.xlane.f32.xlu0 %v195
  %v197 = vpop.xlane.xlu0 %196
  %v198 = vrcp.pop 32.0
  %v199 = vmul.f32 %v194, %v198
  %v200 = vmul.f32 %v197, %v198
  %v201 = vsub.f32 %v190, %v199
  %v202 = vsub.f32 %v191, %v200
  %v203 = vmul.f32 %v201, %v201
  %v204 = vmul.f32 %v202, %v202
  %v205 = vsel %vm64, %v203, 0.0
  %206 = vadd.xlane.f32.xlu0 %v205
  %v207 = vpop.xlane.xlu0 %206
  %v208 = vsel %vm64, %v204, 0.0
  %209 = vadd.xlane.f32.xlu0 %v208
  %v210 = vpop.xlane.xlu0 %209
  %v211 = vmul.f32 %v207, %v198
  %v212 = vmul.f32 %v210, %v198
  %v213 = vadd.f32 %v211, 1e-05
  %v214 = vadd.f32 %v212, 1e-05
  %v215 = vrsqrt.pop %v213
  %v216 = vrsqrt.pop %v214
  %v217 = vmul.f32 %v201, %v215
  %v218 = vmul.f32 %v202, %v216
  %v219 = vld [vmem:[%s5] sm:$0x1]
  %v221 = vlaneseq
  %v222 = vshrl.u32 %v221, 7
  %v223 = vsub.s32 0, %v222
  %v224 = vrot.slane %v219, %v223
  %v226 = vmul.f32 %v217, %v224
  %v227 = vmul.f32 %v218, %v224
  %v228 = vld [vmem:[%s6] sm:$0x1]
  %v230 = vlaneseq
  %v231 = vshrl.u32 %v230, 7
  %v232 = vsub.s32 0, %v231
  %v233 = vrot.slane %v228, %v232
  %v235 = vadd.f32 %v226, %v233
  %v236 = vadd.f32 %v227, %v233
  %v237 = vld [vmem:[%s7] sm:$0xff]
  %v238 = vld [vmem:[%s7 + $0x8] sm:$0xff]
  %240 = vset.pattern.permute.xlu0 0
  %241 = vperm.xlu0 %240, %v237
  %v242 = vpop.permute.xlu0 %241
  %245 = vset.pattern.permute.xlu0 0
  %246 = vperm.xlu0 %245, %v238
  %v247 = vpop.permute.xlu0 %246
  %v249 = vmul.f32 %v235, %v242
  %v250 = vmul.f32 %v236, %v247
  %251 = vst.msk [vmem:[%s8] sm:$0xff] %vm64, %v249
  %252 = vst.msk [vmem:[%s8 + $0x8] sm:$0xff] %vm64, %v250
  // Predicated region
  $region34: #{ptsm_decoder_forward.16} parent=0 // pred_check
    _
  $region35: #{ptsm_decoder_forward.16} parent=0 // pred_check_branch
    %254 = sbr.rel (0) target = $region37
  $region36: #{ptsm_decoder_forward.16} parent=0 // pred_region
    _
  $region37: #{ptsm_decoder_forward.16} parent=0 // pred_fallthru
    _
  // Predicated region
  $region38: #{ptsm_decoder_forward.16} parent=0 // pred_check
    _
  $region39: #{ptsm_decoder_forward.16} parent=0 // pred_check_branch
    %256 = sbr.rel (0) target = $region41
  $region40: #{ptsm_decoder_forward.16} parent=0 // pred_region
    _
  $region41: #{ptsm_decoder_forward.16} parent=0 // pred_fallthru
    _

// kernel: ptsm_decoder_forward.13
$region0: #{ptsm_decoder_forward.13}
  #allocation0 [shape = 'u32[]', space=smem, size = 0x4, offset = 0x4, fixed_abs, tag = 'smem constant byte address 0x4 - core index']
  #allocation1 [shape = 'u32[144,128]{1,0:T(1,128)}', space=vmem, size = 0x12000, scoped, tag = 'internal scratch']
  %s0 = inlined_call_operand.vmem [shape: f32[2,16,16], index: 0, kind: input, shape index: {}]
  %s1 = inlined_call_operand.vmem [shape: bf16[2,16,32], index: 1, kind: input, shape index: {}]
  %s2 = inlined_call_operand.vmem [shape: f32[1,32], index: 2, kind: input, shape index: {}]
  %s3 = inlined_call_operand.vmem [shape: f32[16,32], index: 3, kind: input, shape index: {}]
  %s4 = inlined_call_operand.vmem [shape: f32[1,32], index: 4, kind: input, shape index: {}]
  %s5 = inlined_call_operand.vmem [shape: f32[1,32], index: 5, kind: input, shape index: {}]
  %s6 = inlined_call_operand.vmem [shape: f32[16,1], index: 6, kind: input, shape index: {}]
  %s7 = inlined_call_operand.vmem [shape: f32[16,32], index: 7, kind: output, shape index: {}]
  %s8 = sld [smem:[#allocation0]]
  $region38: #{ptsm_decoder_forward.13} parent=0
    _
  %s10 = ssub.s32 1, %s8
  %s11 = scalar_select 0, %s10, %s8
  // Predicated region
  $region2: #{ptsm_decoder_forward.13} parent=0 // pred_check
    _
  $region3: #{ptsm_decoder_forward.13} parent=0 // pred_check_branch
    %13 = sbr.rel (0) target = $region5
  $region4: #{ptsm_decoder_forward.13} parent=0 // pred_region
    _
  $region5: #{ptsm_decoder_forward.13} parent=0 // pred_fallthru
    _
  // Predicated region
  $region6: #{ptsm_decoder_forward.13} parent=0 // pred_check
    _
  $region7: #{ptsm_decoder_forward.13} parent=0 // pred_check_branch
    %15 = sbr.rel (0) target = $region9
  $region8: #{ptsm_decoder_forward.13} parent=0 // pred_region
    _
  $region9: #{ptsm_decoder_forward.13} parent=0 // pred_fallthru
    _
  // Predicated region
  $region10: #{ptsm_decoder_forward.13} parent=0 // pred_check
    _
  $region11: #{ptsm_decoder_forward.13} parent=0 // pred_check_branch
    %17 = sbr.rel (0) target = $region13
  $region12: #{ptsm_decoder_forward.13} parent=0 // pred_region
    _
  $region13: #{ptsm_decoder_forward.13} parent=0 // pred_fallthru
    _
  // Predicated region
  $region14: #{ptsm_decoder_forward.13} parent=0 // pred_check
    _
  $region15: #{ptsm_decoder_forward.13} parent=0 // pred_check_branch
    %19 = sbr.rel (0) target = $region17
  $region16: #{ptsm_decoder_forward.13} parent=0 // pred_region
    _
  $region17: #{ptsm_decoder_forward.13} parent=0 // pred_fallthru
    _
  // Predicated region
  $region18: #{ptsm_decoder_forward.13} parent=0 // pred_check
    _
  $region19: #{ptsm_decoder_forward.13} parent=0 // pred_check_branch
    %21 = sbr.rel (0) target = $region21
  $region20: #{ptsm_decoder_forward.13} parent=0 // pred_region
    _
  $region21: #{ptsm_decoder_forward.13} parent=0 // pred_fallthru
    _
  // Predicated region
  $region22: #{ptsm_decoder_forward.13} parent=0 // pred_check
    _
  $region23: #{ptsm_decoder_forward.13} parent=0 // pred_check_branch
    %23 = sbr.rel (0) target = $region25
  $region24: #{ptsm_decoder_forward.13} parent=0 // pred_region
    _
  $region25: #{ptsm_decoder_forward.13} parent=0 // pred_fallthru
    _
  // Predicated region
  $region26: #{ptsm_decoder_forward.13} parent=0 // pred_check
    _
  $region27: #{ptsm_decoder_forward.13} parent=0 // pred_check_branch
    %25 = sbr.rel (0) target = $region29
  $region28: #{ptsm_decoder_forward.13} parent=0 // pred_region
    _
  $region29: #{ptsm_decoder_forward.13} parent=0 // pred_fallthru
    _
  %v27 = vld [vmem:[%s0] sm:$0xff]
  %v28 = vld [vmem:[%s0 + $0x8] sm:$0xff]
  %v29 = vpack.c.bf16 %v28, %v27
  %v30 = vld [vmem:[%s1] sm:$0xf]
  %v31 = vld [vmem:[%s1 + $0x4] sm:$0xf]
  %s32 = scalar_lea.vmem %s0, 16
  %v33 = vld [vmem:[%s32] sm:$0xff]
  %v34 = vld [vmem:[%s32 + $0x8] sm:$0xff]
  %v35 = vpack.c.bf16 %v34, %v33
  %s36 = scalar_lea.vmem %s1, 8
  %v37 = vld [vmem:[%s36] sm:$0xf]
  %v38 = vld [vmem:[%s36 + $0x4] sm:$0xf]
  %v41 = vunpack.c.l.b16 %v37
  %v42 = vunpack.c.l.b16 %v38
  %v43 = vpack.c.b16 %v42, %v41
  %vm45 = vcmask 130048
  %v47 = vsel %vm45, %v35, 0
  %49 = vmatprep.subr.bf16.mxu0 0
  %50 = vmatpush1.bf16.msra.mxu0 %v43
  %51 = vmatprep.subr.bf16.mxu0 0
  %52 = vmatpush1.bf16.msra.mxu0 0
  %53 = vmatprep.subr.bf16.mxu0 0
  %54 = vmatpush1.bf16.msra.mxu0 0
  %55 = vmatprep.subr.bf16.mxu0 0
  %56 = vmatpush1.bf16.msra.mxu0 0
  %57 = vmatprep.subr.bf16.mxu0 0
  %58 = vmatpush1.bf16.msra.mxu0 0
  %59 = vmatprep.subr.bf16.mxu0 0
  %60 = vmatpush1.bf16.msra.mxu0 0
  %61 = vmatprep.subr.bf16.mxu0 0
  %62 = vmatpush1.bf16.msra.mxu0 0
  %63 = vmatprep.subr.bf16.mxu0 0
  %64 = vmatpush1.bf16.msra.mxu0 0
  %65 = vmatprep.subr.bf16.mxu0 0
  %66 = vmatpush1.bf16.msra.mxu0 0
  %67 = vmatprep.subr.bf16.mxu0 0
  %68 = vmatpush1.bf16.msra.mxu0 0
  %69 = vmatprep.subr.bf16.mxu0 0
  %70 = vmatpush1.bf16.msra.mxu0 0
  %71 = vmatprep.subr.bf16.mxu0 0
  %72 = vmatpush1.bf16.msra.mxu0 0
  %73 = vmatprep.subr.bf16.mxu0 0
  %74 = vmatpush1.bf16.msra.mxu0 0
  %75 = vmatprep.subr.bf16.mxu0 0
  %76 = vmatpush1.bf16.msra.mxu0 0
  %77 = vmatprep.subr.bf16.mxu0 0
  %78 = vmatpush1.bf16.msra.mxu0 0
  %79 = vmatprep.subr.bf16.mxu0 0
  %80 = vmatpush1.bf16.msra.mxu0 0
  %81 = vmatprep.mubr.bf16.mxu0 0
  %82 = vmatmul.mubr.bf16.gmra.mrb[0].mxu0 %v47
  %v83 = vpop.f32.mrb[0].mxu0
  %v84 = vadd.f32 0.0, %v83
  %v85 = vpop.f32.mrb[0].mxu0
  %v86 = vpop.f32.mrb[0].mxu0
  %v87 = vadd.f32 0.0, %v86
  %v88 = vpop.f32.mrb[0].mxu0
  %89 = vdwg.mxu0
  %v92 = vunpack.c.l.b16 %v30
  %v93 = vunpack.c.l.b16 %v31
  %v94 = vpack.c.b16 %v93, %v92
  %v97 = vsel %vm45, %v29, 0
  %99 = vmatprep.subr.bf16.mxu0 0
  %100 = vmatpush1.bf16.msra.mxu0 %v94
  %101 = vmatprep.subr.bf16.mxu0 0
  %102 = vmatpush1.bf16.msra.mxu0 0
  %103 = vmatprep.subr.bf16.mxu0 0
  %104 = vmatpush1.bf16.msra.mxu0 0
  %105 = vmatprep.subr.bf16.mxu0 0
  %106 = vmatpush1.bf16.msra.mxu0 0
  %107 = vmatprep.subr.bf16.mxu0 0
  %108 = vmatpush1.bf16.msra.mxu0 0
  %109 = vmatprep.subr.bf16.mxu0 0
  %110 = vmatpush1.bf16.msra.mxu0 0
  %111 = vmatprep.subr.bf16.mxu0 0
  %112 = vmatpush1.bf16.msra.mxu0 0
  %113 = vmatprep.subr.bf16.mxu0 0
  %114 = vmatpush1.bf16.msra.mxu0 0
  %115 = vmatprep.subr.bf16.mxu0 0
  %116 = vmatpush1.bf16.msra.mxu0 0
  %117 = vmatprep.subr.bf16.mxu0 0
  %118 = vmatpush1.bf16.msra.mxu0 0
  %119 = vmatprep.subr.bf16.mxu0 0
  %120 = vmatpush1.bf16.msra.mxu0 0
  %121 = vmatprep.subr.bf16.mxu0 0
  %122 = vmatpush1.bf16.msra.mxu0 0
  %123 = vmatprep.subr.bf16.mxu0 0
  %124 = vmatpush1.bf16.msra.mxu0 0
  %125 = vmatprep.subr.bf16.mxu0 0
  %126 = vmatpush1.bf16.msra.mxu0 0
  %127 = vmatprep.subr.bf16.mxu0 0
  %128 = vmatpush1.bf16.msra.mxu0 0
  %129 = vmatprep.subr.bf16.mxu0 0
  %130 = vmatpush1.bf16.msra.mxu0 0
  %131 = vmatprep.mubr.bf16.mxu0 0
  %132 = vmatmul.mubr.bf16.gmra.mrb[0].mxu0 %v97
  %v133 = vpop.f32.mrb[0].mxu0
  %v134 = vadd.f32 %v84, %v133
  %v135 = vpop.f32.mrb[0].mxu0
  %v136 = vpop.f32.mrb[0].mxu0
  %v137 = vadd.f32 %v87, %v136
  %v138 = vpop.f32.mrb[0].mxu0
  %139 = vdwg.mxu0
  %v140 = vld [vmem:[%s3] sm:$0xff]
  %v141 = vld [vmem:[%s3 + $0x8] sm:$0xff]
  %v142 = vadd.f32 %v140, %v134
  %v143 = vadd.f32 %v141, %v137
  %v144 = vld [vmem:[%s2] sm:$0x1]
  %v146 = vlaneseq
  %v147 = vshrl.u32 %v146, 7
  %v148 = vsub.s32 0, %v147
  %v149 = vrot.slane %v144, %v148
  %v151 = vadd.f32 %v142, %v149
  %v152 = vadd.f32 %v143, %v149
  %vm153 = vcmask 261120
  %v154 = vsel %vm153, %v151, 0.0
  %155 = vadd.xlane.f32.xlu0 %v154
  %v156 = vpop.xlane.xlu0 %155
  %v157 = vsel %vm153, %v152, 0.0
  %158 = vadd.xlane.f32.xlu0 %v157
  %v159 = vpop.xlane.xlu0 %158
  %v160 = vrcp.pop 32.0
  %v161 = vmul.f32 %v156, %v160
  %v162 = vmul.f32 %v159, %v160
  %v163 = vsub.f32 %v151, %v161
  %v164 = vsub.f32 %v152, %v162
  %v165 = vmul.f32 %v163, %v163
  %v166 = vmul.f32 %v164, %v164
  %v167 = vsel %vm153, %v165, 0.0
  %168 = vadd.xlane.f32.xlu0 %v167
  %v169 = vpop.xlane.xlu0 %168
  %v170 = vsel %vm153, %v166, 0.0
  %171 = vadd.xlane.f32.xlu0 %v170
  %v172 = vpop.xlane.xlu0 %171
  %v173 = vmul.f32 %v169, %v160
  %v174 = vmul.f32 %v172, %v160
  %v175 = vadd.f32 %v173, 1e-05
  %v176 = vadd.f32 %v174, 1e-05
  %v177 = vrsqrt.pop %v175
  %v178 = vrsqrt.pop %v176
  %v179 = vmul.f32 %v163, %v177
  %v180 = vmul.f32 %v164, %v178
  %v181 = vld [vmem:[%s4] sm:$0x1]
  %v183 = vlaneseq
  %v184 = vshrl.u32 %v183, 7
  %v185 = vsub.s32 0, %v184
  %v186 = vrot.slane %v181, %v185
  %v188 = vmul.f32 %v179, %v186
  %v189 = vmul.f32 %v180, %v186
  %v190 = vld [vmem:[%s5] sm:$0x1]
  %v192 = vlaneseq
  %v193 = vshrl.u32 %v192, 7
  %v194 = vsub.s32 0, %v193
  %v195 = vrot.slane %v190, %v194
  %v197 = vadd.f32 %v188, %v195
  %v198 = vadd.f32 %v189, %v195
  %v199 = vld [vmem:[%s6] sm:$0xff]
  %v200 = vld [vmem:[%s6 + $0x8] sm:$0xff]
  %202 = vset.pattern.permute.xlu0 0
  %203 = vperm.xlu0 %202, %v199
  %v204 = vpop.permute.xlu0 %203
  %207 = vset.pattern.permute.xlu0 0
  %208 = vperm.xlu0 %207, %v200
  %v209 = vpop.permute.xlu0 %208
  %v211 = vmul.f32 %v197, %v204
  %v212 = vmul.f32 %v198, %v209
  %213 = vst.msk [vmem:[%s7] sm:$0xff] %vm153, %v211
  %214 = vst.msk [vmem:[%s7 + $0x8] sm:$0xff] %vm153, %v212
  // Predicated region
  $region30: #{ptsm_decoder_forward.13} parent=0 // pred_check
    _
  $region31: #{ptsm_decoder_forward.13} parent=0 // pred_check_branch
    %216 = sbr.rel (0) target = $region33
  $region32: #{ptsm_decoder_forward.13} parent=0 // pred_region
    _
  $region33: #{ptsm_decoder_forward.13} parent=0 // pred_fallthru
    _
  // Predicated region
  $region34: #{ptsm_decoder_forward.13} parent=0 // pred_check
    _
  $region35: #{ptsm_decoder_forward.13} parent=0 // pred_check_branch
    %218 = sbr.rel (0) target = $region37
  $region36: #{ptsm_decoder_forward.13} parent=0 // pred_region
    _
  $region37: #{ptsm_decoder_forward.13} parent=0 // pred_fallthru
    _

// kernel: ptsm_decoder_forward.12
$region0: #{ptsm_decoder_forward.12}
  #allocation0 [shape = 'u32[]', space=smem, size = 0x4, offset = 0x4, fixed_abs, tag = 'smem constant byte address 0x4 - core index']
  #allocation1 [shape = 'u32[144,128]{1,0:T(1,128)}', space=vmem, size = 0x12000, scoped, tag = 'internal scratch']
  %s0 = inlined_call_operand.vmem [shape: f32[2,8,32], index: 0, kind: input, shape index: {}]
  %s1 = inlined_call_operand.vmem [shape: bf16[2,32,16], index: 1, kind: input, shape index: {}]
  %s2 = inlined_call_operand.vmem [shape: bf16[2,32,16], index: 2, kind: input, shape index: {}]
  %s3 = inlined_call_operand.vmem [shape: bf16[2,32,16], index: 3, kind: input, shape index: {}]
  %s4 = inlined_call_operand.vmem [shape: f32[2,1,16], index: 4, kind: input, shape index: {}]
  %s5 = inlined_call_operand.vmem [shape: f32[2,1,16], index: 5, kind: input, shape index: {}]
  %s6 = inlined_call_operand.vmem [shape: f32[2,1,16], index: 6, kind: input, shape index: {}]
  %s7 = inlined_call_operand.vmem [shape: f32[2,1,8], index: 7, kind: input, shape index: {}]
  %s8 = inlined_call_operand.vmem [shape: f32[2,16,16], index: 8, kind: output, shape index: {}]
  %s9 = sld [smem:[#allocation0]]
  $region65: #{ptsm_decoder_forward.12} parent=0
    _
  %s11 = ssub.s32 1, %s9
  %s12 = scalar_select 0, %s11, %s9
  loop: start=0, step=1, limit=6
  $region2: #{ptsm_decoder_forward.12} parent=0 // loop_pre_header
    _
  $region3: #{ptsm_decoder_forward.12} parent=0 // loop_header
    %s14 = sphi 0, %s18
    %p15 = scmp.ge.s32.totalorder %s14, 6
    %s21 = sphi 0, %s33
    %s22 = sphi 0, %s29
    %s23 = sphi 0, %s21
    %s24 = sphi 0, %s22
    %s25 = sphi 0, %s23
    %s26 = sphi 0, %s24
    %s36 = sphi 0, %s38
    %s39 = sphi 0, %s36
    %s40 = sphi 0, %s39
    %s56 = sphi 0, %s40
    %s62 = sphi 0, %s64
    %s65 = sphi 0, %s62
    %s66 = sphi 0, %s65
    %s82 = sphi 0, %s66
    %s88 = sphi 0, %s90
    %s91 = sphi 0, %s88
    %s92 = sphi 0, %s91
    %s108 = sphi 0, %s92
    %s114 = sphi 0, %s116
    %s117 = sphi 0, %s114
    %s118 = sphi 0, %s117
    %s134 = sphi 0, %s118
    %s140 = sphi 0, %s142
    %s143 = sphi 0, %s140
    %s144 = sphi 0, %s143
    %s160 = sphi 0, %s144
    %s166 = sphi 0, %s168
    %s169 = sphi 0, %s166
    %s170 = sphi 0, %s169
    %s186 = sphi 0, %s170
    %s192 = sphi 0, %s194
    %s195 = sphi 0, %s192
    %s196 = sphi 0, %s195
    %s212 = sphi 0, %s196
    %s218 = sphi 0, %s220
    %s221 = sphi 0, %s218
    %s222 = sphi 0, %s221
    %s238 = sphi 0, %s222
    %s246 = sphi 0, %s248
    %s249 = sphi 0, %s246
    %s250 = sphi 0, %s249
    %s266 = sphi 0, %s250
  $region4: #{ptsm_decoder_forward.12} parent=0 // loop_header_branch
    %17 = sbr.rel (%p15) target = $region8
  $region5: #{ptsm_decoder_forward.12} parent=0 // loop_body
    %s19 = ssub.s32 %s14, 1
    %s20 = ssub.s32 %s14, 2
    %s27 = sadd.s32 1, %s22
    %p28 = scmp.ge.s32.totalorder %s27, 2
    %s29 = scalar_select %p28, 0, %s27
    %s30 = sadd.s32 1, %s21
    %s31 = scalar_select %p28, %s30, %s21
    %p32 = scmp.ge.s32.totalorder %s31, 2
    %s33 = scalar_select %p32, 0, %s31
    %s34 = ssub.s32 %s21, %s33
    %p35 = scmp.eq.s32.totalorder %s34, 0
    %s37 = sadd.s32 %s36, 1
    %s38 = scalar_select %p35, %s36, %s37
    %p41 = pneg %p35
    %p42 = scmp.eq.s32.totalorder %s14, 3
    %p43 = por %p41, %p42
    %p44 = scmp.ne.s32.totalorder %s36, %s39
    %p45 = scmp.eq.s32.totalorder %s14, 0
    %p46 = por %p44, %p45
    %p47 = scmp.ne.s32.totalorder %s36, %s39
    %p48 = scmp.eq.s32.totalorder %s19, 3
    %p49 = por %p47, %p48
    %p50 = scmp.ne.s32.totalorder %s39, %s40
    %p51 = scmp.eq.s32.totalorder %s19, 0
    %p52 = por %p50, %p51
    %p53 = scmp.ne.s32.totalorder %s39, %s40
    %p54 = scmp.eq.s32.totalorder %s20, 3
    %p55 = por %p53, %p54
    %p57 = scmp.ne.s32.totalorder %s40, %s56
    %p58 = scmp.eq.s32.totalorder %s20, 0
    %p59 = por %p57, %p58
    %s60 = ssub.s32 %s22, %s29
    %p61 = scmp.eq.s32.totalorder %s60, 0
    %s63 = sadd.s32 %s62, 1
    %s64 = scalar_select %p61, %s62, %s63
    %p67 = pneg %p61
    %p68 = scmp.eq.s32.totalorder %s14, 3
    %p69 = por %p67, %p68
    %p70 = scmp.ne.s32.totalorder %s62, %s65
    %p71 = scmp.eq.s32.totalorder %s14, 0
    %p72 = por %p70, %p71
    %p73 = scmp.ne.s32.totalorder %s62, %s65
    %p74 = scmp.eq.s32.totalorder %s19, 3
    %p75 = por %p73, %p74
    %p76 = scmp.ne.s32.totalorder %s65, %s66
    %p77 = scmp.eq.s32.totalorder %s19, 0
    %p78 = por %p76, %p77
    %p79 = scmp.ne.s32.totalorder %s65, %s66
    %p80 = scmp.eq.s32.totalorder %s20, 3
    %p81 = por %p79, %p80
    %p83 = scmp.ne.s32.totalorder %s66, %s82
    %p84 = scmp.eq.s32.totalorder %s20, 0
    %p85 = por %p83, %p84
    %s86 = ssub.s32 %s22, %s29
    %p87 = scmp.eq.s32.totalorder %s86, 0
    %s89 = sadd.s32 %s88, 1
    %s90 = scalar_select %p87, %s88, %s89
    %p93 = pneg %p87
    %p94 = scmp.eq.s32.totalorder %s14, 3
    %p95 = por %p93, %p94
    %p96 = scmp.ne.s32.totalorder %s88, %s91
    %p97 = scmp.eq.s32.totalorder %s14, 0
    %p98 = por %p96, %p97
    %p99 = scmp.ne.s32.totalorder %s88, %s91
    %p100 = scmp.eq.s32.totalorder %s19, 3
    %p101 = por %p99, %p100
    %p102 = scmp.ne.s32.totalorder %s91, %s92
    %p103 = scmp.eq.s32.totalorder %s19, 0
    %p104 = por %p102, %p103
    %p105 = scmp.ne.s32.totalorder %s91, %s92
    %p106 = scmp.eq.s32.totalorder %s20, 3
    %p107 = por %p105, %p106
    %p109 = scmp.ne.s32.totalorder %s92, %s108
    %p110 = scmp.eq.s32.totalorder %s20, 0
    %p111 = por %p109, %p110
    %s112 = ssub.s32 %s22, %s29
    %p113 = scmp.eq.s32.totalorder %s112, 0
    %s115 = sadd.s32 %s114, 1
    %s116 = scalar_select %p113, %s114, %s115
    %p119 = pneg %p113
    %p120 = scmp.eq.s32.totalorder %s14, 3
    %p121 = por %p119, %p120
    %p122 = scmp.ne.s32.totalorder %s114, %s117
    %p123 = scmp.eq.s32.totalorder %s14, 0
    %p124 = por %p122, %p123
    %p125 = scmp.ne.s32.totalorder %s114, %s117
    %p126 = scmp.eq.s32.totalorder %s19, 3
    %p127 = por %p125, %p126
    %p128 = scmp.ne.s32.totalorder %s117, %s118
    %p129 = scmp.eq.s32.totalorder %s19, 0
    %p130 = por %p128, %p129
    %p131 = scmp.ne.s32.totalorder %s117, %s118
    %p132 = scmp.eq.s32.totalorder %s20, 3
    %p133 = por %p131, %p132
    %p135 = scmp.ne.s32.totalorder %s118, %s134
    %p136 = scmp.eq.s32.totalorder %s20, 0
    %p137 = por %p135, %p136
    %s138 = ssub.s32 %s22, %s29
    %p139 = scmp.eq.s32.totalorder %s138, 0
    %s141 = sadd.s32 %s140, 1
    %s142 = scalar_select %p139, %s140, %s141
    %p145 = pneg %p139
    %p146 = scmp.eq.s32.totalorder %s14, 3
    %p147 = por %p145, %p146
    %p148 = scmp.ne.s32.totalorder %s140, %s143
    %p149 = scmp.eq.s32.totalorder %s14, 0
    %p150 = por %p148, %p149
    %p151 = scmp.ne.s32.totalorder %s140, %s143
    %p152 = scmp.eq.s32.totalorder %s19, 3
    %p153 = por %p151, %p152
    %p154 = scmp.ne.s32.totalorder %s143, %s144
    %p155 = scmp.eq.s32.totalorder %s19, 0
    %p156 = por %p154, %p155
    %p157 = scmp.ne.s32.totalorder %s143, %s144
    %p158 = scmp.eq.s32.totalorder %s20, 3
    %p159 = por %p157, %p158
    %p161 = scmp.ne.s32.totalorder %s144, %s160
    %p162 = scmp.eq.s32.totalorder %s20, 0
    %p163 = por %p161, %p162
    %s164 = ssub.s32 %s22, %s29
    %p165 = scmp.eq.s32.totalorder %s164, 0
    %s167 = sadd.s32 %s166, 1
    %s168 = scalar_select %p165, %s166, %s167
    %p171 = pneg %p165
    %p172 = scmp.eq.s32.totalorder %s14, 3
    %p173 = por %p171, %p172
    %p174 = scmp.ne.s32.totalorder %s166, %s169
    %p175 = scmp.eq.s32.totalorder %s14, 0
    %p176 = por %p174, %p175
    %p177 = scmp.ne.s32.totalorder %s166, %s169
    %p178 = scmp.eq.s32.totalorder %s19, 3
    %p179 = por %p177, %p178
    %p180 = scmp.ne.s32.totalorder %s169, %s170
    %p181 = scmp.eq.s32.totalorder %s19, 0
    %p182 = por %p180, %p181
    %p183 = scmp.ne.s32.totalorder %s169, %s170
    %p184 = scmp.eq.s32.totalorder %s20, 3
    %p185 = por %p183, %p184
    %p187 = scmp.ne.s32.totalorder %s170, %s186
    %p188 = scmp.eq.s32.totalorder %s20, 0
    %p189 = por %p187, %p188
    %s190 = ssub.s32 %s22, %s29
    %p191 = scmp.eq.s32.totalorder %s190, 0
    %s193 = sadd.s32 %s192, 1
    %s194 = scalar_select %p191, %s192, %s193
    %p197 = pneg %p191
    %p198 = scmp.eq.s32.totalorder %s14, 3
    %p199 = por %p197, %p198
    %p200 = scmp.ne.s32.totalorder %s192, %s195
    %p201 = scmp.eq.s32.totalorder %s14, 0
    %p202 = por %p200, %p201
    %p203 = scmp.ne.s32.totalorder %s192, %s195
    %p204 = scmp.eq.s32.totalorder %s19, 3
    %p205 = por %p203, %p204
    %p206 = scmp.ne.s32.totalorder %s195, %s196
    %p207 = scmp.eq.s32.totalorder %s19, 0
    %p208 = por %p206, %p207
    %p209 = scmp.ne.s32.totalorder %s195, %s196
    %p210 = scmp.eq.s32.totalorder %s20, 3
    %p211 = por %p209, %p210
    %p213 = scmp.ne.s32.totalorder %s196, %s212
    %p214 = scmp.eq.s32.totalorder %s20, 0
    %p215 = por %p213, %p214
    %s216 = ssub.s32 %s21, %s33
    %p217 = scmp.eq.s32.totalorder %s216, 0
    %s219 = sadd.s32 %s218, 1
    %s220 = scalar_select %p217, %s218, %s219
    %p223 = pneg %p217
    %p224 = scmp.eq.s32.totalorder %s14, 3
    %p225 = por %p223, %p224
    %p226 = scmp.ne.s32.totalorder %s218, %s221
    %p227 = scmp.eq.s32.totalorder %s14, 0
    %p228 = por %p226, %p227
    %p229 = scmp.ne.s32.totalorder %s218, %s221
    %p230 = scmp.eq.s32.totalorder %s19, 3
    %p231 = por %p229, %p230
    %p232 = scmp.ne.s32.totalorder %s221, %s222
    %p233 = scmp.eq.s32.totalorder %s19, 0
    %p234 = por %p232, %p233
    %p235 = scmp.ne.s32.totalorder %s221, %s222
    %p236 = scmp.eq.s32.totalorder %s20, 3
    %p237 = por %p235, %p236
    %p239 = scmp.ne.s32.totalorder %s222, %s238
    %p240 = scmp.eq.s32.totalorder %s20, 0
    %p241 = por %p239, %p240
    %s242 = ssub.s32 %s22, %s29
    %s243 = ssub.s32 %s21, %s33
    %s244 = sor.u32 %s242, %s243
    %p245 = scmp.eq.s32.totalorder %s244, 0
    %s247 = sadd.s32 %s246, 1
    %s248 = scalar_select %p245, %s246, %s247
    %p251 = pneg %p245
    %p252 = scmp.eq.s32.totalorder %s14, 3
    %p253 = por %p251, %p252
    %p254 = scmp.ne.s32.totalorder %s246, %s249
    %p255 = scmp.eq.s32.totalorder %s14, 0
    %p256 = por %p254, %p255
    %p257 = scmp.ne.s32.totalorder %s246, %s249
    %p258 = scmp.eq.s32.totalorder %s19, 3
    %p259 = por %p257, %p258
    %p260 = scmp.ne.s32.totalorder %s249, %s250
    %p261 = scmp.eq.s32.totalorder %s19, 0
    %p262 = por %p260, %p261
    %p263 = scmp.ne.s32.totalorder %s249, %s250
    %p264 = scmp.eq.s32.totalorder %s20, 3
    %p265 = por %p263, %p264
    %p267 = scmp.ne.s32.totalorder %s250, %s266
    %p268 = scmp.eq.s32.totalorder %s20, 0
    %p269 = por %p267, %p268
    %p270 = scmp.le.s32.totalorder 1, %s14
    %p271 = scmp.lt.s32.totalorder %s14, 5
    %p272 = pnand %p270, %p271
    %p273 = pneg %p272
    // Predicated region
    $region9: #{ptsm_decoder_forward.12} parent=5 // pred_check
      _
    $region10: #{ptsm_decoder_forward.12} parent=5 // pred_check_branch
      %275 = sbr.rel (%p272) target = $region12
    $region11: #{ptsm_decoder_forward.12} parent=5 // pred_region
      %s276 = ssub.s32 %s14, 1
    $region12: #{ptsm_decoder_forward.12} parent=5 // pred_fallthru
      _
    %p277 = scmp.lt.s32.totalorder %s14, 4
    // Predicated region
    $region13: #{ptsm_decoder_forward.12} parent=5 // pred_check
      %p278 = pneg %p277
    $region14: #{ptsm_decoder_forward.12} parent=5 // pred_check_branch
      %280 = sbr.rel (%p278) target = $region16
    $region15: #{ptsm_decoder_forward.12} parent=5 // pred_region
      // Predicated region
      $region17: #{ptsm_decoder_forward.12} parent=15 // pred_check
        %p281 = pneg %p46
      $region18: #{ptsm_decoder_forward.12} parent=15 // pred_check_branch
        %283 = sbr.rel (%p281) target = $region20
      $region19: #{ptsm_decoder_forward.12} parent=15 // pred_region
        %p284 = scmp.lt.s32.totalorder %s21, 1
        %s285 = scalar_select %p284, %s21, 1
        %s286 = smul.addr %s285, 8
        %s287 = scalar_lea.vmem %s0, %s286
      $region20: #{ptsm_decoder_forward.12} parent=15 // pred_fallthru
        _
      // Predicated region
      $region21: #{ptsm_decoder_forward.12} parent=15 // pred_check
        %p288 = pneg %p72
      $region22: #{ptsm_decoder_forward.12} parent=15 // pred_check_branch
        %290 = sbr.rel (%p288) target = $region24
      $region23: #{ptsm_decoder_forward.12} parent=15 // pred_region
        %p291 = scmp.lt.s32.totalorder %s22, 1
        %s292 = scalar_select %p291, %s22, 1
        %s293 = smul.addr %s292, 4
        %s294 = smul.addr %s293, 4
        %s295 = scalar_lea.vmem %s1, %s294
      $region24: #{ptsm_decoder_forward.12} parent=15 // pred_fallthru
        _
      // Predicated region
      $region25: #{ptsm_decoder_forward.12} parent=15 // pred_check
        %p296 = pneg %p98
      $region26: #{ptsm_decoder_forward.12} parent=15 // pred_check_branch
        %298 = sbr.rel (%p296) target = $region28
      $region27: #{ptsm_decoder_forward.12} parent=15 // pred_region
        %p299 = scmp.lt.s32.totalorder %s22, 1
        %s300 = scalar_select %p299, %s22, 1
        %s301 = smul.addr %s300, 4
        %s302 = smul.addr %s301, 4
        %s303 = scalar_lea.vmem %s2, %s302
      $region28: #{ptsm_decoder_forward.12} parent=15 // pred_fallthru
        _
      // Predicated region
      $region29: #{ptsm_decoder_forward.12} parent=15 // pred_check
        %p304 = pneg %p124
      $region30: #{ptsm_decoder_forward.12} parent=15 // pred_check_branch
        %306 = sbr.rel (%p304) target = $region32
      $region31: #{ptsm_decoder_forward.12} parent=15 // pred_region
        %p307 = scmp.lt.s32.totalorder %s22, 1
        %s308 = scalar_select %p307, %s22, 1
        %s309 = smul.addr %s308, 4
        %s310 = smul.addr %s309, 4
        %s311 = scalar_lea.vmem %s3, %s310
      $region32: #{ptsm_decoder_forward.12} parent=15 // pred_fallthru
        _
      // Predicated region
      $region33: #{ptsm_decoder_forward.12} parent=15 // pred_check
        %p312 = pneg %p150
      $region34: #{ptsm_decoder_forward.12} parent=15 // pred_check_branch
        %314 = sbr.rel (%p312) target = $region36
      $region35: #{ptsm_decoder_forward.12} parent=15 // pred_region
        %p315 = scmp.lt.s32.totalorder %s22, 1
        %s316 = scalar_select %p315, %s22, 1
        %s317 = scalar_lea.vmem %s4, %s316
      $region36: #{ptsm_decoder_forward.12} parent=15 // pred_fallthru
        _
      // Predicated region
      $region37: #{ptsm_decoder_forward.12} parent=15 // pred_check
        %p318 = pneg %p176
      $region38: #{ptsm_decoder_forward.12} parent=15 // pred_check_branch
        %320 = sbr.rel (%p318) target = $region40
      $region39: #{ptsm_decoder_forward.12} parent=15 // pred_region
        %p321 = scmp.lt.s32.totalorder %s22, 1
        %s322 = scalar_select %p321, %s22, 1
        %s323 = scalar_lea.vmem %s5, %s322
      $region40: #{ptsm_decoder_forward.12} parent=15 // pred_fallthru
        _
      // Predicated region
      $region41: #{ptsm_decoder_forward.12} parent=15 // pred_check
        %p324 = pneg %p202
      $region42: #{ptsm_decoder_forward.12} parent=15 // pred_check_branch
        %326 = sbr.rel (%p324) target = $region44
      $region43: #{ptsm_decoder_forward.12} parent=15 // pred_region
        %p327 = scmp.lt.s32.totalorder %s22, 1
        %s328 = scalar_select %p327, %s22, 1
        %s329 = scalar_lea.vmem %s6, %s328
      $region44: #{ptsm_decoder_forward.12} parent=15 // pred_fallthru
        _
      // Predicated region
      $region45: #{ptsm_decoder_forward.12} parent=15 // pred_check
        %p330 = pneg %p228
      $region46: #{ptsm_decoder_forward.12} parent=15 // pred_check_branch
        %332 = sbr.rel (%p330) target = $region48
      $region47: #{ptsm_decoder_forward.12} parent=15 // pred_region
        %p333 = scmp.lt.s32.totalorder %s21, 1
        %s334 = scalar_select %p333, %s21, 1
        %s335 = scalar_lea.vmem %s7, %s334
      $region48: #{ptsm_decoder_forward.12} parent=15 // pred_fallthru
        _
    $region16: #{ptsm_decoder_forward.12} parent=5 // pred_fallthru
      _
    %p336 = scmp.le.s32.totalorder 1, %s14
    %p337 = scmp.lt.s32.totalorder %s14, 5
    %p338 = pnand %p336, %p337
    %p339 = pneg %p338
    // Predicated region
    $region49: #{ptsm_decoder_forward.12} parent=5 // pred_check
      _
    $region50: #{ptsm_decoder_forward.12} parent=5 // pred_check_branch
      %341 = sbr.rel (%p338) target = $region52
    $region51: #{ptsm_decoder_forward.12} parent=5 // pred_region
      %s342 = ssub.s32 %s14, 1
      %p343 = scmp.lt.s32.totalorder %s23, 1
      %s344 = scalar_select %p343, %s23, 1
      %s345 = smul.addr %s344, 8
      %s346 = scalar_lea.vmem %s0, %s345
      %p347 = pneg %p52
      %p348 = pneg %p49
      %p349 = scmp.lt.s32.totalorder %s24, 1
      %s350 = scalar_select %p349, %s24, 1
      %s351 = smul.addr %s350, 4
      %s352 = smul.addr %s351, 4
      %s353 = scalar_lea.vmem %s1, %s352
      %p354 = pneg %p78
      %p355 = pneg %p75
      %p356 = scmp.lt.s32.totalorder %s24, 1
      %s357 = scalar_select %p356, %s24, 1
      %s358 = smul.addr %s357, 4
      %s359 = smul.addr %s358, 4
      %s360 = scalar_lea.vmem %s2, %s359
      %p361 = pneg %p104
      %p362 = pneg %p101
      %p363 = scmp.lt.s32.totalorder %s24, 1
      %s364 = scalar_select %p363, %s24, 1
      %s365 = smul.addr %s364, 4
      %s366 = smul.addr %s365, 4
      %s367 = scalar_lea.vmem %s3, %s366
      %p368 = pneg %p130
      %p369 = pneg %p127
      %p370 = scmp.lt.s32.totalorder %s24, 1
      %s371 = scalar_select %p370, %s24, 1
      %s372 = scalar_lea.vmem %s4, %s371
      %p373 = pneg %p156
      %p374 = pneg %p153
      %p375 = scmp.lt.s32.totalorder %s24, 1
      %s376 = scalar_select %p375, %s24, 1
      %s377 = scalar_lea.vmem %s5, %s376
      %p378 = pneg %p182
      %p379 = pneg %p179
      %p380 = scmp.lt.s32.totalorder %s24, 1
      %s381 = scalar_select %p380, %s24, 1
      %s382 = scalar_lea.vmem %s6, %s381
      %p383 = pneg %p208
      %p384 = pneg %p205
      %p385 = scmp.lt.s32.totalorder %s23, 1
      %s386 = scalar_select %p385, %s23, 1
      %s387 = scalar_lea.vmem %s7, %s386
      %p388 = pneg %p234
      %p389 = pneg %p231
      %p390 = pneg %p262
      %p391 = pneg %p259
      %p392 = scmp.lt.s32.totalorder %s24, 1
      %s393 = scalar_select %p392, %s24, 1
      %p394 = scmp.lt.s32.totalorder %s23, 1
      %s395 = scalar_select %p394, %s23, 1
      %s396 = smul.addr %s393, 2
      %s397 = sadd.s32 %s395, %s396
      %s398 = smul.addr %s397, 8
      %s399 = scalar_lea.vmem %s8, %s398
      %p400 = scmp.lt.s32.totalorder %s23, 1
      %s401 = scalar_select %p400, %s23, 1
      %s402 = smul.addr %s401, 8
      %s403 = scalar_lea.vmem %s0, %s402
      %p404 = scmp.lt.s32.totalorder %s24, 1
      %s405 = scalar_select %p404, %s24, 1
      %s406 = smul.addr %s405, 4
      %s407 = smul.addr %s406, 4
      %s408 = scalar_lea.vmem %s1, %s407
      %p409 = scmp.lt.s32.totalorder %s24, 1
      %s410 = scalar_select %p409, %s24, 1
      %s411 = smul.addr %s410, 4
      %s412 = smul.addr %s411, 4
      %s413 = scalar_lea.vmem %s2, %s412
      %p414 = scmp.lt.s32.totalorder %s24, 1
      %s415 = scalar_select %p414, %s24, 1
      %s416 = smul.addr %s415, 4
      %s417 = smul.addr %s416, 4
      %s418 = scalar_lea.vmem %s3, %s417
      %p419 = scmp.lt.s32.totalorder %s24, 1
      %s420 = scalar_select %p419, %s24, 1
      %s421 = scalar_lea.vmem %s4, %s420
      %p422 = scmp.lt.s32.totalorder %s24, 1
      %s423 = scalar_select %p422, %s24, 1
      %s424 = scalar_lea.vmem %s5, %s423
      %p425 = scmp.lt.s32.totalorder %s24, 1
      %s426 = scalar_select %p425, %s24, 1
      %s427 = scalar_lea.vmem %s6, %s426
      %p428 = scmp.lt.s32.totalorder %s23, 1
      %s429 = scalar_select %p428, %s23, 1
      %s430 = scalar_lea.vmem %s7, %s429
      %p431 = scmp.lt.s32.totalorder %s24, 1
      %s432 = scalar_select %p431, %s24, 1
      %p433 = scmp.lt.s32.totalorder %s23, 1
      %s434 = scalar_select %p433, %s23, 1
      %s435 = smul.addr %s432, 2
      %s436 = sadd.s32 %s434, %s435
      %s437 = smul.addr %s436, 8
      %s438 = scalar_lea.vmem %s8, %s437
      %v440 = vld [vmem:[%s403] sm:$0xff]
      %v441 = vpack.c.bf16 %v440, %v440
      %v442 = vld [vmem:[%s408] sm:$0xf]
      %v443 = vld [vmem:[%s408 + $0x4] sm:$0xf]
      %v444 = vld [vmem:[%s408 + $0x8] sm:$0xf]
      %v445 = vld [vmem:[%s408 + $0xc] sm:$0xf]
      %v446 = vld [vmem:[%s421] sm:$0x1]
      %v448 = vlaneseq
      %v449 = vshrl.u32 %v448, 7
      %v450 = vsub.s32 0, %v449
      %v451 = vrot.slane %v446, %v450
      %v457 = vunpack.c.l.b16 %v442
      %v458 = vunpack.c.l.b16 %v443
      %v459 = vunpack.c.l.b16 %v444
      %v460 = vunpack.c.l.b16 %v445
      %v461 = vpack.c.b16 %v458, %v457
      %v462 = vpack.c.b16 %v460, %v459
      %vm465 = vcmask 261120
      %v467 = vsel %vm465, %v441, 0
      %469 = vmatprep.subr.bf16.mxu0 0
      %470 = vmatpush1.bf16.msra.mxu0 %v461
      %471 = vmatprep.subr.bf16.mxu0 0
      %472 = vmatpush1.bf16.msra.mxu0 %v462
      %473 = vmatprep.subr.bf16.mxu0 0
      %474 = vmatpush1.bf16.msra.mxu0 0
      %475 = vmatprep.subr.bf16.mxu0 0
      %476 = vmatpush1.bf16.msra.mxu0 0
      %477 = vmatprep.subr.bf16.mxu0 0
      %478 = vmatpush1.bf16.msra.mxu0 0
      %479 = vmatprep.subr.bf16.mxu0 0
      %480 = vmatpush1.bf16.msra.mxu0 0
      %481 = vmatprep.subr.bf16.mxu0 0
      %482 = vmatpush1.bf16.msra.mxu0 0
      %483 = vmatprep.subr.bf16.mxu0 0
      %484 = vmatpush1.bf16.msra.mxu0 0
      %485 = vmatprep.subr.bf16.mxu0 0
      %486 = vmatpush1.bf16.msra.mxu0 0
      %487 = vmatprep.subr.bf16.mxu0 0
      %488 = vmatpush1.bf16.msra.mxu0 0
      %489 = vmatprep.subr.bf16.mxu0 0
      %490 = vmatpush1.bf16.msra.mxu0 0
      %491 = vmatprep.subr.bf16.mxu0 0
      %492 = vmatpush1.bf16.msra.mxu0 0
      %493 = vmatprep.subr.bf16.mxu0 0
      %494 = vmatpush1.bf16.msra.mxu0 0
      %495 = vmatprep.subr.bf16.mxu0 0
      %496 = vmatpush1.bf16.msra.mxu0 0
      %497 = vmatprep.subr.bf16.mxu0 0
      %498 = vmatpush1.bf16.msra.mxu0 0
      %499 = vmatprep.subr.bf16.mxu0 0
      %500 = vmatpush1.bf16.msra.mxu0 0
      %501 = vmatprep.mubr.bf16.mxu0 0
      %502 = vmatmul.mubr.bf16.gmra.mrb[0].mxu0 %v467
      %v503 = vpop.f32.mrb[0].mxu0
      %v504 = vadd.f32 %v451, %v503
      %v505 = vpop.f32.mrb[0].mxu0
      %v506 = vpop.f32.mrb[0].mxu0
      %v507 = vpop.f32.mrb[0].mxu0
      %508 = vdwg.mxu0
      %v509 = vld [vmem:[%s413] sm:$0xf]
      %v510 = vld [vmem:[%s413 + $0x4] sm:$0xf]
      %v511 = vld [vmem:[%s413 + $0x8] sm:$0xf]
      %v512 = vld [vmem:[%s413 + $0xc] sm:$0xf]
      %v513 = vld [vmem:[%s424] sm:$0x1]
      %v515 = vlaneseq
      %v516 = vshrl.u32 %v515, 7
      %v517 = vsub.s32 0, %v516
      %v518 = vrot.slane %v513, %v517
      %v524 = vunpack.c.l.b16 %v509
      %v525 = vunpack.c.l.b16 %v510
      %v526 = vunpack.c.l.b16 %v511
      %v527 = vunpack.c.l.b16 %v512
      %v528 = vpack.c.b16 %v525, %v524
      %v529 = vpack.c.b16 %v527, %v526
      %532 = vmatprep.subr.bf16.mxu0 0
      %533 = vmatpush1.bf16.msra.mxu0 %v528
      %534 = vmatprep.subr.bf16.mxu0 0
      %535 = vmatpush1.bf16.msra.mxu0 %v529
      %536 = vmatprep.subr.bf16.mxu0 0
      %537 = vmatpush1.bf16.msra.mxu0 0
      %538 = vmatprep.subr.bf16.mxu0 0
      %539 = vmatpush1.bf16.msra.mxu0 0
      %540 = vmatprep.subr.bf16.mxu0 0
      %541 = vmatpush1.bf16.msra.mxu0 0
      %542 = vmatprep.subr.bf16.mxu0 0
      %543 = vmatpush1.bf16.msra.mxu0 0
      %544 = vmatprep.subr.bf16.mxu0 0
      %545 = vmatpush1.bf16.msra.mxu0 0
      %546 = vmatprep.subr.bf16.mxu0 0
      %547 = vmatpush1.bf16.msra.mxu0 0
      %548 = vmatprep.subr.bf16.mxu0 0
      %549 = vmatpush1.bf16.msra.mxu0 0
      %550 = vmatprep.subr.bf16.mxu0 0
      %551 = vmatpush1.bf16.msra.mxu0 0
      %552 = vmatprep.subr.bf16.mxu0 0
      %553 = vmatpush1.bf16.msra.mxu0 0
      %554 = vmatprep.subr.bf16.mxu0 0
      %555 = vmatpush1.bf16.msra.mxu0 0
      %556 = vmatprep.subr.bf16.mxu0 0
      %557 = vmatpush1.bf16.msra.mxu0 0
      %558 = vmatprep.subr.bf16.mxu0 0
      %559 = vmatpush1.bf16.msra.mxu0 0
      %560 = vmatprep.subr.bf16.mxu0 0
      %561 = vmatpush1.bf16.msra.mxu0 0
      %562 = vmatprep.subr.bf16.mxu0 0
      %563 = vmatpush1.bf16.msra.mxu0 0
      %564 = vmatprep.mubr.bf16.mxu0 0
      %565 = vmatmul.mubr.bf16.gmra.mrb[0].mxu0 %v467
      %v566 = vpop.f32.mrb[0].mxu0
      %v567 = vadd.f32 %v518, %v566
      %v568 = vpop.f32.mrb[0].mxu0
      %v569 = vpop.f32.mrb[0].mxu0
      %v570 = vpop.f32.mrb[0].mxu0
      %571 = vdwg.mxu0
      %v572 = vld [vmem:[%s418] sm:$0xf]
      %v573 = vld [vmem:[%s418 + $0x4] sm:$0xf]
      %v574 = vld [vmem:[%s418 + $0x8] sm:$0xf]
      %v575 = vld [vmem:[%s418 + $0xc] sm:$0xf]
      %v576 = vld [vmem:[%s427] sm:$0x1]
      %v578 = vlaneseq
      %v579 = vshrl.u32 %v578, 7
      %v580 = vsub.s32 0, %v579
      %v581 = vrot.slane %v576, %v580
      %v587 = vunpack.c.l.b16 %v572
      %v588 = vunpack.c.l.b16 %v573
      %v589 = vunpack.c.l.b16 %v574
      %v590 = vunpack.c.l.b16 %v575
      %v591 = vpack.c.b16 %v588, %v587
      %v592 = vpack.c.b16 %v590, %v589
      %595 = vmatprep.subr.bf16.mxu0 0
      %596 = vmatpush1.bf16.msra.mxu0 %v591
      %597 = vmatprep.subr.bf16.mxu0 0
      %598 = vmatpush1.bf16.msra.mxu0 %v592
      %599 = vmatprep.subr.bf16.mxu0 0
      %600 = vmatpush1.bf16.msra.mxu0 0
      %601 = vmatprep.subr.bf16.mxu0 0
      %602 = vmatpush1.bf16.msra.mxu0 0
      %603 = vmatprep.subr.bf16.mxu0 0
      %604 = vmatpush1.bf16.msra.mxu0 0
      %605 = vmatprep.subr.bf16.mxu0 0
      %606 = vmatpush1.bf16.msra.mxu0 0
      %607 = vmatprep.subr.bf16.mxu0 0
      %608 = vmatpush1.bf16.msra.mxu0 0
      %609 = vmatprep.subr.bf16.mxu0 0
      %610 = vmatpush1.bf16.msra.mxu0 0
      %611 = vmatprep.subr.bf16.mxu0 0
      %612 = vmatpush1.bf16.msra.mxu0 0
      %613 = vmatprep.subr.bf16.mxu0 0
      %614 = vmatpush1.bf16.msra.mxu0 0
      %615 = vmatprep.subr.bf16.mxu0 0
      %616 = vmatpush1.bf16.msra.mxu0 0
      %617 = vmatprep.subr.bf16.mxu0 0
      %618 = vmatpush1.bf16.msra.mxu0 0
      %619 = vmatprep.subr.bf16.mxu0 0
      %620 = vmatpush1.bf16.msra.mxu0 0
      %621 = vmatprep.subr.bf16.mxu0 0
      %622 = vmatpush1.bf16.msra.mxu0 0
      %623 = vmatprep.subr.bf16.mxu0 0
      %624 = vmatpush1.bf16.msra.mxu0 0
      %625 = vmatprep.subr.bf16.mxu0 0
      %626 = vmatpush1.bf16.msra.mxu0 0
      %627 = vmatprep.mubr.bf16.mxu0 0
      %628 = vmatmul.mubr.bf16.gmra.mrb[0].mxu0 %v467
      %v629 = vpop.f32.mrb[0].mxu0
      %v630 = vadd.f32 %v581, %v629
      %v631 = vpop.f32.mrb[0].mxu0
      %v632 = vpop.f32.mrb[0].mxu0
      %v633 = vpop.f32.mrb[0].mxu0
      %634 = vdwg.mxu0
      %v635 = vlaneseq
      %v636 = vshrl.u32 %v635, 7
      %v637 = vlaneseq
      %v638 = vand.u32 %v637, 127
      %vm639 = vcmp.gt.s32.totalorder %v638, %v636
      %v640 = vsel %vm639, -1e+30, 0.0
      %v641 = vld [vmem:[%s430] sm:$0x1]
      %v643 = vlaneseq
      %v644 = vshrl.u32 %v643, 7
      %v645 = vsub.s32 0, %v644
      %v646 = vrot.slane %v641, %v645
      %v648 = vadd.f32 %v640, %v646
      %v649 = vpack.c.bf16 %v504, %v504
      %v650 = vpack.c.bf16 %v567, %v567
      %vm651 = vcmask 130048
      %v653 = vsel %vm651, %v649, 0
      %v656 = vsel %vm651, %v650, 0
      %658 = vmatprep.subr.bf16.mxu0 0
      %659 = vmatpush1.bf16.xpose.msra.mxu0 %v656
      %660 = vmatprep.subr.bf16.mxu0 0
      %661 = vmatpush1.bf16.xpose.msra.mxu0 0
      %662 = vmatprep.subr.bf16.mxu0 0
      %663 = vmatpush1.bf16.xpose.msra.mxu0 0
      %664 = vmatprep.subr.bf16.mxu0 0
      %665 = vmatpush1.bf16.xpose.msra.mxu0 0
      %666 = vmatprep.subr.bf16.mxu0 0
      %667 = vmatpush1.bf16.xpose.msra.mxu0 0
      %668 = vmatprep.subr.bf16.mxu0 0
      %669 = vmatpush1.bf16.xpose.msra.mxu0 0
      %670 = vmatprep.subr.bf16.mxu0 0
      %671 = vmatpush1.bf16.xpose.msra.mxu0 0
      %672 = vmatprep.subr.bf16.mxu0 0
      %673 = vmatpush1.bf16.xpose.msra.mxu0 0
      %674 = vmatprep.subr.bf16.mxu0 0
      %675 = vmatpush1.bf16.xpose.msra.mxu0 0
      %676 = vmatprep.subr.bf16.mxu0 0
      %677 = vmatpush1.bf16.xpose.msra.mxu0 0
      %678 = vmatprep.subr.bf16.mxu0 0
      %679 = vmatpush1.bf16.xpose.msra.mxu0 0
      %680 = vmatprep.subr.bf16.mxu0 0
      %681 = vmatpush1.bf16.xpose.msra.mxu0 0
      %682 = vmatprep.subr.bf16.mxu0 0
      %683 = vmatpush1.bf16.xpose.msra.mxu0 0
      %684 = vmatprep.subr.bf16.mxu0 0
      %685 = vmatpush1.bf16.xpose.msra.mxu0 0
      %686 = vmatprep.subr.bf16.mxu0 0
      %687 = vmatpush1.bf16.xpose.msra.mxu0 0
      %688 = vmatprep.subr.bf16.mxu0 0
      %689 = vmatpush1.bf16.xpose.msra.mxu0 0
      %690 = vmatprep.mubr.bf16.mxu0 0
      %691 = vmatmul.mubr.bf16.gmra.mrb[0].mxu0 %v653
      %v692 = vpop.f32.mrb[0].mxu0
      %v693 = vadd.f32 %v648, %v692
      %v694 = vpop.f32.mrb[0].mxu0
      %v695 = vpop.f32.mrb[0].mxu0
      %v696 = vpop.f32.mrb[0].mxu0
      %697 = vdwg.mxu0
      %vm698 = vcmask 64512
      %v699 = vsel %vm698, %v693, -inf
      %700 = vmax.xlane.f32.xlu0 %v699
      %v701 = vpop.xlane.xlu0 %700
      %v702 = vsub.f32 %v693, %v701
      %v703 = vmul.f32 %v702, 1.442695
      %v704 = vpow.pop %v703
      %v705 = vsel %vm698, %v704, 0.0
      %706 = vadd.xlane.f32.xlu0 %v705
      %v707 = vpop.xlane.xlu0 %706
      %v708 = vrcp.pop %v707
      %v709 = vmul.f32 %v704, %v708
      %v710 = vpack.c.bf16 %v709, %v709
      %v711 = vpack.c.bf16 %v630, %v630
      %v713 = vsel %vm698, %v710, 0
      %vm715 = vcmask 1043456
      %v717 = vsel %vm715, %v711, 0
      %719 = vmatprep.subr.bf16.mxu0 0
      %720 = vmatpush1.bf16.msra.mxu0 %v717
      %721 = vmatprep.subr.bf16.mxu0 0
      %722 = vmatpush1.bf16.msra.mxu0 0
      %723 = vmatprep.subr.bf16.mxu0 0
      %724 = vmatpush1.bf16.msra.mxu0 0
      %725 = vmatprep.subr.bf16.mxu0 0
      %726 = vmatpush1.bf16.msra.mxu0 0
      %727 = vmatprep.subr.bf16.mxu0 0
      %728 = vmatpush1.bf16.msra.mxu0 0
      %729 = vmatprep.subr.bf16.mxu0 0
      %730 = vmatpush1.bf16.msra.mxu0 0
      %731 = vmatprep.subr.bf16.mxu0 0
      %732 = vmatpush1.bf16.msra.mxu0 0
      %733 = vmatprep.subr.bf16.mxu0 0
      %734 = vmatpush1.bf16.msra.mxu0 0
      %735 = vmatprep.subr.bf16.mxu0 0
      %736 = vmatpush1.bf16.msra.mxu0 0
      %737 = vmatprep.subr.bf16.mxu0 0
      %738 = vmatpush1.bf16.msra.mxu0 0
      %739 = vmatprep.subr.bf16.mxu0 0
      %740 = vmatpush1.bf16.msra.mxu0 0
      %741 = vmatprep.subr.bf16.mxu0 0
      %742 = vmatpush1.bf16.msra.mxu0 0
      %743 = vmatprep.subr.bf16.mxu0 0
      %744 = vmatpush1.bf16.msra.mxu0 0
      %745 = vmatprep.subr.bf16.mxu0 0
      %746 = vmatpush1.bf16.msra.mxu0 0
      %747 = vmatprep.subr.bf16.mxu0 0
      %748 = vmatpush1.bf16.msra.mxu0 0
      %749 = vmatprep.subr.bf16.mxu0 0
      %750 = vmatpush1.bf16.msra.mxu0 0
      %751 = vmatprep.mubr.bf16.mxu0 0
      %752 = vmatmul.mubr.bf16.gmra.mrb[0].mxu0 %v713
      %v753 = vpop.f32.mrb[0].mxu0
      %v754 = vadd.f32 0.0, %v753
      %v755 = vpop.f32.mrb[0].mxu0
      %v756 = vpop.f32.mrb[0].mxu0
      %v757 = vpop.f32.mrb[0].mxu0
      %758 = vdwg.mxu0
      %759 = vst.msk [vmem:[%s438] sm:$0xff] %vm651, %v754
      %p760 = scmp.lt.s32.totalorder %s24, 1
      %s761 = scalar_select %p760, %s24, 1
      %p762 = scmp.lt.s32.totalorder %s23, 1
      %s763 = scalar_select %p762, %s23, 1
      %s764 = smul.addr %s761, 2
      %s765 = sadd.s32 %s763, %s764
      %s766 = smul.addr %s765, 8
      %s767 = scalar_lea.vmem %s8, %s766
      // Predicated region
      $region53: #{ptsm_decoder_forward.12} parent=51 // pred_check
        %p768 = pneg %p259
      $region54: #{ptsm_decoder_forward.12} parent=51 // pred_check_branch
        %770 = sbr.rel (%p768) target = $region56
      $region55: #{ptsm_decoder_forward.12} parent=51 // pred_region
        _
      $region56: #{ptsm_decoder_forward.12} parent=51 // pred_fallthru
        _
    $region52: #{ptsm_decoder_forward.12} parent=5 // pred_fallthru
      _
    %p771 = scmp.le.s32.totalorder 2, %s14
    // Predicated region
    $region57: #{ptsm_decoder_forward.12} parent=5 // pred_check
      %p772 = pneg %p771
    $region58: #{ptsm_decoder_forward.12} parent=5 // pred_check_branch
      %774 = sbr.rel (%p772) target = $region60
    $region59: #{ptsm_decoder_forward.12} parent=5 // pred_region
      %s775 = ssub.s32 %s14, 2
      // Predicated region
      $region61: #{ptsm_decoder_forward.12} parent=59 // pred_check
        %p776 = pneg %p265
      $region62: #{ptsm_decoder_forward.12} parent=59 // pred_check_branch
        %778 = sbr.rel (%p776) target = $region64
      $region63: #{ptsm_decoder_forward.12} parent=59 // pred_region
        %p779 = scmp.lt.s32.totalorder %s26, 1
        %s780 = scalar_select %p779, %s26, 1
        %p781 = scmp.lt.s32.totalorder %s25, 1
        %s782 = scalar_select %p781, %s25, 1
        %s783 = smul.addr %s780, 2
        %s784 = sadd.s32 %s782, %s783
        %s785 = smul.addr %s784, 8
        %s786 = scalar_lea.vmem %s8, %s785
      $region64: #{ptsm_decoder_forward.12} parent=59 // pred_fallthru
        _
    $region60: #{ptsm_decoder_forward.12} parent=5 // pred_fallthru
      _
  $region6: #{ptsm_decoder_forward.12} parent=0 // loop_footer
    %s18 = sadd.s32 1, %s14
  $region7: #{ptsm_decoder_forward.12} parent=0 // loop_footer_branch
    %13 = sbr.rel target = $region3
  $region8: #{ptsm_decoder_forward.12} parent=0 // loop_exit
    _

// kernel: ptsm_decoder_forward.14
$region0: #{ptsm_decoder_forward.14}
  #allocation0 [shape = 'u32[]', space=smem, size = 0x4, offset = 0x4, fixed_abs, tag = 'smem constant byte address 0x4 - core index']
  #allocation1 [shape = 'u32[144,128]{1,0:T(1,128)}', space=vmem, size = 0x12000, scoped, tag = 'internal scratch']
  %s0 = inlined_call_operand.vmem [shape: f32[2,8,32], index: 0, kind: input, shape index: {}]
  %s1 = inlined_call_operand.vmem [shape: f32[2,10,32], index: 1, kind: input, shape index: {}]
  %s2 = inlined_call_operand.vmem [shape: bf16[2,32,16], index: 2, kind: input, shape index: {}]
  %s3 = inlined_call_operand.vmem [shape: bf16[2,32,16], index: 3, kind: input, shape index: {}]
  %s4 = inlined_call_operand.vmem [shape: bf16[2,32,16], index: 4, kind: input, shape index: {}]
  %s5 = inlined_call_operand.vmem [shape: f32[2,1,16], index: 5, kind: input, shape index: {}]
  %s6 = inlined_call_operand.vmem [shape: f32[2,1,16], index: 6, kind: input, shape index: {}]
  %s7 = inlined_call_operand.vmem [shape: f32[2,1,16], index: 7, kind: input, shape index: {}]
  %s8 = inlined_call_operand.vmem [shape: f32[2,1,10], index: 8, kind: input, shape index: {}]
  %s9 = inlined_call_operand.vmem [shape: f32[2,16,16], index: 9, kind: output, shape index: {}]
  %s10 = sld [smem:[#allocation0]]
  $region69: #{ptsm_decoder_forward.14} parent=0
    _
  %s12 = ssub.s32 1, %s10
  %s13 = scalar_select 0, %s12, %s10
  loop: start=0, step=1, limit=6
  $region2: #{ptsm_decoder_forward.14} parent=0 // loop_pre_header
    _
  $region3: #{ptsm_decoder_forward.14} parent=0 // loop_header
    %s15 = sphi 0, %s19
    %p16 = scmp.ge.s32.totalorder %s15, 6
    %s22 = sphi 0, %s34
    %s23 = sphi 0, %s30
    %s24 = sphi 0, %s22
    %s25 = sphi 0, %s23
    %s26 = sphi 0, %s24
    %s27 = sphi 0, %s25
    %s37 = sphi 0, %s39
    %s40 = sphi 0, %s37
    %s41 = sphi 0, %s40
    %s57 = sphi 0, %s41
    %s63 = sphi 0, %s65
    %s66 = sphi 0, %s63
    %s67 = sphi 0, %s66
    %s83 = sphi 0, %s67
    %s89 = sphi 0, %s91
    %s92 = sphi 0, %s89
    %s93 = sphi 0, %s92
    %s109 = sphi 0, %s93
    %s115 = sphi 0, %s117
    %s118 = sphi 0, %s115
    %s119 = sphi 0, %s118
    %s135 = sphi 0, %s119
    %s141 = sphi 0, %s143
    %s144 = sphi 0, %s141
    %s145 = sphi 0, %s144
    %s161 = sphi 0, %s145
    %s167 = sphi 0, %s169
    %s170 = sphi 0, %s167
    %s171 = sphi 0, %s170
    %s187 = sphi 0, %s171
    %s193 = sphi 0, %s195
    %s196 = sphi 0, %s193
    %s197 = sphi 0, %s196
    %s213 = sphi 0, %s197
    %s219 = sphi 0, %s221
    %s222 = sphi 0, %s219
    %s223 = sphi 0, %s222
    %s239 = sphi 0, %s223
    %s245 = sphi 0, %s247
    %s248 = sphi 0, %s245
    %s249 = sphi 0, %s248
    %s265 = sphi 0, %s249
    %s273 = sphi 0, %s275
    %s276 = sphi 0, %s273
    %s277 = sphi 0, %s276
    %s293 = sphi 0, %s277
  $region4: #{ptsm_decoder_forward.14} parent=0 // loop_header_branch
    %18 = sbr.rel (%p16) target = $region8
  $region5: #{ptsm_decoder_forward.14} parent=0 // loop_body
    %s20 = ssub.s32 %s15, 1
    %s21 = ssub.s32 %s15, 2
    %s28 = sadd.s32 1, %s23
    %p29 = scmp.ge.s32.totalorder %s28, 2
    %s30 = scalar_select %p29, 0, %s28
    %s31 = sadd.s32 1, %s22
    %s32 = scalar_select %p29, %s31, %s22
    %p33 = scmp.ge.s32.totalorder %s32, 2
    %s34 = scalar_select %p33, 0, %s32
    %s35 = ssub.s32 %s22, %s34
    %p36 = scmp.eq.s32.totalorder %s35, 0
    %s38 = sadd.s32 %s37, 1
    %s39 = scalar_select %p36, %s37, %s38
    %p42 = pneg %p36
    %p43 = scmp.eq.s32.totalorder %s15, 3
    %p44 = por %p42, %p43
    %p45 = scmp.ne.s32.totalorder %s37, %s40
    %p46 = scmp.eq.s32.totalorder %s15, 0
    %p47 = por %p45, %p46
    %p48 = scmp.ne.s32.totalorder %s37, %s40
    %p49 = scmp.eq.s32.totalorder %s20, 3
    %p50 = por %p48, %p49
    %p51 = scmp.ne.s32.totalorder %s40, %s41
    %p52 = scmp.eq.s32.totalorder %s20, 0
    %p53 = por %p51, %p52
    %p54 = scmp.ne.s32.totalorder %s40, %s41
    %p55 = scmp.eq.s32.totalorder %s21, 3
    %p56 = por %p54, %p55
    %p58 = scmp.ne.s32.totalorder %s41, %s57
    %p59 = scmp.eq.s32.totalorder %s21, 0
    %p60 = por %p58, %p59
    %s61 = ssub.s32 %s22, %s34
    %p62 = scmp.eq.s32.totalorder %s61, 0
    %s64 = sadd.s32 %s63, 1
    %s65 = scalar_select %p62, %s63, %s64
    %p68 = pneg %p62
    %p69 = scmp.eq.s32.totalorder %s15, 3
    %p70 = por %p68, %p69
    %p71 = scmp.ne.s32.totalorder %s63, %s66
    %p72 = scmp.eq.s32.totalorder %s15, 0
    %p73 = por %p71, %p72
    %p74 = scmp.ne.s32.totalorder %s63, %s66
    %p75 = scmp.eq.s32.totalorder %s20, 3
    %p76 = por %p74, %p75
    %p77 = scmp.ne.s32.totalorder %s66, %s67
    %p78 = scmp.eq.s32.totalorder %s20, 0
    %p79 = por %p77, %p78
    %p80 = scmp.ne.s32.totalorder %s66, %s67
    %p81 = scmp.eq.s32.totalorder %s21, 3
    %p82 = por %p80, %p81
    %p84 = scmp.ne.s32.totalorder %s67, %s83
    %p85 = scmp.eq.s32.totalorder %s21, 0
    %p86 = por %p84, %p85
    %s87 = ssub.s32 %s23, %s30
    %p88 = scmp.eq.s32.totalorder %s87, 0
    %s90 = sadd.s32 %s89, 1
    %s91 = scalar_select %p88, %s89, %s90
    %p94 = pneg %p88
    %p95 = scmp.eq.s32.totalorder %s15, 3
    %p96 = por %p94, %p95
    %p97 = scmp.ne.s32.totalorder %s89, %s92
    %p98 = scmp.eq.s32.totalorder %s15, 0
    %p99 = por %p97, %p98
    %p100 = scmp.ne.s32.totalorder %s89, %s92
    %p101 = scmp.eq.s32.totalorder %s20, 3
    %p102 = por %p100, %p101
    %p103 = scmp.ne.s32.totalorder %s92, %s93
    %p104 = scmp.eq.s32.totalorder %s20, 0
    %p105 = por %p103, %p104
    %p106 = scmp.ne.s32.totalorder %s92, %s93
    %p107 = scmp.eq.s32.totalorder %s21, 3
    %p108 = por %p106, %p107
    %p110 = scmp.ne.s32.totalorder %s93, %s109
    %p111 = scmp.eq.s32.totalorder %s21, 0
    %p112 = por %p110, %p111
    %s113 = ssub.s32 %s23, %s30
    %p114 = scmp.eq.s32.totalorder %s113, 0
    %s116 = sadd.s32 %s115, 1
    %s117 = scalar_select %p114, %s115, %s116
    %p120 = pneg %p114
    %p121 = scmp.eq.s32.totalorder %s15, 3
    %p122 = por %p120, %p121
    %p123 = scmp.ne.s32.totalorder %s115, %s118
    %p124 = scmp.eq.s32.totalorder %s15, 0
    %p125 = por %p123, %p124
    %p126 = scmp.ne.s32.totalorder %s115, %s118
    %p127 = scmp.eq.s32.totalorder %s20, 3
    %p128 = por %p126, %p127
    %p129 = scmp.ne.s32.totalorder %s118, %s119
    %p130 = scmp.eq.s32.totalorder %s20, 0
    %p131 = por %p129, %p130
    %p132 = scmp.ne.s32.totalorder %s118, %s119
    %p133 = scmp.eq.s32.totalorder %s21, 3
    %p134 = por %p132, %p133
    %p136 = scmp.ne.s32.totalorder %s119, %s135
    %p137 = scmp.eq.s32.totalorder %s21, 0
    %p138 = por %p136, %p137
    %s139 = ssub.s32 %s23, %s30
    %p140 = scmp.eq.s32.totalorder %s139, 0
    %s142 = sadd.s32 %s141, 1
    %s143 = scalar_select %p140, %s141, %s142
    %p146 = pneg %p140
    %p147 = scmp.eq.s32.totalorder %s15, 3
    %p148 = por %p146, %p147
    %p149 = scmp.ne.s32.totalorder %s141, %s144
    %p150 = scmp.eq.s32.totalorder %s15, 0
    %p151 = por %p149, %p150
    %p152 = scmp.ne.s32.totalorder %s141, %s144
    %p153 = scmp.eq.s32.totalorder %s20, 3
    %p154 = por %p152, %p153
    %p155 = scmp.ne.s32.totalorder %s144, %s145
    %p156 = scmp.eq.s32.totalorder %s20, 0
    %p157 = por %p155, %p156
    %p158 = scmp.ne.s32.totalorder %s144, %s145
    %p159 = scmp.eq.s32.totalorder %s21, 3
    %p160 = por %p158, %p159
    %p162 = scmp.ne.s32.totalorder %s145, %s161
    %p163 = scmp.eq.s32.totalorder %s21, 0
    %p164 = por %p162, %p163
    %s165 = ssub.s32 %s23, %s30
    %p166 = scmp.eq.s32.totalorder %s165, 0
    %s168 = sadd.s32 %s167, 1
    %s169 = scalar_select %p166, %s167, %s168
    %p172 = pneg %p166
    %p173 = scmp.eq.s32.totalorder %s15, 3
    %p174 = por %p172, %p173
    %p175 = scmp.ne.s32.totalorder %s167, %s170
    %p176 = scmp.eq.s32.totalorder %s15, 0
    %p177 = por %p175, %p176
    %p178 = scmp.ne.s32.totalorder %s167, %s170
    %p179 = scmp.eq.s32.totalorder %s20, 3
    %p180 = por %p178, %p179
    %p181 = scmp.ne.s32.totalorder %s170, %s171
    %p182 = scmp.eq.s32.totalorder %s20, 0
    %p183 = por %p181, %p182
    %p184 = scmp.ne.s32.totalorder %s170, %s171
    %p185 = scmp.eq.s32.totalorder %s21, 3
    %p186 = por %p184, %p185
    %p188 = scmp.ne.s32.totalorder %s171, %s187
    %p189 = scmp.eq.s32.totalorder %s21, 0
    %p190 = por %p188, %p189
    %s191 = ssub.s32 %s23, %s30
    %p192 = scmp.eq.s32.totalorder %s191, 0
    %s194 = sadd.s32 %s193, 1
    %s195 = scalar_select %p192, %s193, %s194
    %p198 = pneg %p192
    %p199 = scmp.eq.s32.totalorder %s15, 3
    %p200 = por %p198, %p199
    %p201 = scmp.ne.s32.totalorder %s193, %s196
    %p202 = scmp.eq.s32.totalorder %s15, 0
    %p203 = por %p201, %p202
    %p204 = scmp.ne.s32.totalorder %s193, %s196
    %p205 = scmp.eq.s32.totalorder %s20, 3
    %p206 = por %p204, %p205
    %p207 = scmp.ne.s32.totalorder %s196, %s197
    %p208 = scmp.eq.s32.totalorder %s20, 0
    %p209 = por %p207, %p208
    %p210 = scmp.ne.s32.totalorder %s196, %s197
    %p211 = scmp.eq.s32.totalorder %s21, 3
    %p212 = por %p210, %p211
    %p214 = scmp.ne.s32.totalorder %s197, %s213
    %p215 = scmp.eq.s32.totalorder %s21, 0
    %p216 = por %p214, %p215
    %s217 = ssub.s32 %s23, %s30
    %p218 = scmp.eq.s32.totalorder %s217, 0
    %s220 = sadd.s32 %s219, 1
    %s221 = scalar_select %p218, %s219, %s220
    %p224 = pneg %p218
    %p225 = scmp.eq.s32.totalorder %s15, 3
    %p226 = por %p224, %p225
    %p227 = scmp.ne.s32.totalorder %s219, %s222
    %p228 = scmp.eq.s32.totalorder %s15, 0
    %p229 = por %p227, %p228
    %p230 = scmp.ne.s32.totalorder %s219, %s222
    %p231 = scmp.eq.s32.totalorder %s20, 3
    %p232 = por %p230, %p231
    %p233 = scmp.ne.s32.totalorder %s222, %s223
    %p234 = scmp.eq.s32.totalorder %s20, 0
    %p235 = por %p233, %p234
    %p236 = scmp.ne.s32.totalorder %s222, %s223
    %p237 = scmp.eq.s32.totalorder %s21, 3
    %p238 = por %p236, %p237
    %p240 = scmp.ne.s32.totalorder %s223, %s239
    %p241 = scmp.eq.s32.totalorder %s21, 0
    %p242 = por %p240, %p241
    %s243 = ssub.s32 %s22, %s34
    %p244 = scmp.eq.s32.totalorder %s243, 0
    %s246 = sadd.s32 %s245, 1
    %s247 = scalar_select %p244, %s245, %s246
    %p250 = pneg %p244
    %p251 = scmp.eq.s32.totalorder %s15, 3
    %p252 = por %p250, %p251
    %p253 = scmp.ne.s32.totalorder %s245, %s248
    %p254 = scmp.eq.s32.totalorder %s15, 0
    %p255 = por %p253, %p254
    %p256 = scmp.ne.s32.totalorder %s245, %s248
    %p257 = scmp.eq.s32.totalorder %s20, 3
    %p258 = por %p256, %p257
    %p259 = scmp.ne.s32.totalorder %s248, %s249
    %p260 = scmp.eq.s32.totalorder %s20, 0
    %p261 = por %p259, %p260
    %p262 = scmp.ne.s32.totalorder %s248, %s249
    %p263 = scmp.eq.s32.totalorder %s21, 3
    %p264 = por %p262, %p263
    %p266 = scmp.ne.s32.totalorder %s249, %s265
    %p267 = scmp.eq.s32.totalorder %s21, 0
    %p268 = por %p266, %p267
    %s269 = ssub.s32 %s23, %s30
    %s270 = ssub.s32 %s22, %s34
    %s271 = sor.u32 %s269, %s270
    %p272 = scmp.eq.s32.totalorder %s271, 0
    %s274 = sadd.s32 %s273, 1
    %s275 = scalar_select %p272, %s273, %s274
    %p278 = pneg %p272
    %p279 = scmp.eq.s32.totalorder %s15, 3
    %p280 = por %p278, %p279
    %p281 = scmp.ne.s32.totalorder %s273, %s276
    %p282 = scmp.eq.s32.totalorder %s15, 0
    %p283 = por %p281, %p282
    %p284 = scmp.ne.s32.totalorder %s273, %s276
    %p285 = scmp.eq.s32.totalorder %s20, 3
    %p286 = por %p284, %p285
    %p287 = scmp.ne.s32.totalorder %s276, %s277
    %p288 = scmp.eq.s32.totalorder %s20, 0
    %p289 = por %p287, %p288
    %p290 = scmp.ne.s32.totalorder %s276, %s277
    %p291 = scmp.eq.s32.totalorder %s21, 3
    %p292 = por %p290, %p291
    %p294 = scmp.ne.s32.totalorder %s277, %s293
    %p295 = scmp.eq.s32.totalorder %s21, 0
    %p296 = por %p294, %p295
    %p297 = scmp.le.s32.totalorder 1, %s15
    %p298 = scmp.lt.s32.totalorder %s15, 5
    %p299 = pnand %p297, %p298
    %p300 = pneg %p299
    // Predicated region
    $region9: #{ptsm_decoder_forward.14} parent=5 // pred_check
      _
    $region10: #{ptsm_decoder_forward.14} parent=5 // pred_check_branch
      %302 = sbr.rel (%p299) target = $region12
    $region11: #{ptsm_decoder_forward.14} parent=5 // pred_region
      %s303 = ssub.s32 %s15, 1
    $region12: #{ptsm_decoder_forward.14} parent=5 // pred_fallthru
      _
    %p304 = scmp.lt.s32.totalorder %s15, 4
    // Predicated region
    $region13: #{ptsm_decoder_forward.14} parent=5 // pred_check
      %p305 = pneg %p304
    $region14: #{ptsm_decoder_forward.14} parent=5 // pred_check_branch
      %307 = sbr.rel (%p305) target = $region16
    $region15: #{ptsm_decoder_forward.14} parent=5 // pred_region
      // Predicated region
      $region17: #{ptsm_decoder_forward.14} parent=15 // pred_check
        %p308 = pneg %p47
      $region18: #{ptsm_decoder_forward.14} parent=15 // pred_check_branch
        %310 = sbr.rel (%p308) target = $region20
      $region19: #{ptsm_decoder_forward.14} parent=15 // pred_region
        %p311 = scmp.lt.s32.totalorder %s22, 1
        %s312 = scalar_select %p311, %s22, 1
        %s313 = smul.addr %s312, 8
        %s314 = scalar_lea.vmem %s0, %s313
      $region20: #{ptsm_decoder_forward.14} parent=15 // pred_fallthru
        _
      // Predicated region
      $region21: #{ptsm_decoder_forward.14} parent=15 // pred_check
        %p315 = pneg %p73
      $region22: #{ptsm_decoder_forward.14} parent=15 // pred_check_branch
        %317 = sbr.rel (%p315) target = $region24
      $region23: #{ptsm_decoder_forward.14} parent=15 // pred_region
        %p318 = scmp.lt.s32.totalorder %s22, 1
        %s319 = scalar_select %p318, %s22, 1
        %s320 = smul.addr %s319, 2
        %s321 = smul.addr %s320, 8
        %s322 = scalar_lea.vmem %s1, %s321
      $region24: #{ptsm_decoder_forward.14} parent=15 // pred_fallthru
        _
      // Predicated region
      $region25: #{ptsm_decoder_forward.14} parent=15 // pred_check
        %p323 = pneg %p99
      $region26: #{ptsm_decoder_forward.14} parent=15 // pred_check_branch
        %325 = sbr.rel (%p323) target = $region28
      $region27: #{ptsm_decoder_forward.14} parent=15 // pred_region
        %p326 = scmp.lt.s32.totalorder %s23, 1
        %s327 = scalar_select %p326, %s23, 1
        %s328 = smul.addr %s327, 4
        %s329 = smul.addr %s328, 4
        %s330 = scalar_lea.vmem %s2, %s329
      $region28: #{ptsm_decoder_forward.14} parent=15 // pred_fallthru
        _
      // Predicated region
      $region29: #{ptsm_decoder_forward.14} parent=15 // pred_check
        %p331 = pneg %p125
      $region30: #{ptsm_decoder_forward.14} parent=15 // pred_check_branch
        %333 = sbr.rel (%p331) target = $region32
      $region31: #{ptsm_decoder_forward.14} parent=15 // pred_region
        %p334 = scmp.lt.s32.totalorder %s23, 1
        %s335 = scalar_select %p334, %s23, 1
        %s336 = smul.addr %s335, 4
        %s337 = smul.addr %s336, 4
        %s338 = scalar_lea.vmem %s3, %s337
      $region32: #{ptsm_decoder_forward.14} parent=15 // pred_fallthru
        _
      // Predicated region
      $region33: #{ptsm_decoder_forward.14} parent=15 // pred_check
        %p339 = pneg %p151
      $region34: #{ptsm_decoder_forward.14} parent=15 // pred_check_branch
        %341 = sbr.rel (%p339) target = $region36
      $region35: #{ptsm_decoder_forward.14} parent=15 // pred_region
        %p342 = scmp.lt.s32.totalorder %s23, 1
        %s343 = scalar_select %p342, %s23, 1
        %s344 = smul.addr %s343, 4
        %s345 = smul.addr %s344, 4
        %s346 = scalar_lea.vmem %s4, %s345
      $region36: #{ptsm_decoder_forward.14} parent=15 // pred_fallthru
        _
      // Predicated region
      $region37: #{ptsm_decoder_forward.14} parent=15 // pred_check
        %p347 = pneg %p177
      $region38: #{ptsm_decoder_forward.14} parent=15 // pred_check_branch
        %349 = sbr.rel (%p347) target = $region40
      $region39: #{ptsm_decoder_forward.14} parent=15 // pred_region
        %p350 = scmp.lt.s32.totalorder %s23, 1
        %s351 = scalar_select %p350, %s23, 1
        %s352 = scalar_lea.vmem %s5, %s351
      $region40: #{ptsm_decoder_forward.14} parent=15 // pred_fallthru
        _
      // Predicated region
      $region41: #{ptsm_decoder_forward.14} parent=15 // pred_check
        %p353 = pneg %p203
      $region42: #{ptsm_decoder_forward.14} parent=15 // pred_check_branch
        %355 = sbr.rel (%p353) target = $region44
      $region43: #{ptsm_decoder_forward.14} parent=15 // pred_region
        %p356 = scmp.lt.s32.totalorder %s23, 1
        %s357 = scalar_select %p356, %s23, 1
        %s358 = scalar_lea.vmem %s6, %s357
      $region44: #{ptsm_decoder_forward.14} parent=15 // pred_fallthru
        _
      // Predicated region
      $region45: #{ptsm_decoder_forward.14} parent=15 // pred_check
        %p359 = pneg %p229
      $region46: #{ptsm_decoder_forward.14} parent=15 // pred_check_branch
        %361 = sbr.rel (%p359) target = $region48
      $region47: #{ptsm_decoder_forward.14} parent=15 // pred_region
        %p362 = scmp.lt.s32.totalorder %s23, 1
        %s363 = scalar_select %p362, %s23, 1
        %s364 = scalar_lea.vmem %s7, %s363
      $region48: #{ptsm_decoder_forward.14} parent=15 // pred_fallthru
        _
      // Predicated region
      $region49: #{ptsm_decoder_forward.14} parent=15 // pred_check
        %p365 = pneg %p255
      $region50: #{ptsm_decoder_forward.14} parent=15 // pred_check_branch
        %367 = sbr.rel (%p365) target = $region52
      $region51: #{ptsm_decoder_forward.14} parent=15 // pred_region
        %p368 = scmp.lt.s32.totalorder %s22, 1
        %s369 = scalar_select %p368, %s22, 1
        %s370 = scalar_lea.vmem %s8, %s369
      $region52: #{ptsm_decoder_forward.14} parent=15 // pred_fallthru
        _
    $region16: #{ptsm_decoder_forward.14} parent=5 // pred_fallthru
      _
    %p371 = scmp.le.s32.totalorder 1, %s15
    %p372 = scmp.lt.s32.totalorder %s15, 5
    %p373 = pnand %p371, %p372
    %p374 = pneg %p373
    // Predicated region
    $region53: #{ptsm_decoder_forward.14} parent=5 // pred_check
      _
    $region54: #{ptsm_decoder_forward.14} parent=5 // pred_check_branch
      %376 = sbr.rel (%p373) target = $region56
    $region55: #{ptsm_decoder_forward.14} parent=5 // pred_region
      %s377 = ssub.s32 %s15, 1
      %p378 = scmp.lt.s32.totalorder %s24, 1
      %s379 = scalar_select %p378, %s24, 1
      %s380 = smul.addr %s379, 8
      %s381 = scalar_lea.vmem %s0, %s380
      %p382 = pneg %p53
      %p383 = pneg %p50
      %p384 = scmp.lt.s32.totalorder %s24, 1
      %s385 = scalar_select %p384, %s24, 1
      %s386 = smul.addr %s385, 2
      %s387 = smul.addr %s386, 8
      %s388 = scalar_lea.vmem %s1, %s387
      %p389 = pneg %p79
      %p390 = pneg %p76
      %p391 = scmp.lt.s32.totalorder %s25, 1
      %s392 = scalar_select %p391, %s25, 1
      %s393 = smul.addr %s392, 4
      %s394 = smul.addr %s393, 4
      %s395 = scalar_lea.vmem %s2, %s394
      %p396 = pneg %p105
      %p397 = pneg %p102
      %p398 = scmp.lt.s32.totalorder %s25, 1
      %s399 = scalar_select %p398, %s25, 1
      %s400 = smul.addr %s399, 4
      %s401 = smul.addr %s400, 4
      %s402 = scalar_lea.vmem %s3, %s401
      %p403 = pneg %p131
      %p404 = pneg %p128
      %p405 = scmp.lt.s32.totalorder %s25, 1
      %s406 = scalar_select %p405, %s25, 1
      %s407 = smul.addr %s406, 4
      %s408 = smul.addr %s407, 4
      %s409 = scalar_lea.vmem %s4, %s408
      %p410 = pneg %p157
      %p411 = pneg %p154
      %p412 = scmp.lt.s32.totalorder %s25, 1
      %s413 = scalar_select %p412, %s25, 1
      %s414 = scalar_lea.vmem %s5, %s413
      %p415 = pneg %p183
      %p416 = pneg %p180
      %p417 = scmp.lt.s32.totalorder %s25, 1
      %s418 = scalar_select %p417, %s25, 1
      %s419 = scalar_lea.vmem %s6, %s418
      %p420 = pneg %p209
      %p421 = pneg %p206
      %p422 = scmp.lt.s32.totalorder %s25, 1
      %s423 = scalar_select %p422, %s25, 1
      %s424 = scalar_lea.vmem %s7, %s423
      %p425 = pneg %p235
      %p426 = pneg %p232
      %p427 = scmp.lt.s32.totalorder %s24, 1
      %s428 = scalar_select %p427, %s24, 1
      %s429 = scalar_lea.vmem %s8, %s428
      %p430 = pneg %p261
      %p431 = pneg %p258
      %p432 = pneg %p289
      %p433 = pneg %p286
      %p434 = scmp.lt.s32.totalorder %s25, 1
      %s435 = scalar_select %p434, %s25, 1
      %p436 = scmp.lt.s32.totalorder %s24, 1
      %s437 = scalar_select %p436, %s24, 1
      %s438 = smul.addr %s435, 2
      %s439 = sadd.s32 %s437, %s438
      %s440 = smul.addr %s439, 8
      %s441 = scalar_lea.vmem %s9, %s440
      %p442 = scmp.lt.s32.totalorder %s24, 1
      %s443 = scalar_select %p442, %s24, 1
      %s444 = smul.addr %s443, 8
      %s445 = scalar_lea.vmem %s0, %s444
      %p446 = scmp.lt.s32.totalorder %s24, 1
      %s447 = scalar_select %p446, %s24, 1
      %s448 = smul.addr %s447, 2
      %s449 = smul.addr %s448, 8
      %s450 = scalar_lea.vmem %s1, %s449
      %p451 = scmp.lt.s32.totalorder %s25, 1
      %s452 = scalar_select %p451, %s25, 1
      %s453 = smul.addr %s452, 4
      %s454 = smul.addr %s453, 4
      %s455 = scalar_lea.vmem %s2, %s454
      %p456 = scmp.lt.s32.totalorder %s25, 1
      %s457 = scalar_select %p456, %s25, 1
      %s458 = smul.addr %s457, 4
      %s459 = smul.addr %s458, 4
      %s460 = scalar_lea.vmem %s3, %s459
      %p461 = scmp.lt.s32.totalorder %s25, 1
      %s462 = scalar_select %p461, %s25, 1
      %s463 = smul.addr %s462, 4
      %s464 = smul.addr %s463, 4
      %s465 = scalar_lea.vmem %s4, %s464
      %p466 = scmp.lt.s32.totalorder %s25, 1
      %s467 = scalar_select %p466, %s25, 1
      %s468 = scalar_lea.vmem %s5, %s467
      %p469 = scmp.lt.s32.totalorder %s25, 1
      %s470 = scalar_select %p469, %s25, 1
      %s471 = scalar_lea.vmem %s6, %s470
      %p472 = scmp.lt.s32.totalorder %s25, 1
      %s473 = scalar_select %p472, %s25, 1
      %s474 = scalar_lea.vmem %s7, %s473
      %p475 = scmp.lt.s32.totalorder %s24, 1
      %s476 = scalar_select %p475, %s24, 1
      %s477 = scalar_lea.vmem %s8, %s476
      %p478 = scmp.lt.s32.totalorder %s25, 1
      %s479 = scalar_select %p478, %s25, 1
      %p480 = scmp.lt.s32.totalorder %s24, 1
      %s481 = scalar_select %p480, %s24, 1
      %s482 = smul.addr %s479, 2
      %s483 = sadd.s32 %s481, %s482
      %s484 = smul.addr %s483, 8
      %s485 = scalar_lea.vmem %s9, %s484
      %v487 = vld [vmem:[%s445] sm:$0xff]
      %v488 = vpack.c.bf16 %v487, %v487
      %v489 = vld [vmem:[%s450] sm:$0xff]
      %v490 = vld [vmem:[%s450 + $0x8] sm:$0x3]
      %v491 = vpack.c.bf16 %v490, %v489
      %v492 = vld [vmem:[%s455] sm:$0xf]
      %v493 = vld [vmem:[%s455 + $0x4] sm:$0xf]
      %v494 = vld [vmem:[%s455 + $0x8] sm:$0xf]
      %v495 = vld [vmem:[%s455 + $0xc] sm:$0xf]
      %v496 = vld [vmem:[%s468] sm:$0x1]
      %v498 = vlaneseq
      %v499 = vshrl.u32 %v498, 7
      %v500 = vsub.s32 0, %v499
      %v501 = vrot.slane %v496, %v500
      %v507 = vunpack.c.l.b16 %v492
      %v508 = vunpack.c.l.b16 %v493
      %v509 = vunpack.c.l.b16 %v494
      %v510 = vunpack.c.l.b16 %v495
      %v511 = vpack.c.b16 %v508, %v507
      %v512 = vpack.c.b16 %v510, %v509
      %vm515 = vcmask 261120
      %v517 = vsel %vm515, %v488, 0
      %519 = vmatprep.subr.bf16.mxu0 0
      %520 = vmatpush1.bf16.msra.mxu0 %v511
      %521 = vmatprep.subr.bf16.mxu0 0
      %522 = vmatpush1.bf16.msra.mxu0 %v512
      %523 = vmatprep.subr.bf16.mxu0 0
      %524 = vmatpush1.bf16.msra.mxu0 0
      %525 = vmatprep.subr.bf16.mxu0 0
      %526 = vmatpush1.bf16.msra.mxu0 0
      %527 = vmatprep.subr.bf16.mxu0 0
      %528 = vmatpush1.bf16.msra.mxu0 0
      %529 = vmatprep.subr.bf16.mxu0 0
      %530 = vmatpush1.bf16.msra.mxu0 0
      %531 = vmatprep.subr.bf16.mxu0 0
      %532 = vmatpush1.bf16.msra.mxu0 0
      %533 = vmatprep.subr.bf16.mxu0 0
      %534 = vmatpush1.bf16.msra.mxu0 0
      %535 = vmatprep.subr.bf16.mxu0 0
      %536 = vmatpush1.bf16.msra.mxu0 0
      %537 = vmatprep.subr.bf16.mxu0 0
      %538 = vmatpush1.bf16.msra.mxu0 0
      %539 = vmatprep.subr.bf16.mxu0 0
      %540 = vmatpush1.bf16.msra.mxu0 0
      %541 = vmatprep.subr.bf16.mxu0 0
      %542 = vmatpush1.bf16.msra.mxu0 0
      %543 = vmatprep.subr.bf16.mxu0 0
      %544 = vmatpush1.bf16.msra.mxu0 0
      %545 = vmatprep.subr.bf16.mxu0 0
      %546 = vmatpush1.bf16.msra.mxu0 0
      %547 = vmatprep.subr.bf16.mxu0 0
      %548 = vmatpush1.bf16.msra.mxu0 0
      %549 = vmatprep.subr.bf16.mxu0 0
      %550 = vmatpush1.bf16.msra.mxu0 0
      %551 = vmatprep.mubr.bf16.mxu0 0
      %552 = vmatmul.mubr.bf16.gmra.mrb[0].mxu0 %v517
      %v553 = vpop.f32.mrb[0].mxu0
      %v554 = vadd.f32 %v501, %v553
      %v555 = vpop.f32.mrb[0].mxu0
      %v556 = vpop.f32.mrb[0].mxu0
      %v557 = vpop.f32.mrb[0].mxu0
      %558 = vdwg.mxu0
      %v559 = vld [vmem:[%s460] sm:$0xf]
      %v560 = vld [vmem:[%s460 + $0x4] sm:$0xf]
      %v561 = vld [vmem:[%s460 + $0x8] sm:$0xf]
      %v562 = vld [vmem:[%s460 + $0xc] sm:$0xf]
      %v563 = vld [vmem:[%s471] sm:$0x1]
      %v565 = vlaneseq
      %v566 = vshrl.u32 %v565, 7
      %v567 = vsub.s32 0, %v566
      %v568 = vrot.slane %v563, %v567
      %v574 = vunpack.c.l.b16 %v559
      %v575 = vunpack.c.l.b16 %v560
      %v576 = vunpack.c.l.b16 %v561
      %v577 = vunpack.c.l.b16 %v562
      %v578 = vpack.c.b16 %v575, %v574
      %v579 = vpack.c.b16 %v577, %v576
      %v583 = vsel %vm515, %v491, 0
      %585 = vmatprep.subr.bf16.mxu0 0
      %586 = vmatpush1.bf16.msra.mxu0 %v578
      %587 = vmatprep.subr.bf16.mxu0 0
      %588 = vmatpush1.bf16.msra.mxu0 %v579
      %589 = vmatprep.subr.bf16.mxu0 0
      %590 = vmatpush1.bf16.msra.mxu0 0
      %591 = vmatprep.subr.bf16.mxu0 0
      %592 = vmatpush1.bf16.msra.mxu0 0
      %593 = vmatprep.subr.bf16.mxu0 0
      %594 = vmatpush1.bf16.msra.mxu0 0
      %595 = vmatprep.subr.bf16.mxu0 0
      %596 = vmatpush1.bf16.msra.mxu0 0
      %597 = vmatprep.subr.bf16.mxu0 0
      %598 = vmatpush1.bf16.msra.mxu0 0
      %599 = vmatprep.subr.bf16.mxu0 0
      %600 = vmatpush1.bf16.msra.mxu0 0
      %601 = vmatprep.subr.bf16.mxu0 0
      %602 = vmatpush1.bf16.msra.mxu0 0
      %603 = vmatprep.subr.bf16.mxu0 0
      %604 = vmatpush1.bf16.msra.mxu0 0
      %605 = vmatprep.subr.bf16.mxu0 0
      %606 = vmatpush1.bf16.msra.mxu0 0
      %607 = vmatprep.subr.bf16.mxu0 0
      %608 = vmatpush1.bf16.msra.mxu0 0
      %609 = vmatprep.subr.bf16.mxu0 0
      %610 = vmatpush1.bf16.msra.mxu0 0
      %611 = vmatprep.subr.bf16.mxu0 0
      %612 = vmatpush1.bf16.msra.mxu0 0
      %613 = vmatprep.subr.bf16.mxu0 0
      %614 = vmatpush1.bf16.msra.mxu0 0
      %615 = vmatprep.subr.bf16.mxu0 0
      %616 = vmatpush1.bf16.msra.mxu0 0
      %617 = vmatprep.mubr.bf16.mxu0 0
      %618 = vmatmul.mubr.bf16.gmra.mrb[0].mxu0 %v583
      %v619 = vpop.f32.mrb[0].mxu0
      %v620 = vadd.f32 %v568, %v619
      %v621 = vpop.f32.mrb[0].mxu0
      %v622 = vpop.f32.mrb[0].mxu0
      %v623 = vadd.f32 %v568, %v622
      %v624 = vpop.f32.mrb[0].mxu0
      %625 = vdwg.mxu0
      %v626 = vld [vmem:[%s465] sm:$0xf]
      %v627 = vld [vmem:[%s465 + $0x4] sm:$0xf]
      %v628 = vld [vmem:[%s465 + $0x8] sm:$0xf]
      %v629 = vld [vmem:[%s465 + $0xc] sm:$0xf]
      %v630 = vld [vmem:[%s474] sm:$0x1]
      %v632 = vlaneseq
      %v633 = vshrl.u32 %v632, 7
      %v634 = vsub.s32 0, %v633
      %v635 = vrot.slane %v630, %v634
      %v641 = vunpack.c.l.b16 %v626
      %v642 = vunpack.c.l.b16 %v627
      %v643 = vunpack.c.l.b16 %v628
      %v644 = vunpack.c.l.b16 %v629
      %v645 = vpack.c.b16 %v642, %v641
      %v646 = vpack.c.b16 %v644, %v643
      %649 = vmatprep.subr.bf16.mxu0 0
      %650 = vmatpush1.bf16.msra.mxu0 %v645
      %651 = vmatprep.subr.bf16.mxu0 0
      %652 = vmatpush1.bf16.msra.mxu0 %v646
      %653 = vmatprep.subr.bf16.mxu0 0
      %654 = vmatpush1.bf16.msra.mxu0 0
      %655 = vmatprep.subr.bf16.mxu0 0
      %656 = vmatpush1.bf16.msra.mxu0 0
      %657 = vmatprep.subr.bf16.mxu0 0
      %658 = vmatpush1.bf16.msra.mxu0 0
      %659 = vmatprep.subr.bf16.mxu0 0
      %660 = vmatpush1.bf16.msra.mxu0 0
      %661 = vmatprep.subr.bf16.mxu0 0
      %662 = vmatpush1.bf16.msra.mxu0 0
      %663 = vmatprep.subr.bf16.mxu0 0
      %664 = vmatpush1.bf16.msra.mxu0 0
      %665 = vmatprep.subr.bf16.mxu0 0
      %666 = vmatpush1.bf16.msra.mxu0 0
      %667 = vmatprep.subr.bf16.mxu0 0
      %668 = vmatpush1.bf16.msra.mxu0 0
      %669 = vmatprep.subr.bf16.mxu0 0
      %670 = vmatpush1.bf16.msra.mxu0 0
      %671 = vmatprep.subr.bf16.mxu0 0
      %672 = vmatpush1.bf16.msra.mxu0 0
      %673 = vmatprep.subr.bf16.mxu0 0
      %674 = vmatpush1.bf16.msra.mxu0 0
      %675 = vmatprep.subr.bf16.mxu0 0
      %676 = vmatpush1.bf16.msra.mxu0 0
      %677 = vmatprep.subr.bf16.mxu0 0
      %678 = vmatpush1.bf16.msra.mxu0 0
      %679 = vmatprep.subr.bf16.mxu0 0
      %680 = vmatpush1.bf16.msra.mxu0 0
      %681 = vmatprep.mubr.bf16.mxu0 0
      %682 = vmatmul.mubr.bf16.gmra.mrb[0].mxu0 %v583
      %v683 = vpop.f32.mrb[0].mxu0
      %v684 = vadd.f32 %v635, %v683
      %v685 = vpop.f32.mrb[0].mxu0
      %v686 = vpop.f32.mrb[0].mxu0
      %v687 = vadd.f32 %v635, %v686
      %v688 = vpop.f32.mrb[0].mxu0
      %689 = vdwg.mxu0
      %v690 = vpack.c.bf16 %v554, %v554
      %v691 = vpack.c.bf16 %v623, %v620
      %v692 = vld [vmem:[%s477] sm:$0x1]
      %v694 = vlaneseq
      %v695 = vshrl.u32 %v694, 7
      %v696 = vsub.s32 0, %v695
      %v697 = vrot.slane %v692, %v696
      %vm699 = vcmask 130048
      %v701 = vsel %vm699, %v690, 0
      %v704 = vsel %vm699, %v691, 0
      %706 = vmatprep.subr.bf16.mxu0 0
      %707 = vmatpush1.bf16.xpose.msra.mxu0 %v704
      %708 = vmatprep.subr.bf16.mxu0 0
      %709 = vmatpush1.bf16.xpose.msra.mxu0 0
      %710 = vmatprep.subr.bf16.mxu0 0
      %711 = vmatpush1.bf16.xpose.msra.mxu0 0
      %712 = vmatprep.subr.bf16.mxu0 0
      %713 = vmatpush1.bf16.xpose.msra.mxu0 0
      %714 = vmatprep.subr.bf16.mxu0 0
      %715 = vmatpush1.bf16.xpose.msra.mxu0 0
      %716 = vmatprep.subr.bf16.mxu0 0
      %717 = vmatpush1.bf16.xpose.msra.mxu0 0
      %718 = vmatprep.subr.bf16.mxu0 0
      %719 = vmatpush1.bf16.xpose.msra.mxu0 0
      %720 = vmatprep.subr.bf16.mxu0 0
      %721 = vmatpush1.bf16.xpose.msra.mxu0 0
      %722 = vmatprep.subr.bf16.mxu0 0
      %723 = vmatpush1.bf16.xpose.msra.mxu0 0
      %724 = vmatprep.subr.bf16.mxu0 0
      %725 = vmatpush1.bf16.xpose.msra.mxu0 0
      %726 = vmatprep.subr.bf16.mxu0 0
      %727 = vmatpush1.bf16.xpose.msra.mxu0 0
      %728 = vmatprep.subr.bf16.mxu0 0
      %729 = vmatpush1.bf16.xpose.msra.mxu0 0
      %730 = vmatprep.subr.bf16.mxu0 0
      %731 = vmatpush1.bf16.xpose.msra.mxu0 0
      %732 = vmatprep.subr.bf16.mxu0 0
      %733 = vmatpush1.bf16.xpose.msra.mxu0 0
      %734 = vmatprep.subr.bf16.mxu0 0
      %735 = vmatpush1.bf16.xpose.msra.mxu0 0
      %736 = vmatprep.subr.bf16.mxu0 0
      %737 = vmatpush1.bf16.xpose.msra.mxu0 0
      %738 = vmatprep.mubr.bf16.mxu0 0
      %739 = vmatmul.mubr.bf16.gmra.mrb[0].mxu0 %v701
      %v740 = vpop.f32.mrb[0].mxu0
      %v741 = vadd.f32 %v697, %v740
      %v742 = vpop.f32.mrb[0].mxu0
      %v743 = vpop.f32.mrb[0].mxu0
      %v744 = vpop.f32.mrb[0].mxu0
      %745 = vdwg.mxu0
      %vm746 = vcmask 80896
      %v747 = vsel %vm746, %v741, -inf
      %748 = vmax.xlane.f32.xlu0 %v747
      %v749 = vpop.xlane.xlu0 %748
      %v750 = vsub.f32 %v741, %v749
      %v751 = vmul.f32 %v750, 1.442695
      %v752 = vpow.pop %v751
      %v753 = vsel %vm746, %v752, 0.0
      %754 = vadd.xlane.f32.xlu0 %v753
      %v755 = vpop.xlane.xlu0 %754
      %v756 = vrcp.pop %v755
      %v757 = vmul.f32 %v752, %v756
      %v758 = vpack.c.bf16 %v757, %v757
      %v759 = vpack.c.bf16 %v687, %v684
      %v761 = vsel %vm746, %v758, 0
      %vm763 = vcmask 1044480
      %v765 = vsel %vm763, %v759, 0
      %767 = vmatprep.subr.bf16.mxu0 0
      %768 = vmatpush1.bf16.msra.mxu0 %v765
      %769 = vmatprep.subr.bf16.mxu0 0
      %770 = vmatpush1.bf16.msra.mxu0 0
      %771 = vmatprep.subr.bf16.mxu0 0
      %772 = vmatpush1.bf16.msra.mxu0 0
      %773 = vmatprep.subr.bf16.mxu0 0
      %774 = vmatpush1.bf16.msra.mxu0 0
      %775 = vmatprep.subr.bf16.mxu0 0
      %776 = vmatpush1.bf16.msra.mxu0 0
      %777 = vmatprep.subr.bf16.mxu0 0
      %778 = vmatpush1.bf16.msra.mxu0 0
      %779 = vmatprep.subr.bf16.mxu0 0
      %780 = vmatpush1.bf16.msra.mxu0 0
      %781 = vmatprep.subr.bf16.mxu0 0
      %782 = vmatpush1.bf16.msra.mxu0 0
      %783 = vmatprep.subr.bf16.mxu0 0
      %784 = vmatpush1.bf16.msra.mxu0 0
      %785 = vmatprep.subr.bf16.mxu0 0
      %786 = vmatpush1.bf16.msra.mxu0 0
      %787 = vmatprep.subr.bf16.mxu0 0
      %788 = vmatpush1.bf16.msra.mxu0 0
      %789 = vmatprep.subr.bf16.mxu0 0
      %790 = vmatpush1.bf16.msra.mxu0 0
      %791 = vmatprep.subr.bf16.mxu0 0
      %792 = vmatpush1.bf16.msra.mxu0 0
      %793 = vmatprep.subr.bf16.mxu0 0
      %794 = vmatpush1.bf16.msra.mxu0 0
      %795 = vmatprep.subr.bf16.mxu0 0
      %796 = vmatpush1.bf16.msra.mxu0 0
      %797 = vmatprep.subr.bf16.mxu0 0
      %798 = vmatpush1.bf16.msra.mxu0 0
      %799 = vmatprep.mubr.bf16.mxu0 0
      %800 = vmatmul.mubr.bf16.gmra.mrb[0].mxu0 %v761
      %v801 = vpop.f32.mrb[0].mxu0
      %v802 = vadd.f32 0.0, %v801
      %v803 = vpop.f32.mrb[0].mxu0
      %v804 = vpop.f32.mrb[0].mxu0
      %v805 = vpop.f32.mrb[0].mxu0
      %806 = vdwg.mxu0
      %807 = vst.msk [vmem:[%s485] sm:$0xff] %vm699, %v802
      %p808 = scmp.lt.s32.totalorder %s25, 1
      %s809 = scalar_select %p808, %s25, 1
      %p810 = scmp.lt.s32.totalorder %s24, 1
      %s811 = scalar_select %p810, %s24, 1
      %s812 = smul.addr %s809, 2
      %s813 = sadd.s32 %s811, %s812
      %s814 = smul.addr %s813, 8
      %s815 = scalar_lea.vmem %s9, %s814
      // Predicated region
      $region57: #{ptsm_decoder_forward.14} parent=55 // pred_check
        %p816 = pneg %p286
      $region58: #{ptsm_decoder_forward.14} parent=55 // pred_check_branch
        %818 = sbr.rel (%p816) target = $region60
      $region59: #{ptsm_decoder_forward.14} parent=55 // pred_region
        _
      $region60: #{ptsm_decoder_forward.14} parent=55 // pred_fallthru
        _
    $region56: #{ptsm_decoder_forward.14} parent=5 // pred_fallthru
      _
    %p819 = scmp.le.s32.totalorder 2, %s15
    // Predicated region
    $region61: #{ptsm_decoder_forward.14} parent=5 // pred_check
      %p820 = pneg %p819
    $region62: #{ptsm_decoder_forward.14} parent=5 // pred_check_branch
      %822 = sbr.rel (%p820) target = $region64
    $region63: #{ptsm_decoder_forward.14} parent=5 // pred_region
      %s823 = ssub.s32 %s15, 2
      // Predicated region
      $region65: #{ptsm_decoder_forward.14} parent=63 // pred_check
        %p824 = pneg %p292
      $region66: #{ptsm_decoder_forward.14} parent=63 // pred_check_branch
        %826 = sbr.rel (%p824) target = $region68
      $region67: #{ptsm_decoder_forward.14} parent=63 // pred_region
        %p827 = scmp.lt.s32.totalorder %s27, 1
        %s828 = scalar_select %p827, %s27, 1
        %p829 = scmp.lt.s32.totalorder %s26, 1
        %s830 = scalar_select %p829, %s26, 1
        %s831 = smul.addr %s828, 2
        %s832 = sadd.s32 %s830, %s831
        %s833 = smul.addr %s832, 8
        %s834 = scalar_lea.vmem %s9, %s833
      $region68: #{ptsm_decoder_forward.14} parent=63 // pred_fallthru
        _
    $region64: #{ptsm_decoder_forward.14} parent=5 // pred_fallthru
      _
  $region6: #{ptsm_decoder_forward.14} parent=0 // loop_footer
    %s19 = sadd.s32 1, %s15
  $region7: #{ptsm_decoder_forward.14} parent=0 // loop_footer_branch
    %14 = sbr.rel target = $region3
  $region8: #{ptsm_decoder_forward.14} parent=0 // loop_exit
    _

// kernel: ptsm_decoder_forward.23
$region0: #{ptsm_decoder_forward.23}
  #allocation0 [shape = 'u32[]', space=smem, size = 0x4, offset = 0x4, fixed_abs, tag = 'smem constant byte address 0x4 - core index']
  #allocation1 [shape = 'u32[144,128]{1,0:T(1,128)}', space=vmem, size = 0x12000, scoped, tag = 'internal scratch']
  %s0 = inlined_call_operand.vmem [shape: f32[16,32], index: 0, kind: input, shape index: {}]
  %s1 = inlined_call_operand.vmem [shape: bf16[32,32], index: 1, kind: input, shape index: {}]
  %s2 = inlined_call_operand.vmem [shape: f32[16,1], index: 2, kind: input, shape index: {}]
  %s3 = inlined_call_operand.hbm [shape: f32[16,32], index: 3, kind: output, shape index: {}]
  %s4 = sld [smem:[#allocation0]]
  $region22: #{ptsm_decoder_forward.23} parent=0
    _
  %s6 = ssub.s32 1, %s4
  %s7 = scalar_select 0, %s6, %s4
  $region1: #{ptsm_decoder_forward.23} parent=0
    #allocation2 [shape = 'u8[8192]{0}', space=vmem, size = 0x2000, scoped, tag = 'output window, operand 0, single buffered']
    #allocation3 [shape = 's32[1]{0}', space=sflag, size = 0x4, scoped, tag = 'scoped memory for ptsm_decoder_forward.23']
    %8 = vsyncpa [#allocation3], 0
    // Predicated region
    $region2: #{ptsm_decoder_forward.23} parent=1 // pred_check
      _
    $region3: #{ptsm_decoder_forward.23} parent=1 // pred_check_branch
      %10 = sbr.rel (0) target = $region5
    $region4: #{ptsm_decoder_forward.23} parent=1 // pred_region
      _
    $region5: #{ptsm_decoder_forward.23} parent=1 // pred_fallthru
      _
    // Predicated region
    $region6: #{ptsm_decoder_forward.23} parent=1 // pred_check
      _
    $region7: #{ptsm_decoder_forward.23} parent=1 // pred_check_branch
      %12 = sbr.rel (0) target = $region9
    $region8: #{ptsm_decoder_forward.23} parent=1 // pred_region
      _
    $region9: #{ptsm_decoder_forward.23} parent=1 // pred_fallthru
      _
    // Predicated region
    $region10: #{ptsm_decoder_forward.23} parent=1 // pred_check
      _
    $region11: #{ptsm_decoder_forward.23} parent=1 // pred_check_branch
      %14 = sbr.rel (0) target = $region13
    $region12: #{ptsm_decoder_forward.23} parent=1 // pred_region
      _
    $region13: #{ptsm_decoder_forward.23} parent=1 // pred_fallthru
      _
    %v16 = vld [vmem:[%s0] sm:$0xff]
    %v17 = vld [vmem:[%s0 + $0x8] sm:$0xff]
    %v18 = vpack.c.bf16 %v17, %v16
    %v19 = vld [vmem:[%s1] sm:$0xf]
    %v20 = vld [vmem:[%s1 + $0x4] sm:$0xf]
    %v21 = vld [vmem:[%s1 + $0x8] sm:$0xf]
    %v22 = vld [vmem:[%s1 + $0xc] sm:$0xf]
    %v27 = vunpack.c.l.b16 %v19
    %v28 = vunpack.c.l.b16 %v20
    %v29 = vunpack.c.l.b16 %v21
    %v30 = vunpack.c.l.b16 %v22
    %v31 = vpack.c.b16 %v28, %v27
    %v32 = vpack.c.b16 %v30, %v29
    %vm33 = vcmask 261120
    %v35 = vsel %vm33, %v18, 0
    %v38 = vsel %vm33, %v31, 0
    %v41 = vsel %vm33, %v32, 0
    %43 = vmatprep.subr.bf16.mxu0 0
    %44 = vmatpush1.bf16.xpose.msra.mxu0 %v38
    %45 = vmatprep.subr.bf16.mxu0 0
    %46 = vmatpush1.bf16.xpose.msra.mxu0 %v41
    %47 = vmatprep.subr.bf16.mxu0 0
    %48 = vmatpush1.bf16.xpose.msra.mxu0 0
    %49 = vmatprep.subr.bf16.mxu0 0
    %50 = vmatpush1.bf16.xpose.msra.mxu0 0
    %51 = vmatprep.subr.bf16.mxu0 0
    %52 = vmatpush1.bf16.xpose.msra.mxu0 0
    %53 = vmatprep.subr.bf16.mxu0 0
    %54 = vmatpush1.bf16.xpose.msra.mxu0 0
    %55 = vmatprep.subr.bf16.mxu0 0
    %56 = vmatpush1.bf16.xpose.msra.mxu0 0
    %57 = vmatprep.subr.bf16.mxu0 0
    %58 = vmatpush1.bf16.xpose.msra.mxu0 0
    %59 = vmatprep.subr.bf16.mxu0 0
    %60 = vmatpush1.bf16.xpose.msra.mxu0 0
    %61 = vmatprep.subr.bf16.mxu0 0
    %62 = vmatpush1.bf16.xpose.msra.mxu0 0
    %63 = vmatprep.subr.bf16.mxu0 0
    %64 = vmatpush1.bf16.xpose.msra.mxu0 0
    %65 = vmatprep.subr.bf16.mxu0 0
    %66 = vmatpush1.bf16.xpose.msra.mxu0 0
    %67 = vmatprep.subr.bf16.mxu0 0
    %68 = vmatpush1.bf16.xpose.msra.mxu0 0
    %69 = vmatprep.subr.bf16.mxu0 0
    %70 = vmatpush1.bf16.xpose.msra.mxu0 0
    %71 = vmatprep.subr.bf16.mxu0 0
    %72 = vmatpush1.bf16.xpose.msra.mxu0 0
    %73 = vmatprep.subr.bf16.mxu0 0
    %74 = vmatpush1.bf16.xpose.msra.mxu0 0
    %75 = vmatprep.mubr.bf16.mxu0 0
    %76 = vmatmul.mubr.bf16.gmra.mrb[0].mxu0 %v35
    %v77 = vpop.f32.mrb[0].mxu0
    %v78 = vadd.f32 0.0, %v77
    %v79 = vpop.f32.mrb[0].mxu0
    %v80 = vpop.f32.mrb[0].mxu0
    %v81 = vadd.f32 0.0, %v80
    %v82 = vpop.f32.mrb[0].mxu0
    %83 = vdwg.mxu0
    %v84 = vld [vmem:[%s2] sm:$0xff]
    %v85 = vld [vmem:[%s2 + $0x8] sm:$0xff]
    %87 = vset.pattern.permute.xlu0 0
    %88 = vperm.xlu0 %87, %v84
    %v89 = vpop.permute.xlu0 %88
    %92 = vset.pattern.permute.xlu0 0
    %93 = vperm.xlu0 %92, %v85
    %v94 = vpop.permute.xlu0 %93
    %v96 = vsub.f32 %v78, %v89
    %v97 = vsub.f32 %v81, %v94
    %98 = vst.msk [vmem:[#allocation2] sm:$0xff] %vm33, %v96
    %99 = vst.msk [vmem:[#allocation2 + $0x8] sm:$0xff] %vm33, %v97
    // Predicated region
    $region14: #{ptsm_decoder_forward.23} parent=1 // pred_check
      _
    $region15: #{ptsm_decoder_forward.23} parent=1 // pred_check_branch
      %101 = sbr.rel (0) target = $region17
    $region16: #{ptsm_decoder_forward.23} parent=1 // pred_region
      %s103 = ssub.s32 256, 256
      %104 = vsyncadd [#allocation3], %s103
      %s105 = sshll.u32 [#allocation2], 4
      %s106 = int_to_ptr.vmem [resolvable:$true] %s105
      %111 = dma.vmem_to_hbm [thread:$0]  %s106, 256, %s3, [#allocation3], 128, 128, 8
    $region17: #{ptsm_decoder_forward.23} parent=1 // pred_fallthru
      _
    // Predicated region
    $region18: #{ptsm_decoder_forward.23} parent=1 // pred_check
      _
    $region19: #{ptsm_decoder_forward.23} parent=1 // pred_check_branch
      %113 = sbr.rel (0) target = $region21
    $region20: #{ptsm_decoder_forward.23} parent=1 // pred_region
      %114 = dma.done [#allocation3], 256
    $region21: #{ptsm_decoder_forward.23} parent=1 // pred_fallthru
      _
    %115 = vsyncpa [#allocation3], 1

// kernel: ptsm_decoder_forward.22
$region0: #{ptsm_decoder_forward.22}
  #allocation0 [shape = 'u32[]', space=smem, size = 0x4, offset = 0x4, fixed_abs, tag = 'smem constant byte address 0x4 - core index']
  #allocation1 [shape = 'u32[144,128]{1,0:T(1,128)}', space=vmem, size = 0x12000, scoped, tag = 'internal scratch']
  #allocation2 [shape = 'f32[16,1]{1,0:T(8,128)}', space=vmem, size = 0x2000, scoped, tag = 'scratch operand']
  #allocation3 [shape = 'f32[16,1]{1,0:T(8,128)}', space=vmem, size = 0x2000, scoped, tag = 'scratch operand']
  %s0 = inlined_call_operand.vmem [shape: f32[16,32], index: 0, kind: input, shape index: {}]
  %s1 = inlined_call_operand.vmem [shape: bf16[32,32], index: 1, kind: input, shape index: {}]
  %s2 = inlined_call_operand.vmem [shape: f32[16,1], index: 2, kind: output, shape index: {}]
  %s3 = sld [smem:[#allocation0]]
  $region26: #{ptsm_decoder_forward.22} parent=0
    _
  %s5 = ssub.s32 1, %s3
  %s6 = scalar_select 0, %s5, %s3
  // Predicated region
  $region2: #{ptsm_decoder_forward.22} parent=0 // pred_check
    _
  $region3: #{ptsm_decoder_forward.22} parent=0 // pred_check_branch
    %8 = sbr.rel (0) target = $region5
  $region4: #{ptsm_decoder_forward.22} parent=0 // pred_region
    _
  $region5: #{ptsm_decoder_forward.22} parent=0 // pred_fallthru
    _
  // Predicated region
  $region6: #{ptsm_decoder_forward.22} parent=0 // pred_check
    _
  $region7: #{ptsm_decoder_forward.22} parent=0 // pred_check_branch
    %10 = sbr.rel (0) target = $region9
  $region8: #{ptsm_decoder_forward.22} parent=0 // pred_region
    _
  $region9: #{ptsm_decoder_forward.22} parent=0 // pred_fallthru
    _
  %p12 = scmp.eq.s32.totalorder 0, 0
  // Predicated region
  $region10: #{ptsm_decoder_forward.22} parent=0 // pred_check
    %p13 = pneg %p12
  $region11: #{ptsm_decoder_forward.22} parent=0 // pred_check_branch
    %15 = sbr.rel (%p13) target = $region13
  $region12: #{ptsm_decoder_forward.22} parent=0 // pred_region
    %vm16 = vcmask 7168
    %17 = vst.msk [vmem:[#allocation2] sm:$0xff] %vm16, -1e+30
    %18 = vst.msk [vmem:[#allocation2 + $0x8] sm:$0xff] %vm16, -1e+30
    %19 = vst.msk [vmem:[#allocation3] sm:$0xff] %vm16, 0.0
    %20 = vst.msk [vmem:[#allocation3 + $0x8] sm:$0xff] %vm16, 0.0
  $region13: #{ptsm_decoder_forward.22} parent=0 // pred_fallthru
    _
  %v21 = vld [vmem:[%s0] sm:$0xff]
  %v22 = vld [vmem:[%s0 + $0x8] sm:$0xff]
  %v23 = vpack.c.bf16 %v22, %v21
  %v24 = vld [vmem:[%s1] sm:$0xf]
  %v25 = vld [vmem:[%s1 + $0x4] sm:$0xf]
  %v26 = vld [vmem:[%s1 + $0x8] sm:$0xf]
  %v27 = vld [vmem:[%s1 + $0xc] sm:$0xf]
  %v32 = vunpack.c.l.b16 %v24
  %v33 = vunpack.c.l.b16 %v25
  %v34 = vunpack.c.l.b16 %v26
  %v35 = vunpack.c.l.b16 %v27
  %v36 = vpack.c.b16 %v33, %v32
  %v37 = vpack.c.b16 %v35, %v34
  %vm38 = vcmask 261120
  %v40 = vsel %vm38, %v23, 0
  %v43 = vsel %vm38, %v36, 0
  %v46 = vsel %vm38, %v37, 0
  %48 = vmatprep.subr.bf16.mxu0 0
  %49 = vmatpush1.bf16.xpose.msra.mxu0 %v43
  %50 = vmatprep.subr.bf16.mxu0 0
  %51 = vmatpush1.bf16.xpose.msra.mxu0 %v46
  %52 = vmatprep.subr.bf16.mxu0 0
  %53 = vmatpush1.bf16.xpose.msra.mxu0 0
  %54 = vmatprep.subr.bf16.mxu0 0
  %55 = vmatpush1.bf16.xpose.msra.mxu0 0
  %56 = vmatprep.subr.bf16.mxu0 0
  %57 = vmatpush1.bf16.xpose.msra.mxu0 0
  %58 = vmatprep.subr.bf16.mxu0 0
  %59 = vmatpush1.bf16.xpose.msra.mxu0 0
  %60 = vmatprep.subr.bf16.mxu0 0
  %61 = vmatpush1.bf16.xpose.msra.mxu0 0
  %62 = vmatprep.subr.bf16.mxu0 0
  %63 = vmatpush1.bf16.xpose.msra.mxu0 0
  %64 = vmatprep.subr.bf16.mxu0 0
  %65 = vmatpush1.bf16.xpose.msra.mxu0 0
  %66 = vmatprep.subr.bf16.mxu0 0
  %67 = vmatpush1.bf16.xpose.msra.mxu0 0
  %68 = vmatprep.subr.bf16.mxu0 0
  %69 = vmatpush1.bf16.xpose.msra.mxu0 0
  %70 = vmatprep.subr.bf16.mxu0 0
  %71 = vmatpush1.bf16.xpose.msra.mxu0 0
  %72 = vmatprep.subr.bf16.mxu0 0
  %73 = vmatpush1.bf16.xpose.msra.mxu0 0
  %74 = vmatprep.subr.bf16.mxu0 0
  %75 = vmatpush1.bf16.xpose.msra.mxu0 0
  %76 = vmatprep.subr.bf16.mxu0 0
  %77 = vmatpush1.bf16.xpose.msra.mxu0 0
  %78 = vmatprep.subr.bf16.mxu0 0
  %79 = vmatpush1.bf16.xpose.msra.mxu0 0
  %80 = vmatprep.mubr.bf16.mxu0 0
  %81 = vmatmul.mubr.bf16.gmra.mrb[0].mxu0 %v40
  %v82 = vpop.f32.mrb[0].mxu0
  %v83 = vadd.f32 0.0, %v82
  %v84 = vpop.f32.mrb[0].mxu0
  %v85 = vpop.f32.mrb[0].mxu0
  %v86 = vadd.f32 0.0, %v85
  %v87 = vpop.f32.mrb[0].mxu0
  %88 = vdwg.mxu0
  %v89 = vld [vmem:[#allocation2] sm:$0xff]
  %v90 = vld [vmem:[#allocation2 + $0x8] sm:$0xff]
  %v91 = vsel %vm38, %v83, -inf
  %92 = vmax.xlane.f32.xlu0 %v91
  %v93 = vpop.xlane.xlu0 %92
  %v94 = vsel %vm38, %v86, -inf
  %95 = vmax.xlane.f32.xlu0 %v94
  %v96 = vpop.xlane.xlu0 %95
  %v97 = vmax.f32 %v89, %v93
  %v98 = vmax.f32 %v90, %v96
  %v99 = vld [vmem:[#allocation3] sm:$0xff]
  %v100 = vld [vmem:[#allocation3 + $0x8] sm:$0xff]
  %v101 = vsub.f32 %v89, %v97
  %v102 = vsub.f32 %v90, %v98
  %v103 = vmul.f32 %v101, 1.442695
  %v104 = vpow.pop %v103
  %v105 = vmul.f32 %v102, 1.442695
  %v106 = vpow.pop %v105
  %v107 = vmul.f32 %v99, %v104
  %v108 = vmul.f32 %v100, %v106
  %110 = vset.pattern.permute.xlu0 0
  %111 = vperm.xlu0 %110, %v97
  %v112 = vpop.permute.xlu0 %111
  %115 = vset.pattern.permute.xlu0 0
  %116 = vperm.xlu0 %115, %v98
  %v117 = vpop.permute.xlu0 %116
  %v119 = vsub.f32 %v83, %v112
  %v120 = vsub.f32 %v86, %v117
  %v121 = vmul.f32 %v119, 1.442695
  %v122 = vpow.pop %v121
  %v123 = vmul.f32 %v120, 1.442695
  %v124 = vpow.pop %v123
  %v125 = vsel %vm38, %v122, 0.0
  %126 = vadd.xlane.f32.xlu0 %v125
  %v127 = vpop.xlane.xlu0 %126
  %v128 = vsel %vm38, %v124, 0.0
  %129 = vadd.xlane.f32.xlu0 %v128
  %v130 = vpop.xlane.xlu0 %129
  %v131 = vadd.f32 %v107, %v127
  %v132 = vadd.f32 %v108, %v130
  %vm133 = vcmask 7168
  %134 = vst.msk [vmem:[#allocation3] sm:$0xff] %vm133, %v131
  %135 = vst.msk [vmem:[#allocation3 + $0x8] sm:$0xff] %vm133, %v132
  %136 = vst.msk [vmem:[#allocation2] sm:$0xff] %vm133, %v97
  %137 = vst.msk [vmem:[#allocation2 + $0x8] sm:$0xff] %vm133, %v98
  // Predicated region
  $region14: #{ptsm_decoder_forward.22} parent=0 // pred_check
    %p138 = pneg %p12
  $region15: #{ptsm_decoder_forward.22} parent=0 // pred_check_branch
    %140 = sbr.rel (%p138) target = $region17
  $region16: #{ptsm_decoder_forward.22} parent=0 // pred_region
    %v141 = vld [vmem:[#allocation2] sm:$0xff]
    %v142 = vld [vmem:[#allocation2 + $0x8] sm:$0xff]
    %v143 = vld [vmem:[#allocation3] sm:$0xff]
    %v144 = vld [vmem:[#allocation3 + $0x8] sm:$0xff]
    %v145 = vlog2.pop %v143
    %v146 = vmul.f32 %v145, 0.6931472
    %v147 = vlog2.pop %v144
    %v148 = vmul.f32 %v147, 0.6931472
    %v149 = vadd.f32 %v141, %v146
    %v150 = vadd.f32 %v142, %v148
    %151 = vst.msk [vmem:[%s2] sm:$0xff] %vm133, %v149
    %152 = vst.msk [vmem:[%s2 + $0x8] sm:$0xff] %vm133, %v150
  $region17: #{ptsm_decoder_forward.22} parent=0 // pred_fallthru
    _
  // Predicated region
  $region18: #{ptsm_decoder_forward.22} parent=0 // pred_check
    _
  $region19: #{ptsm_decoder_forward.22} parent=0 // pred_check_branch
    %154 = sbr.rel (0) target = $region21
  $region20: #{ptsm_decoder_forward.22} parent=0 // pred_region
    _
  $region21: #{ptsm_decoder_forward.22} parent=0 // pred_fallthru
    _
  // Predicated region
  $region22: #{ptsm_decoder_forward.22} parent=0 // pred_check
    _
  $region23: #{ptsm_decoder_forward.22} parent=0 // pred_check_branch
    %156 = sbr.rel (0) target = $region25
  $region24: #{ptsm_decoder_forward.22} parent=0 // pred_region
    _
  $region25: #{ptsm_decoder_forward.22} parent=0 // pred_fallthru
    _

</llo_original>
